<compile_context>
chip_gen: v7x
topology: tpu7x:2x2x1
jax: 0.10.0
libtpu: 0.0.40
codegen_flags: <defaults>
</compile_context>

<pallas_src>
import functools

import jax
import jax.numpy as jnp
import numpy as np
from jax import lax
from jax.experimental import pallas as pl
from jax.experimental.pallas import tpu as pltpu


LANE = 128   # pad output channels to a multiple of this (lane-dense stores)


def _round_up(x, m):
    return (x + m - 1) // m * m


# ----------------------------------------------------------------------------
# Per-generation tiling preferences (v7x: 64 MiB VMEM / 2 TC; v5e/v6e: 128 MiB)
# ----------------------------------------------------------------------------
@functools.lru_cache(maxsize=None)
def _hw_prefs():
    vmem_bytes = 128 * 1024 * 1024
    try:
        info = pltpu.get_tpu_info()
        vmem_bytes = int(getattr(info, "vmem_capacity_bytes", vmem_bytes))
    except Exception:
        pass
    if vmem_bytes <= 64 * 1024 * 1024:
        # v7x-class: smaller scoped limit, moderate tiles, rely on 2-TC split.
        return 2048, 32 * 1024 * 1024
    # v5e / v6e: large tiles amortize per-step overhead; plenty of VMEM.
    return 4096, 64 * 1024 * 1024


def _choose_tiling(M, tile_pref):
    """Pick a row tile (multiple of 256) and padded row count.

    Guarantees >= 2 grid steps whenever there is more than one 256-row slab so
    dimension_semantics=("parallel",) can shard across v7x's two TensorCores.
    """
    m_ceil = _round_up(M, 256)
    steps = max(2, pl.cdiv(m_ceil, tile_pref)) if m_ceil > 256 else 1
    tm = _round_up(pl.cdiv(m_ceil, steps), 256)
    tm = min(tm, m_ceil)
    m_pad = _round_up(m_ceil, tm)
    return tm, m_pad


# ----------------------------------------------------------------------------
# Pallas kernels: fused (bf16 @ bf16 -> f32) matmul + bias + PReLU (+ residual)
# ----------------------------------------------------------------------------
def _mm_bias_prelu_kernel(x_ref, w_ref, ba_ref, o_ref):
    y = jnp.dot(x_ref[...], w_ref[...], preferred_element_type=jnp.float32)
    y = y + ba_ref[0:1, :]                               # bias (1, co_pad)
    y = jnp.where(y >= 0.0, y, ba_ref[1:2, :] * y)       # per-channel PReLU
    o_ref[...] = y.astype(o_ref.dtype)                   # bf16 (or f32) store


def _mm_bias_prelu_res_kernel(x_ref, w_ref, ba_ref, r_ref, o_ref, *, subtract_res):
    y = jnp.dot(x_ref[...], w_ref[...], preferred_element_type=jnp.float32)
    y = y + ba_ref[0:1, :]
    y = jnp.where(y >= 0.0, y, ba_ref[1:2, :] * y)
    r = r_ref[...].astype(jnp.float32)                   # bf16 residual -> f32
    y = (y - r) if subtract_res else (y + r)             # sign folded at trace
    o_ref[...] = y.astype(o_ref.dtype)


def mm_bias_prelu(x, w, b, alpha, res=None, subtract_res=False,
                  out_dtype=jnp.bfloat16):
    """y = PReLU(x @ w + b) [+/- res], returned row/channel PADDED.

    x: (M, K) -> cast bf16.  w: (K, Co) -> bf16, columns zero-padded to a
    multiple of 128.  b/alpha: (Co,) packed into one resident (2, co_pad) f32.
    res: None or a previously returned padded (m_pad, co_pad) bf16/f32 slab.
    Returns (m_pad, co_pad) `out_dtype`; real data at [:M, :Co], pad cols = 0.
    """
    M, K = x.shape
    Co = w.shape[1]
    co_pad = _round_up(Co, LANE)
    tile_pref, vmem_limit = _hw_prefs()
    tm, m_pad = _choose_tiling(M, tile_pref)

    w_p = jnp.pad(w.astype(jnp.bfloat16), ((0, 0), (0, co_pad - Co)))
    ba = jnp.stack([
        jnp.pad(b.astype(jnp.float32), (0, co_pad - Co)),
        jnp.pad(alpha.astype(jnp.float32), (0, co_pad - Co)),
    ])                                                    # (2, co_pad)

    x_p = x.astype(jnp.bfloat16)
    if m_pad != M:
        x_p = jnp.pad(x_p, ((0, m_pad - M), (0, 0)))

    in_specs = [
        pl.BlockSpec((tm, K), lambda i: (i, 0)),          # streamed row tiles
        pl.BlockSpec((K, co_pad), lambda i: (0, 0)),      # resident weight
        pl.BlockSpec((2, co_pad), lambda i: (0, 0)),      # resident bias+alpha
    ]
    args = [x_p, w_p, ba]
    res_bytes = 0
    if res is None:
        kernel = _mm_bias_prelu_kernel
    else:
        # Residual already lives in this padded layout (no slice / re-pad).
        assert res.shape == (m_pad, co_pad), (res.shape, (m_pad, co_pad))
        r_p = res.astype(jnp.bfloat16)
        in_specs.append(pl.BlockSpec((tm, co_pad), lambda i: (i, 0)))
        args.append(r_p)
        kernel = functools.partial(_mm_bias_prelu_res_kernel,
                                   subtract_res=bool(subtract_res))
        res_bytes = m_pad * co_pad * 2

    out_bytes = m_pad * co_pad * np.dtype(out_dtype).itemsize
    cost = pl.CostEstimate(
        flops=2 * m_pad * K * co_pad,
        transcendentals=0,
        bytes_accessed=(m_pad * K * 2 + K * co_pad * 2 + 2 * co_pad * 4
                        + res_bytes + out_bytes),
    )
    out = pl.pallas_call(
        kernel,
        out_shape=jax.ShapeDtypeStruct((m_pad, co_pad), out_dtype),
        grid=(m_pad // tm,),
        in_specs=in_specs,
        out_specs=pl.BlockSpec((tm, co_pad), lambda i: (i, 0)),
        compiler_params=pltpu.CompilerParams(
            dimension_semantics=("parallel",),            # megacore-friendly
            vmem_limit_bytes=vmem_limit,                  # gated per generation
        ),
        cost_estimate=cost,
    )(*args)
    return out                                            # padded; slice lazily


# ----------------------------------------------------------------------------
# Plain-JAX layout glue: NHWC im2col, polyphase weights, pixel shuffle
# TODO(synk): fuse patch extraction / pixel shuffle into the Pallas kernel.
# ----------------------------------------------------------------------------
def im2col_nhwc(x, k, stride, pad_hw, out_dtype=jnp.bfloat16):
    """x: (N,H,W,C) -> ((N*Ho*Wo, C*k*k), Ho, Wo); column order (c, kh, kw)."""
    N, H, W, C = x.shape
    (ph0, ph1), (pw0, pw1) = pad_hw
    xp = jnp.pad(x, ((0, 0), (ph0, ph1), (pw0, pw1), (0, 0)))
    Ho = (H + ph0 + ph1 - k) // stride + 1
    Wo = (W + pw0 + pw1 - k) // stride + 1
    taps = []
    for kh in range(k):
        for kw in range(k):
            taps.append(xp[:, kh:kh + (Ho - 1) * stride + 1:stride,
                            kw:kw + (Wo - 1) * stride + 1:stride, :])
    patches = jnp.stack(taps, axis=-1)                    # (N, Ho, Wo, C, k*k)
    cols = patches.reshape(N * Ho * Wo, C * k * k).astype(out_dtype)
    return cols, Ho, Wo


def conv_prelu_nhwc(x_nhwc, Wc, b, alpha, k, s, p, res=None, subtract_res=False,
                    out_dtype=jnp.bfloat16):
    """Conv2d(k, stride=s, pad=p) + PReLU (+ fused residual)."""
    Cout = Wc.shape[0]
    cols, Ho, Wo = im2col_nhwc(x_nhwc, k, s, ((p, p), (p, p)))
    Wm = Wc.reshape(Cout, -1).T                           # (Cin*k*k, Cout)
    y = mm_bias_prelu(cols, Wm, b, alpha, res=res, subtract_res=subtract_res,
                      out_dtype=out_dtype)                # padded (m_pad, co_pad)
    return y, Ho, Wo


def _phase_taps_1d(k, s, p):
    """Per-phase valid kernel taps + common window for the polyphase decomp."""
    p_eq = k - 1 - p
    taps = []
    for ph in range(s):
        t0 = (p_eq - ph) % s
        ts = list(range(t0, k, s))            # kernel taps hitting real samples
        a_ph = (p_eq - ph) // s               # left input offset of first tap
        taps.append((a_ph, ts))
    A = max(a for a, _ in taps)
    KS = max(A - a + len(ts) for a, ts in taps)
    return taps, A, KS


def _subpixel_ok(k, s, p):
    """Polyphase fast path applies (covers conv_spec for scales 2, 4, 8)."""
    if s <= 1 or p < 0 or p > k - 1:
        return False
    if (k - 2 * p) % s != 0 or (k - 2 * p) // s < 1:
        return False
    taps, A, KS = _phase_taps_1d(k, s, p)
    if A < 0 or KS < 1:
        return False
    delta = (k - 2 * p) // s
    return (delta + KS - A - 2) >= 0          # right pad must be non-negative


def transpose_conv_prelu_subpixel(x_nhwc, Wt, b, alpha, k, s, p,
                                  res=None, subtract_res=False,
                                  out_dtype=jnp.bfloat16):
    """ConvTranspose2d(k, stride=s, pad=p) + PReLU via polyphase decomposition.

    One lane-dense matmul with s*s*Cout output columns on the UNdilated input
    (no dilation zeros hit HBM or the MXU), pixel-shuffled afterwards.  Output
    layout: rows = (n, qh, qw), cols = (ph, pw, cout), zero-padded to 128.
    Per-phase sub-kernels are zero-padded into a common KS x KS window so the
    decomposition works for all conv_spec configs (k%s != 0 included).
    """
    N, H, W, Cin = x_nhwc.shape
    Cout = Wt.shape[1]
    taps, A, KS = _phase_taps_1d(k, s, p)
    delta = (k - 2 * p) // s
    Hq, Wq = H - 1 + delta, W - 1 + delta
    pad_rh = Hq + KS - 1 - H - A
    pad_rw = Wq + KS - 1 - W - A

    # Equivalent (flipped) conv weight, split into per-phase sub-kernels.
    W_eq = jnp.flip(Wt, axis=(2, 3)).transpose(1, 0, 2, 3)    # (Cout, Cin, k, k)
    phase_w = []
    for ph in range(s):
        a_h, ts_h = taps[ph]
        for pw in range(s):
            a_w, ts_w = taps[pw]
            sub = jnp.zeros((Cout, Cin, KS, KS), W_eq.dtype)
            for jh, th in enumerate(ts_h):
                for jw, tw in enumerate(ts_w):
                    sub = sub.at[:, :, A - a_h + jh, A - a_w + jw].set(
                        W_eq[:, :, th, tw])
            phase_w.append(sub.reshape(Cout, Cin * KS * KS))
    Wm = jnp.concatenate(phase_w, axis=0).T   # (Cin*KS*KS, s*s*Cout), cols (ph,pw,c)
    b_sub = jnp.tile(b, s * s)
    a_sub = jnp.tile(alpha, s * s)

    cols, hq, wq = im2col_nhwc(x_nhwc, KS, 1, ((A, pad_rh), (A, pad_rw)))
    assert (hq, wq) == (Hq, Wq), ((hq, wq), (Hq, Wq))
    y = mm_bias_prelu(cols, Wm, b_sub, a_sub, res=res, subtract_res=subtract_res,
                      out_dtype=out_dtype)                # padded (m_pad, co_pad)
    return y, Hq, Wq


def subpixel_to_nhwc(y_sub, N, Hq, Wq, s, Cout):
    """Pixel shuffle: (N*Hq*Wq, pad) with cols (ph,pw,c) -> (N, s*Hq, s*Wq, C)."""
    y = y_sub[:, :s * s * Cout].reshape(N, Hq, Wq, s, s, Cout)
    y = y.transpose(0, 1, 3, 2, 4, 5)          # (N, Hq, ph, Wq, pw, C)
    return y.reshape(N, Hq * s, Wq * s, Cout)


def transpose_conv_prelu_dilated(x_nhwc, Wt, b, alpha, k, s, p,
                                 res=None, subtract_res=False,
                                 out_dtype=jnp.bfloat16):
    """Fallback: dilation + flipped conv (only for configs the polyphase path
    cannot express).  Rows = (n, oh, ow), cols = cout padded."""
    # TODO(synk): this fallback wastes (s^2-1)/s^2 of MXU flops / im2col bytes.
    N, H, W, C = x_nhwc.shape
    Cout = Wt.shape[1]
    W_eq = jnp.flip(Wt, axis=(2, 3)).transpose(1, 0, 2, 3)
    xd = jnp.zeros((N, (H - 1) * s + 1, (W - 1) * s + 1, C), x_nhwc.dtype)
    xd = xd.at[:, ::s, ::s, :].set(x_nhwc)
    p_eq = k - 1 - p
    cols, Ho, Wo = im2col_nhwc(xd, k, 1, ((p_eq, p_eq), (p_eq, p_eq)))
    Wm = W_eq.reshape(Cout, -1).T
    y = mm_bias_prelu(cols, Wm, b, alpha, res=res, subtract_res=subtract_res,
                      out_dtype=out_dtype)
    return y, Ho, Wo


# ----------------------------------------------------------------------------
# DenseProjection forward (bottleneck=True, upscale=True)
# ----------------------------------------------------------------------------
def dense_projection_forward(x, params, k, s, p):
    N, Cin, H, W = x.shape
    nf = params["b_b"].shape[0]
    x_nhwc = x.transpose(0, 2, 3, 1)
    M0 = N * H * W

    # bottleneck: 1x1 conv + PReLU (pure channel matmul).
    # TODO(synk): K = Cin is lane-sparse here; tiny fraction of total work.
    xf = x_nhwc.reshape(M0, Cin)
    Wb = params["W_b"].reshape(nf, Cin).T
    xb_flat = mm_bias_prelu(xf, Wb, params["b_b"], params["a_b"])   # padded bf16
    xb_nhwc = xb_flat[:M0, :nf].reshape(N, H, W, nf)

    if _subpixel_ok(k, s, p):
        # conv_1: transposed conv (upscale) + PReLU, zero-skipping polyphase.
        a0_sub, Hq, Wq = transpose_conv_prelu_subpixel(
            xb_nhwc, params["W1"], params["b1"], params["a1"], k, s, p)
        M1 = N * Hq * Wq
        a0_nhwc = subpixel_to_nhwc(a0_sub[:M1], N, Hq, Wq, s, nf)

        # conv_2: regular conv (downscale) + PReLU with fused "- xb"  -> e
        e_flat, He, We = conv_prelu_nhwc(
            a0_nhwc, params["W2"], params["b2"], params["a2"], k, s, p,
            res=xb_flat, subtract_res=True)
        M2 = N * He * We
        e_nhwc = e_flat[:M2, :nf].reshape(N, He, We, nf)

        # conv_3: transposed conv + PReLU with fused "+ a0"  -> out (f32)
        out_sub, _, _ = transpose_conv_prelu_subpixel(
            e_nhwc, params["W3"], params["b3"], params["a3"], k, s, p,
            res=a0_sub, subtract_res=False, out_dtype=jnp.float32)
        out_nhwc = subpixel_to_nhwc(out_sub[:M1], N, Hq, Wq, s, nf)
    else:
        a0_flat, Ho, Wo = transpose_conv_prelu_dilated(
            xb_nhwc, params["W1"], params["b1"], params["a1"], k, s, p)
        Mo = N * Ho * Wo
        a0_nhwc = a0_flat[:Mo, :nf].reshape(N, Ho, Wo, nf)
        e_flat, He, We = conv_prelu_nhwc(
            a0_nhwc, params["W2"], params["b2"], params["a2"], k, s, p,
            res=xb_flat, subtract_res=True)
        Me = N * He * We
        e_nhwc = e_flat[:Me, :nf].reshape(N, He, We, nf)
        out_flat, _, _ = transpose_conv_prelu_dilated(
            e_nhwc, params["W3"], params["b3"], params["a3"], k, s, p,
            res=a0_flat, subtract_res=False, out_dtype=jnp.float32)
        out_nhwc = out_flat[:Mo, :nf].reshape(N, Ho, Wo, nf)

    return out_nhwc.transpose(0, 3, 1, 2)


# ----------------------------------------------------------------------------
# Pure-JAX reference (mirrors the PyTorch module) for correctness check
# ----------------------------------------------------------------------------
def _prelu(x, alpha):
    return jnp.where(x >= 0.0, x, alpha[None, :, None, None] * x)


def _ref_conv(x, W, b, s, p):
    y = lax.conv_general_dilated(x, W, (s, s), [(p, p), (p, p)],
                                 dimension_numbers=("NCHW", "OIHW", "NCHW"))
    return y + b[None, :, None, None]


def _ref_convT(x, Wt, b, s, p, k):
    W_eq = jnp.flip(Wt, (2, 3)).transpose(1, 0, 2, 3)
    y = lax.conv_general_dilated(x, W_eq, (1, 1), [(k - 1 - p,) * 2] * 2,
                                 lhs_dilation=(s, s),
                                 dimension_numbers=("NCHW", "OIHW", "NCHW"))
    return y + b[None, :, None, None]


def reference_forward(x, params, k, s, p):
    xb = _prelu(_ref_conv(x, params["W_b"], params["b_b"], 1, 0), params["a_b"])
    a0 = _prelu(_ref_convT(xb, params["W1"], params["b1"], s, p, k), params["a1"])
    b0 = _prelu(_ref_conv(a0, params["W2"], params["b2"], s, p), params["a2"])
    e = b0 - xb
    a1 = _prelu(_ref_convT(e, params["W3"], params["b3"], s, p, k), params["a3"])
    return a0 + a1


# ----------------------------------------------------------------------------
if __name__ == "__main__":
    # DenseProjection(in_channels=4, nfeatures=8, scale=2, upscale=True, bottleneck=True)
    in_channels, nf, scale = 4, 8, 2
    k, s, p = {2: (6, 2, 2), 4: (8, 4, 2), 8: (12, 8, 2)}[scale]

    key = jax.random.PRNGKey(0)
    keys = jax.random.split(key, 9)
    params = {
        # bottleneck Conv2d(in_channels, nf, 1)
        "W_b": 0.2 * jax.random.normal(keys[0], (nf, in_channels, 1, 1), jnp.float32),
        "b_b": 0.05 * jax.random.normal(keys[1], (nf,), jnp.float32),
        "a_b": jnp.full((nf,), 0.25, jnp.float32),          # PReLU default slope
        # conv_1: ConvTranspose2d(nf, nf, k) -> weight (Cin, Cout, k, k)
        "W1": 0.05 * jax.random.normal(keys[2], (nf, nf, k, k), jnp.float32),
        "b1": 0.05 * jax.random.normal(keys[3], (nf,), jnp.float32),
        "a1": jnp.full((nf,), 0.25, jnp.float32),
        # conv_2: Conv2d(nf, nf, k)          -> weight (Cout, Cin, k, k)
        "W2": 0.05 * jax.random.normal(keys[4], (nf, nf, k, k), jnp.float32),
        "b2": 0.05 * jax.random.normal(keys[5], (nf,), jnp.float32),
        "a2": jnp.full((nf,), 0.25, jnp.float32),
        # conv_3: ConvTranspose2d(nf, nf, k)
        "W3": 0.05 * jax.random.normal(keys[6], (nf, nf, k, k), jnp.float32),
        "b3": 0.05 * jax.random.normal(keys[7], (nf,), jnp.float32),
        "a3": jnp.full((nf,), 0.25, jnp.float32),
    }
    x = jax.random.normal(keys[8], (2, in_channels, 16, 16), jnp.float32)

    fwd = jax.jit(lambda xx, pp: dense_projection_forward(xx, pp, k, s, p))
    out = jax.block_until_ready(fwd(x, params))

    ref = jax.block_until_ready(reference_forward(x, params, k, s, p))
    # bf16 matmul inputs AND bf16 stored intermediates (f32 accumulate /
    # epilogue in-kernel) -> loosened tolerance vs the f32 reference.
    np.testing.assert_allclose(np.asarray(out), np.asarray(ref), rtol=3e-2, atol=3e-2)

    assert out.shape == (2, nf, 32, 32), out.shape
    print("KERNEL_OK")
</pallas_src>

<mosaic_0001>
module attributes {stable_mosaic.version = 11 : i64} {
  func.func @_mm_bias_prelu_kernel(%arg0: i32, %arg1: memref<256x4xbf16, #tpu.memory_space<vmem>>, %arg2: memref<4x128xbf16, #tpu.memory_space<vmem>>, %arg3: memref<2x128xf32, #tpu.memory_space<vmem>>, %arg4: memref<256x128xbf16, #tpu.memory_space<vmem>>) attributes {dimension_semantics = [#tpu.dimension_semantics<parallel>], iteration_bounds = array<i64: 2>, scalar_prefetch = 0 : i64, scratch_operands = 0 : i64, tpu.core_type = #tpu.core_type<tc>, window_params = [{transform_indices = @transform_0, window_bounds = array<i64: 256, 4>}, {pipeline_mode = #tpu.pipeline_mode<synchronous>, transform_indices = @transform_1, window_bounds = array<i64: 4, 128>}, {pipeline_mode = #tpu.pipeline_mode<synchronous>, transform_indices = @transform_2, window_bounds = array<i64: 2, 128>}, {transform_indices = @transform_3, window_bounds = array<i64: 256, 128>}]} {
    %c0 = arith.constant 0 : index
    %c0_0 = arith.constant 0 : index
    %0 = vector.load %arg1[%c0, %c0_0] : memref<256x4xbf16, #tpu.memory_space<vmem>>, vector<256x4xbf16>
    %c0_1 = arith.constant 0 : index
    %c0_2 = arith.constant 0 : index
    %1 = vector.load %arg2[%c0_1, %c0_2] : memref<4x128xbf16, #tpu.memory_space<vmem>>, vector<4x128xbf16>
    %cst = arith.constant dense<0.000000e+00> : vector<256x128xf32>
    %2 = tpu.matmul %0, %1, %cst {dimension_numbers = #tpu.dot_dimension_numbers<[1], [0], [0], [1], [0, 0, 1, 1], [], []>} : vector<256x4xbf16>, vector<4x128xbf16>, vector<256x128xf32> -> vector<256x128xf32>
    %c0_3 = arith.constant 0 : index
    %c0_4 = arith.constant 0 : index
    %3 = vector.load %arg3[%c0_3, %c0_4] : memref<2x128xf32, #tpu.memory_space<vmem>>, vector<1x128xf32>
    %4 = vector.broadcast %3 : vector<1x128xf32> to vector<256x128xf32>
    %5 = arith.addf %2, %4 : vector<256x128xf32>
    %cst_5 = arith.constant 0.000000e+00 : f32
    %6 = vector.broadcast %cst_5 : f32 to vector<256x128xf32>
    %7 = arith.cmpf oge, %5, %6 : vector<256x128xf32>
    %c1 = arith.constant 1 : index
    %c0_6 = arith.constant 0 : index
    %8 = vector.load %arg3[%c1, %c0_6] : memref<2x128xf32, #tpu.memory_space<vmem>>, vector<1x128xf32>
    %9 = vector.broadcast %8 : vector<1x128xf32> to vector<256x128xf32>
    %10 = arith.mulf %9, %5 : vector<256x128xf32>
    %11 = arith.select %7, %5, %10 : vector<256x128xi1>, vector<256x128xf32>
    %12 = arith.truncf %11 : vector<256x128xf32> to vector<256x128xbf16>
    %c0_7 = arith.constant 0 : index
    %c0_8 = arith.constant 0 : index
    %13 = vector.load %arg4[%c0_7, %c0_8] : memref<256x128xbf16, #tpu.memory_space<vmem>>, vector<256x128xbf16>
    tpu.vector_store %arg4[%c0_7, %c0_8], %12 {strides = array<i32>} : memref<256x128xbf16, #tpu.memory_space<vmem>>, vector<256x128xbf16>,
    return
  }
  func.func @transform_0(%arg0: i32) -> (i32, i32) {
    %c0_i32 = arith.constant 0 : i32
    %c0_i32_0 = arith.constant 0 : i32
    return %arg0, %c0_i32 : i32, i32
  }
  func.func @transform_1(%arg0: i32) -> (i32, i32) {
    %c0_i32 = arith.constant 0 : i32
    %c0_i32_0 = arith.constant 0 : i32
    %c0_i32_1 = arith.constant 0 : i32
    return %c0_i32, %c0_i32_0 : i32, i32
  }
  func.func @transform_2(%arg0: i32) -> (i32, i32) {
    %c0_i32 = arith.constant 0 : i32
    %c0_i32_0 = arith.constant 0 : i32
    %c0_i32_1 = arith.constant 0 : i32
    return %c0_i32, %c0_i32_0 : i32, i32
  }
  func.func @transform_3(%arg0: i32) -> (i32, i32) {
    %c0_i32 = arith.constant 0 : i32
    %c0_i32_0 = arith.constant 0 : i32
    return %arg0, %c0_i32 : i32, i32
  }
}

module attributes {stable_mosaic.version = 11 : i64} {
  func.func @_mm_bias_prelu_kernel(%arg0: i32, %arg1: memref<256x72xbf16, #tpu.memory_space<vmem>>, %arg2: memref<72x128xbf16, #tpu.memory_space<vmem>>, %arg3: memref<2x128xf32, #tpu.memory_space<vmem>>, %arg4: memref<256x128xbf16, #tpu.memory_space<vmem>>) attributes {dimension_semantics = [#tpu.dimension_semantics<parallel>], iteration_bounds = array<i64: 2>, scalar_prefetch = 0 : i64, scratch_operands = 0 : i64, tpu.core_type = #tpu.core_type<tc>, window_params = [{transform_indices = @transform_0, window_bounds = array<i64: 256, 72>}, {pipeline_mode = #tpu.pipeline_mode<synchronous>, transform_indices = @transform_1, window_bounds = array<i64: 72, 128>}, {pipeline_mode = #tpu.pipeline_mode<synchronous>, transform_indices = @transform_2, window_bounds = array<i64: 2, 128>}, {transform_indices = @transform_3, window_bounds = array<i64: 256, 128>}]} {
    %c0 = arith.constant 0 : index
    %c0_0 = arith.constant 0 : index
    %0 = vector.load %arg1[%c0, %c0_0] : memref<256x72xbf16, #tpu.memory_space<vmem>>, vector<256x72xbf16>
    %c0_1 = arith.constant 0 : index
    %c0_2 = arith.constant 0 : index
    %1 = vector.load %arg2[%c0_1, %c0_2] : memref<72x128xbf16, #tpu.memory_space<vmem>>, vector<72x128xbf16>
    %cst = arith.constant dense<0.000000e+00> : vector<256x128xf32>
    %2 = tpu.matmul %0, %1, %cst {dimension_numbers = #tpu.dot_dimension_numbers<[1], [0], [0], [1], [0, 0, 1, 1], [], []>} : vector<256x72xbf16>, vector<72x128xbf16>, vector<256x128xf32> -> vector<256x128xf32>
    %c0_3 = arith.constant 0 : index
    %c0_4 = arith.constant 0 : index
    %3 = vector.load %arg3[%c0_3, %c0_4] : memref<2x128xf32, #tpu.memory_space<vmem>>, vector<1x128xf32>
    %4 = vector.broadcast %3 : vector<1x128xf32> to vector<256x128xf32>
    %5 = arith.addf %2, %4 : vector<256x128xf32>
    %cst_5 = arith.constant 0.000000e+00 : f32
    %6 = vector.broadcast %cst_5 : f32 to vector<256x128xf32>
    %7 = arith.cmpf oge, %5, %6 : vector<256x128xf32>
    %c1 = arith.constant 1 : index
    %c0_6 = arith.constant 0 : index
    %8 = vector.load %arg3[%c1, %c0_6] : memref<2x128xf32, #tpu.memory_space<vmem>>, vector<1x128xf32>
    %9 = vector.broadcast %8 : vector<1x128xf32> to vector<256x128xf32>
    %10 = arith.mulf %9, %5 : vector<256x128xf32>
    %11 = arith.select %7, %5, %10 : vector<256x128xi1>, vector<256x128xf32>
    %12 = arith.truncf %11 : vector<256x128xf32> to vector<256x128xbf16>
    %c0_7 = arith.constant 0 : index
    %c0_8 = arith.constant 0 : index
    %13 = vector.load %arg4[%c0_7, %c0_8] : memref<256x128xbf16, #tpu.memory_space<vmem>>, vector<256x128xbf16>
    tpu.vector_store %arg4[%c0_7, %c0_8], %12 {strides = array<i32>} : memref<256x128xbf16, #tpu.memory_space<vmem>>, vector<256x128xbf16>,
    return
  }
  func.func @transform_0(%arg0: i32) -> (i32, i32) {
    %c0_i32 = arith.constant 0 : i32
    %c0_i32_0 = arith.constant 0 : i32
    return %arg0, %c0_i32 : i32, i32
  }
  func.func @transform_1(%arg0: i32) -> (i32, i32) {
    %c0_i32 = arith.constant 0 : i32
    %c0_i32_0 = arith.constant 0 : i32
    %c0_i32_1 = arith.constant 0 : i32
    return %c0_i32, %c0_i32_0 : i32, i32
  }
  func.func @transform_2(%arg0: i32) -> (i32, i32) {
    %c0_i32 = arith.constant 0 : i32
    %c0_i32_0 = arith.constant 0 : i32
    %c0_i32_1 = arith.constant 0 : i32
    return %c0_i32, %c0_i32_0 : i32, i32
  }
  func.func @transform_3(%arg0: i32) -> (i32, i32) {
    %c0_i32 = arith.constant 0 : i32
    %c0_i32_0 = arith.constant 0 : i32
    return %arg0, %c0_i32 : i32, i32
  }
}

module attributes {stable_mosaic.version = 11 : i64} {
  func.func @_mm_bias_prelu_res_kernel(%arg0: i32, %arg1: memref<256x288xbf16, #tpu.memory_space<vmem>>, %arg2: memref<288x128xbf16, #tpu.memory_space<vmem>>, %arg3: memref<2x128xf32, #tpu.memory_space<vmem>>, %arg4: memref<256x128xbf16, #tpu.memory_space<vmem>>, %arg5: memref<256x128xbf16, #tpu.memory_space<vmem>>) attributes {dimension_semantics = [#tpu.dimension_semantics<parallel>], iteration_bounds = array<i64: 2>, scalar_prefetch = 0 : i64, scratch_operands = 0 : i64, tpu.core_type = #tpu.core_type<tc>, window_params = [{transform_indices = @transform_0, window_bounds = array<i64: 256, 288>}, {pipeline_mode = #tpu.pipeline_mode<synchronous>, transform_indices = @transform_1, window_bounds = array<i64: 288, 128>}, {pipeline_mode = #tpu.pipeline_mode<synchronous>, transform_indices = @transform_2, window_bounds = array<i64: 2, 128>}, {transform_indices = @transform_3, window_bounds = array<i64: 256, 128>}, {transform_indices = @transform_4, window_bounds = array<i64: 256, 128>}]} {
    %c0 = arith.constant 0 : index
    %c0_0 = arith.constant 0 : index
    %0 = vector.load %arg1[%c0, %c0_0] : memref<256x288xbf16, #tpu.memory_space<vmem>>, vector<256x288xbf16>
    %c0_1 = arith.constant 0 : index
    %c0_2 = arith.constant 0 : index
    %1 = vector.load %arg2[%c0_1, %c0_2] : memref<288x128xbf16, #tpu.memory_space<vmem>>, vector<288x128xbf16>
    %cst = arith.constant dense<0.000000e+00> : vector<256x128xf32>
    %2 = tpu.matmul %0, %1, %cst {dimension_numbers = #tpu.dot_dimension_numbers<[1], [0], [0], [1], [0, 0, 1, 1], [], []>} : vector<256x288xbf16>, vector<288x128xbf16>, vector<256x128xf32> -> vector<256x128xf32>
    %c0_3 = arith.constant 0 : index
    %c0_4 = arith.constant 0 : index
    %3 = vector.load %arg3[%c0_3, %c0_4] : memref<2x128xf32, #tpu.memory_space<vmem>>, vector<1x128xf32>
    %4 = vector.broadcast %3 : vector<1x128xf32> to vector<256x128xf32>
    %5 = arith.addf %2, %4 : vector<256x128xf32>
    %cst_5 = arith.constant 0.000000e+00 : f32
    %6 = vector.broadcast %cst_5 : f32 to vector<256x128xf32>
    %7 = arith.cmpf oge, %5, %6 : vector<256x128xf32>
    %c1 = arith.constant 1 : index
    %c0_6 = arith.constant 0 : index
    %8 = vector.load %arg3[%c1, %c0_6] : memref<2x128xf32, #tpu.memory_space<vmem>>, vector<1x128xf32>
    %9 = vector.broadcast %8 : vector<1x128xf32> to vector<256x128xf32>
    %10 = arith.mulf %9, %5 : vector<256x128xf32>
    %11 = arith.select %7, %5, %10 : vector<256x128xi1>, vector<256x128xf32>
    %c0_7 = arith.constant 0 : index
    %c0_8 = arith.constant 0 : index
    %12 = vector.load %arg4[%c0_7, %c0_8] : memref<256x128xbf16, #tpu.memory_space<vmem>>, vector<256x128xbf16>
    %13 = arith.extf %12 : vector<256x128xbf16> to vector<256x128xf32>
    %14 = arith.subf %11, %13 : vector<256x128xf32>
    %15 = arith.truncf %14 : vector<256x128xf32> to vector<256x128xbf16>
    %c0_9 = arith.constant 0 : index
    %c0_10 = arith.constant 0 : index
    %16 = vector.load %arg5[%c0_9, %c0_10] : memref<256x128xbf16, #tpu.memory_space<vmem>>, vector<256x128xbf16>
    tpu.vector_store %arg5[%c0_9, %c0_10], %15 {strides = array<i32>} : memref<256x128xbf16, #tpu.memory_space<vmem>>, vector<256x128xbf16>,
    return
  }
  func.func @transform_0(%arg0: i32) -> (i32, i32) {
    %c0_i32 = arith.constant 0 : i32
    %c0_i32_0 = arith.constant 0 : i32
    return %arg0, %c0_i32 : i32, i32
  }
  func.func @transform_1(%arg0: i32) -> (i32, i32) {
    %c0_i32 = arith.constant 0 : i32
    %c0_i32_0 = arith.constant 0 : i32
    %c0_i32_1 = arith.constant 0 : i32
    return %c0_i32, %c0_i32_0 : i32, i32
  }
  func.func @transform_2(%arg0: i32) -> (i32, i32) {
    %c0_i32 = arith.constant 0 : i32
    %c0_i32_0 = arith.constant 0 : i32
    %c0_i32_1 = arith.constant 0 : i32
    return %c0_i32, %c0_i32_0 : i32, i32
  }
  func.func @transform_3(%arg0: i32) -> (i32, i32) {
    %c0_i32 = arith.constant 0 : i32
    %c0_i32_0 = arith.constant 0 : i32
    return %arg0, %c0_i32 : i32, i32
  }
  func.func @transform_4(%arg0: i32) -> (i32, i32) {
    %c0_i32 = arith.constant 0 : i32
    %c0_i32_0 = arith.constant 0 : i32
    return %arg0, %c0_i32 : i32, i32
  }
}

module attributes {stable_mosaic.version = 11 : i64} {
  func.func @_mm_bias_prelu_res_kernel(%arg0: i32, %arg1: memref<256x72xbf16, #tpu.memory_space<vmem>>, %arg2: memref<72x128xbf16, #tpu.memory_space<vmem>>, %arg3: memref<2x128xf32, #tpu.memory_space<vmem>>, %arg4: memref<256x128xbf16, #tpu.memory_space<vmem>>, %arg5: memref<256x128xf32, #tpu.memory_space<vmem>>) attributes {dimension_semantics = [#tpu.dimension_semantics<parallel>], iteration_bounds = array<i64: 2>, scalar_prefetch = 0 : i64, scratch_operands = 0 : i64, tpu.core_type = #tpu.core_type<tc>, window_params = [{transform_indices = @transform_0, window_bounds = array<i64: 256, 72>}, {pipeline_mode = #tpu.pipeline_mode<synchronous>, transform_indices = @transform_1, window_bounds = array<i64: 72, 128>}, {pipeline_mode = #tpu.pipeline_mode<synchronous>, transform_indices = @transform_2, window_bounds = array<i64: 2, 128>}, {transform_indices = @transform_3, window_bounds = array<i64: 256, 128>}, {transform_indices = @transform_4, window_bounds = array<i64: 256, 128>}]} {
    %c0 = arith.constant 0 : index
    %c0_0 = arith.constant 0 : index
    %0 = vector.load %arg1[%c0, %c0_0] : memref<256x72xbf16, #tpu.memory_space<vmem>>, vector<256x72xbf16>
    %c0_1 = arith.constant 0 : index
    %c0_2 = arith.constant 0 : index
    %1 = vector.load %arg2[%c0_1, %c0_2] : memref<72x128xbf16, #tpu.memory_space<vmem>>, vector<72x128xbf16>
    %cst = arith.constant dense<0.000000e+00> : vector<256x128xf32>
    %2 = tpu.matmul %0, %1, %cst {dimension_numbers = #tpu.dot_dimension_numbers<[1], [0], [0], [1], [0, 0, 1, 1], [], []>} : vector<256x72xbf16>, vector<72x128xbf16>, vector<256x128xf32> -> vector<256x128xf32>
    %c0_3 = arith.constant 0 : index
    %c0_4 = arith.constant 0 : index
    %3 = vector.load %arg3[%c0_3, %c0_4] : memref<2x128xf32, #tpu.memory_space<vmem>>, vector<1x128xf32>
    %4 = vector.broadcast %3 : vector<1x128xf32> to vector<256x128xf32>
    %5 = arith.addf %2, %4 : vector<256x128xf32>
    %cst_5 = arith.constant 0.000000e+00 : f32
    %6 = vector.broadcast %cst_5 : f32 to vector<256x128xf32>
    %7 = arith.cmpf oge, %5, %6 : vector<256x128xf32>
    %c1 = arith.constant 1 : index
    %c0_6 = arith.constant 0 : index
    %8 = vector.load %arg3[%c1, %c0_6] : memref<2x128xf32, #tpu.memory_space<vmem>>, vector<1x128xf32>
    %9 = vector.broadcast %8 : vector<1x128xf32> to vector<256x128xf32>
    %10 = arith.mulf %9, %5 : vector<256x128xf32>
    %11 = arith.select %7, %5, %10 : vector<256x128xi1>, vector<256x128xf32>
    %c0_7 = arith.constant 0 : index
    %c0_8 = arith.constant 0 : index
    %12 = vector.load %arg4[%c0_7, %c0_8] : memref<256x128xbf16, #tpu.memory_space<vmem>>, vector<256x128xbf16>
    %13 = arith.extf %12 : vector<256x128xbf16> to vector<256x128xf32>
    %14 = arith.addf %11, %13 : vector<256x128xf32>
    %c0_9 = arith.constant 0 : index
    %c0_10 = arith.constant 0 : index
    %15 = vector.load %arg5[%c0_9, %c0_10] : memref<256x128xf32, #tpu.memory_space<vmem>>, vector<256x128xf32>
    tpu.vector_store %arg5[%c0_9, %c0_10], %14 {strides = array<i32>} : memref<256x128xf32, #tpu.memory_space<vmem>>, vector<256x128xf32>,
    return
  }
  func.func @transform_0(%arg0: i32) -> (i32, i32) {
    %c0_i32 = arith.constant 0 : i32
    %c0_i32_0 = arith.constant 0 : i32
    return %arg0, %c0_i32 : i32, i32
  }
  func.func @transform_1(%arg0: i32) -> (i32, i32) {
    %c0_i32 = arith.constant 0 : i32
    %c0_i32_0 = arith.constant 0 : i32
    %c0_i32_1 = arith.constant 0 : i32
    return %c0_i32, %c0_i32_0 : i32, i32
  }
  func.func @transform_2(%arg0: i32) -> (i32, i32) {
    %c0_i32 = arith.constant 0 : i32
    %c0_i32_0 = arith.constant 0 : i32
    %c0_i32_1 = arith.constant 0 : i32
    return %c0_i32, %c0_i32_0 : i32, i32
  }
  func.func @transform_3(%arg0: i32) -> (i32, i32) {
    %c0_i32 = arith.constant 0 : i32
    %c0_i32_0 = arith.constant 0 : i32
    return %arg0, %c0_i32 : i32, i32
  }
  func.func @transform_4(%arg0: i32) -> (i32, i32) {
    %c0_i32 = arith.constant 0 : i32
    %c0_i32_0 = arith.constant 0 : i32
    return %arg0, %c0_i32 : i32, i32
  }
}

</mosaic_0001>

<llo_original>
// kernel: _lambda_.4
$region0: #{_lambda_.4}
  #allocation0 [shape = 'u32[]', space=smem, size = 0x4, offset = 0x4, fixed_abs, tag = 'smem constant byte address 0x4 - core index']
  #allocation1 [shape = 'u32[144,128]{1,0:T(1,128)}', space=vmem, size = 0x12000, scoped, tag = 'internal scratch']
  %s0 = inlined_call_operand.hbm [shape: bf16[512,4], index: 0, kind: input, shape index: {}]
  %s1 = inlined_call_operand.hbm [shape: bf16[4,128], index: 1, kind: input, shape index: {}]
  %s2 = inlined_call_operand.hbm [shape: f32[2,128], index: 2, kind: input, shape index: {}]
  %s3 = inlined_call_operand.hbm [shape: bf16[512,128], index: 3, kind: output, shape index: {}]
  %s4 = sld [smem:[#allocation0]]
  $region57: #{_lambda_.4} parent=0
    _
  %s6 = ssub.s32 1, %s4
  %s7 = scalar_select 0, %s6, %s4
  $region1: #{_lambda_.4} parent=0
    #allocation2 [shape = 'u8[131072]{0}', space=vmem, size = 0x20000, scoped, tag = 'input window, operand 0']
    #allocation3 [shape = 's32[2]{0}', space=sflag, size = 0x8, scoped, tag = 'scoped memory for _lambda_.4']
    #allocation4 [shape = 's32[2]{0}', space=sflag, size = 0x8, scoped, tag = 'scoped memory for _lambda_.4']
    #allocation5 [shape = 'u8[1024]{0}', space=vmem, size = 0x400, scoped, tag = 'input window, operand 1, single buffered']
    #allocation6 [shape = 's32[1]{0}', space=sflag, size = 0x4, scoped, tag = 'scoped memory for _lambda_.4']
    #allocation7 [shape = 'u8[1024]{0}', space=vmem, size = 0x400, scoped, tag = 'input window, operand 2, single buffered']
    #allocation8 [shape = 'u8[131072]{0}', space=vmem, size = 0x20000, scoped, tag = 'output window, operand 0']
    %8 = vsyncpa [#allocation3], 0
    %s9 = scalar_lea.sflag [#allocation3], 1
    %10 = vsyncpa %s9, 0
    %11 = vsyncpa [#allocation6], 0
    %12 = vsyncpa [#allocation4], 0
    %s13 = scalar_lea.sflag [#allocation4], 1
    %14 = vsyncpa %s13, 0
    loop: start=0, step=1, limit=4
    $region2: #{_lambda_.4} parent=1 // loop_pre_header
      _
    $region3: #{_lambda_.4} parent=1 // loop_header
      %s16 = sphi 0, %s20
      %p17 = scmp.ge.s32.totalorder %s16, 4
      %s26 = sphi 0, %s28
      %s29 = sphi 0, %s26
      %s30 = sphi 0, %s29
      %s46 = sphi 0, %s30
      %s50 = sphi 0, %s50
      %s52 = sphi 0, %s50
      %s53 = sphi 0, %s52
      %s67 = sphi 0, %s53
      %s71 = sphi 0, %s71
      %s73 = sphi 0, %s71
      %s74 = sphi 0, %s73
      %s88 = sphi 0, %s74
      %s94 = sphi 0, %s96
      %s97 = sphi 0, %s94
      %s98 = sphi 0, %s97
      %s114 = sphi 0, %s98
    $region4: #{_lambda_.4} parent=1 // loop_header_branch
      %19 = sbr.rel (%p17) target = $region8
    $region5: #{_lambda_.4} parent=1 // loop_body
      %s21 = ssub.s32 %s16, 1
      %s22 = ssub.s32 %s16, 2
      %s23 = sadd.s32 %s16, 1
      %s24 = ssub.s32 %s16, %s23
      %p25 = scmp.eq.s32.totalorder %s24, 0
      %s27 = sadd.s32 %s26, 1
      %s28 = scalar_select %p25, %s26, %s27
      %p31 = pneg %p25
      %p32 = scmp.eq.s32.totalorder %s16, 1
      %p33 = por %p31, %p32
      %p34 = scmp.ne.s32.totalorder %s26, %s29
      %p35 = scmp.eq.s32.totalorder %s16, 0
      %p36 = por %p34, %p35
      %p37 = scmp.ne.s32.totalorder %s26, %s29
      %p38 = scmp.eq.s32.totalorder %s21, 1
      %p39 = por %p37, %p38
      %p40 = scmp.ne.s32.totalorder %s29, %s30
      %p41 = scmp.eq.s32.totalorder %s21, 0
      %p42 = por %p40, %p41
      %p43 = scmp.ne.s32.totalorder %s29, %s30
      %p44 = scmp.eq.s32.totalorder %s22, 1
      %p45 = por %p43, %p44
      %p47 = scmp.ne.s32.totalorder %s30, %s46
      %p48 = scmp.eq.s32.totalorder %s22, 0
      %p49 = por %p47, %p48
      %s51 = sadd.s32 %s50, 1
      %p54 = scmp.eq.s32.totalorder %s16, 1
      %p55 = scmp.ne.s32.totalorder %s50, %s52
      %p56 = scmp.eq.s32.totalorder %s16, 0
      %p57 = por %p55, %p56
      %p58 = scmp.ne.s32.totalorder %s50, %s52
      %p59 = scmp.eq.s32.totalorder %s21, 1
      %p60 = por %p58, %p59
      %p61 = scmp.ne.s32.totalorder %s52, %s53
      %p62 = scmp.eq.s32.totalorder %s21, 0
      %p63 = por %p61, %p62
      %p64 = scmp.ne.s32.totalorder %s52, %s53
      %p65 = scmp.eq.s32.totalorder %s22, 1
      %p66 = por %p64, %p65
      %p68 = scmp.ne.s32.totalorder %s53, %s67
      %p69 = scmp.eq.s32.totalorder %s22, 0
      %p70 = por %p68, %p69
      %s72 = sadd.s32 %s71, 1
      %p75 = scmp.eq.s32.totalorder %s16, 1
      %p76 = scmp.ne.s32.totalorder %s71, %s73
      %p77 = scmp.eq.s32.totalorder %s16, 0
      %p78 = por %p76, %p77
      %p79 = scmp.ne.s32.totalorder %s71, %s73
      %p80 = scmp.eq.s32.totalorder %s21, 1
      %p81 = por %p79, %p80
      %p82 = scmp.ne.s32.totalorder %s73, %s74
      %p83 = scmp.eq.s32.totalorder %s21, 0
      %p84 = por %p82, %p83
      %p85 = scmp.ne.s32.totalorder %s73, %s74
      %p86 = scmp.eq.s32.totalorder %s22, 1
      %p87 = por %p85, %p86
      %p89 = scmp.ne.s32.totalorder %s74, %s88
      %p90 = scmp.eq.s32.totalorder %s22, 0
      %p91 = por %p89, %p90
      %s92 = ssub.s32 %s16, %s23
      %p93 = scmp.eq.s32.totalorder %s92, 0
      %s95 = sadd.s32 %s94, 1
      %s96 = scalar_select %p93, %s94, %s95
      %p99 = pneg %p93
      %p100 = scmp.eq.s32.totalorder %s16, 1
      %p101 = por %p99, %p100
      %p102 = scmp.ne.s32.totalorder %s94, %s97
      %p103 = scmp.eq.s32.totalorder %s16, 0
      %p104 = por %p102, %p103
      %p105 = scmp.ne.s32.totalorder %s94, %s97
      %p106 = scmp.eq.s32.totalorder %s21, 1
      %p107 = por %p105, %p106
      %p108 = scmp.ne.s32.totalorder %s97, %s98
      %p109 = scmp.eq.s32.totalorder %s21, 0
      %p110 = por %p108, %p109
      %p111 = scmp.ne.s32.totalorder %s97, %s98
      %p112 = scmp.eq.s32.totalorder %s22, 1
      %p113 = por %p111, %p112
      %p115 = scmp.ne.s32.totalorder %s98, %s114
      %p116 = scmp.eq.s32.totalorder %s22, 0
      %p117 = por %p115, %p116
      %p118 = scmp.le.s32.totalorder 1, %s16
      %p119 = scmp.lt.s32.totalorder %s16, 3
      %p120 = pnand %p118, %p119
      %p121 = pneg %p120
      // Predicated region
      $region9: #{_lambda_.4} parent=5 // pred_check
        _
      $region10: #{_lambda_.4} parent=5 // pred_check_branch
        %123 = sbr.rel (%p120) target = $region12
      $region11: #{_lambda_.4} parent=5 // pred_region
        %s124 = ssub.s32 %s16, 1
        // Predicated region
        $region13: #{_lambda_.4} parent=11 // pred_check
          %p125 = pneg %p63
        $region14: #{_lambda_.4} parent=11 // pred_check_branch
          %127 = sbr.rel (%p125) target = $region16
        $region15: #{_lambda_.4} parent=11 // pred_region
          %s129 = ssub.s32 32, 32
          %130 = vsyncadd [#allocation6], %s129
          %s132 = sshll.u32 [#allocation5], 4
          %s133 = int_to_ptr.vmem [resolvable:$true] %s132
          %135 = dma.hbm_to_vmem [thread:$0]  %s1, 32, %s133, [#allocation6]
        $region16: #{_lambda_.4} parent=11 // pred_fallthru
          _
        // Predicated region
        $region17: #{_lambda_.4} parent=11 // pred_check
          %p136 = pneg %p84
        $region18: #{_lambda_.4} parent=11 // pred_check_branch
          %138 = sbr.rel (%p136) target = $region20
        $region19: #{_lambda_.4} parent=11 // pred_region
          %s140 = ssub.s32 32, 32
          %141 = vsyncadd [#allocation6], %s140
          %s143 = sshll.u32 [#allocation7], 4
          %s144 = int_to_ptr.vmem [resolvable:$true] %s143
          %146 = dma.hbm_to_vmem [thread:$0]  %s2, 32, %s144, [#allocation6]
        $region20: #{_lambda_.4} parent=11 // pred_fallthru
          _
      $region12: #{_lambda_.4} parent=5 // pred_fallthru
        _
      %p147 = scmp.lt.s32.totalorder %s16, 2
      // Predicated region
      $region21: #{_lambda_.4} parent=5 // pred_check
        %p148 = pneg %p147
      $region22: #{_lambda_.4} parent=5 // pred_check_branch
        %150 = sbr.rel (%p148) target = $region24
      $region23: #{_lambda_.4} parent=5 // pred_region
        // Predicated region
        $region25: #{_lambda_.4} parent=23 // pred_check
          %p151 = pneg %p36
        $region26: #{_lambda_.4} parent=23 // pred_check_branch
          %153 = sbr.rel (%p151) target = $region28
        $region27: #{_lambda_.4} parent=23 // pred_region
          %s154 = sand.u32 %s26, 1
          %s155 = scalar_lea.sflag [#allocation3], %s154
          %s156 = sand.u32 %s26, 1
          %s157 = smul.addr %s156, 128
          %s158 = scalar_lea.vmem [#allocation2], %s157
          %s159 = smul.u32 32, %s16
          %s161 = ssub.s32 2048, 2048
          %162 = vsyncadd %s155, %s161
          %s163 = smul.addr %s159, 64
          %s164 = scalar_lea.hbm %s0, %s163
          %s165 = sshll.u32 %s158, 4
          %s166 = int_to_ptr.vmem [resolvable:$true] %s165
          %171 = dma.hbm_to_vmem [thread:$0]  %s164, 2048, %s166, %s155, 64, 64, 4
        $region28: #{_lambda_.4} parent=23 // pred_fallthru
          _
      $region24: #{_lambda_.4} parent=5 // pred_fallthru
        _
      %p172 = scmp.le.s32.totalorder 1, %s16
      %p173 = scmp.lt.s32.totalorder %s16, 3
      %p174 = pnand %p172, %p173
      %p175 = pneg %p174
      // Predicated region
      $region29: #{_lambda_.4} parent=5 // pred_check
        _
      $region30: #{_lambda_.4} parent=5 // pred_check_branch
        %177 = sbr.rel (%p174) target = $region32
      $region31: #{_lambda_.4} parent=5 // pred_region
        %s178 = ssub.s32 %s16, 1
        %s179 = sand.u32 %s29, 1
        %s180 = scalar_lea.sflag [#allocation3], %s179
        %s181 = sand.u32 %s29, 1
        %s182 = smul.addr %s181, 128
        %s183 = scalar_lea.vmem [#allocation2], %s182
        // Predicated region
        $region33: #{_lambda_.4} parent=31 // pred_check
          %p184 = pneg %p42
        $region34: #{_lambda_.4} parent=31 // pred_check_branch
          %186 = sbr.rel (%p184) target = $region36
        $region35: #{_lambda_.4} parent=31 // pred_region
          %187 = dma.done %s180, 2048
        $region36: #{_lambda_.4} parent=31 // pred_fallthru
          _
        // Predicated region
        $region37: #{_lambda_.4} parent=31 // pred_check
          %p188 = pneg %p63
        $region38: #{_lambda_.4} parent=31 // pred_check_branch
          %190 = sbr.rel (%p188) target = $region40
        $region39: #{_lambda_.4} parent=31 // pred_region
          %191 = dma.done [#allocation6], 32
        $region40: #{_lambda_.4} parent=31 // pred_fallthru
          _
        // Predicated region
        $region41: #{_lambda_.4} parent=31 // pred_check
          %p192 = pneg %p84
        $region42: #{_lambda_.4} parent=31 // pred_check_branch
          %194 = sbr.rel (%p192) target = $region44
        $region43: #{_lambda_.4} parent=31 // pred_region
          %195 = dma.done [#allocation6], 32
        $region44: #{_lambda_.4} parent=31 // pred_fallthru
          _
        %s196 = sand.u32 %s29, 1
        %s197 = scalar_lea.sflag [#allocation3], %s196
        %s198 = sand.u32 %s29, 1
        %s199 = smul.addr %s198, 128
        %s200 = scalar_lea.vmem [#allocation2], %s199
        %p201 = pneg %p42
        %p202 = pneg %p39
        %p203 = pneg %p63
        %p204 = pneg %p60
        %p205 = pneg %p84
        %p206 = pneg %p81
        %p207 = pneg %p110
        %p208 = pneg %p107
        %s209 = sand.u32 %s97, 1
        %s210 = scalar_lea.sflag [#allocation4], %s209
        %s211 = sand.u32 %s97, 1
        %s212 = smul.addr %s211, 128
        %s213 = scalar_lea.vmem [#allocation8], %s212
        %s214 = smul.u32 32, %s21
        %s215 = smul.u32 32, %s21
        %v217 = vld [vmem:[%s183] sm:$0xf]
        %v218 = vld [vmem:[%s183 + $0x4] sm:$0xf]
        %v219 = vld [vmem:[%s183 + $0x8] sm:$0xf]
        %v220 = vld [vmem:[%s183 + $0xc] sm:$0xf]
        %v221 = vld [vmem:[%s183 + $0x10] sm:$0xf]
        %v222 = vld [vmem:[%s183 + $0x14] sm:$0xf]
        %v223 = vld [vmem:[%s183 + $0x18] sm:$0xf]
        %v224 = vld [vmem:[%s183 + $0x1c] sm:$0xf]
        %v225 = vld [vmem:[%s183 + $0x20] sm:$0xf]
        %v226 = vld [vmem:[%s183 + $0x24] sm:$0xf]
        %v227 = vld [vmem:[%s183 + $0x28] sm:$0xf]
        %v228 = vld [vmem:[%s183 + $0x2c] sm:$0xf]
        %v229 = vld [vmem:[%s183 + $0x30] sm:$0xf]
        %v230 = vld [vmem:[%s183 + $0x34] sm:$0xf]
        %v231 = vld [vmem:[%s183 + $0x38] sm:$0xf]
        %v232 = vld [vmem:[%s183 + $0x3c] sm:$0xf]
        %v233 = vld [vmem:[%s183 + $0x40] sm:$0xf]
        %v234 = vld [vmem:[%s183 + $0x44] sm:$0xf]
        %v235 = vld [vmem:[%s183 + $0x48] sm:$0xf]
        %v236 = vld [vmem:[%s183 + $0x4c] sm:$0xf]
        %v237 = vld [vmem:[%s183 + $0x50] sm:$0xf]
        %v238 = vld [vmem:[%s183 + $0x54] sm:$0xf]
        %v239 = vld [vmem:[%s183 + $0x58] sm:$0xf]
        %v240 = vld [vmem:[%s183 + $0x5c] sm:$0xf]
        %v241 = vld [vmem:[%s183 + $0x60] sm:$0xf]
        %v242 = vld [vmem:[%s183 + $0x64] sm:$0xf]
        %v243 = vld [vmem:[%s183 + $0x68] sm:$0xf]
        %v244 = vld [vmem:[%s183 + $0x6c] sm:$0xf]
        %v245 = vld [vmem:[%s183 + $0x70] sm:$0xf]
        %v246 = vld [vmem:[%s183 + $0x74] sm:$0xf]
        %v247 = vld [vmem:[%s183 + $0x78] sm:$0xf]
        %v248 = vld [vmem:[%s183 + $0x7c] sm:$0xf]
        %v249 = vld [vmem:[#allocation5] sm:$0x3]
        %v250 = vld [vmem:[#allocation7] sm:$0x1]
        %v251 = vlaneseq
        %v252 = vshrl.u32 %v251, 7
        %v253 = vsub.s32 0, %v252
        %v254 = vrot.slane %v250, %v253
        %v287 = vunpack.c.l.b16 %v217
        %v288 = vunpack.c.l.b16 %v218
        %v289 = vunpack.c.l.b16 %v219
        %v290 = vunpack.c.l.b16 %v220
        %v291 = vunpack.c.l.b16 %v221
        %v292 = vunpack.c.l.b16 %v222
        %v293 = vunpack.c.l.b16 %v223
        %v294 = vunpack.c.l.b16 %v224
        %v295 = vunpack.c.l.b16 %v225
        %v296 = vunpack.c.l.b16 %v226
        %v297 = vunpack.c.l.b16 %v227
        %v298 = vunpack.c.l.b16 %v228
        %v299 = vunpack.c.l.b16 %v229
        %v300 = vunpack.c.l.b16 %v230
        %v301 = vunpack.c.l.b16 %v231
        %v302 = vunpack.c.l.b16 %v232
        %v303 = vunpack.c.l.b16 %v233
        %v304 = vunpack.c.l.b16 %v234
        %v305 = vunpack.c.l.b16 %v235
        %v306 = vunpack.c.l.b16 %v236
        %v307 = vunpack.c.l.b16 %v237
        %v308 = vunpack.c.l.b16 %v238
        %v309 = vunpack.c.l.b16 %v239
        %v310 = vunpack.c.l.b16 %v240
        %v311 = vunpack.c.l.b16 %v241
        %v312 = vunpack.c.l.b16 %v242
        %v313 = vunpack.c.l.b16 %v243
        %v314 = vunpack.c.l.b16 %v244
        %v315 = vunpack.c.l.b16 %v245
        %v316 = vunpack.c.l.b16 %v246
        %v317 = vunpack.c.l.b16 %v247
        %v318 = vunpack.c.l.b16 %v248
        %v319 = vpack.c.b16 %v288, %v287
        %v320 = vpack.c.b16 %v290, %v289
        %v321 = vpack.c.b16 %v292, %v291
        %v322 = vpack.c.b16 %v294, %v293
        %v323 = vpack.c.b16 %v296, %v295
        %v324 = vpack.c.b16 %v298, %v297
        %v325 = vpack.c.b16 %v300, %v299
        %v326 = vpack.c.b16 %v302, %v301
        %v327 = vpack.c.b16 %v304, %v303
        %v328 = vpack.c.b16 %v306, %v305
        %v329 = vpack.c.b16 %v308, %v307
        %v330 = vpack.c.b16 %v310, %v309
        %v331 = vpack.c.b16 %v312, %v311
        %v332 = vpack.c.b16 %v314, %v313
        %v333 = vpack.c.b16 %v316, %v315
        %v334 = vpack.c.b16 %v318, %v317
        %vm335 = vcmask 31744
        %v337 = vsel %vm335, %v319, 0
        %v340 = vsel %vm335, %v320, 0
        %v343 = vsel %vm335, %v321, 0
        %v346 = vsel %vm335, %v322, 0
        %v349 = vsel %vm335, %v323, 0
        %v352 = vsel %vm335, %v324, 0
        %v355 = vsel %vm335, %v325, 0
        %v358 = vsel %vm335, %v326, 0
        %v361 = vsel %vm335, %v327, 0
        %v364 = vsel %vm335, %v328, 0
        %v367 = vsel %vm335, %v329, 0
        %v370 = vsel %vm335, %v330, 0
        %v373 = vsel %vm335, %v331, 0
        %v376 = vsel %vm335, %v332, 0
        %v379 = vsel %vm335, %v333, 0
        %v382 = vsel %vm335, %v334, 0
        %vm384 = vcmask 1041408
        %v386 = vsel %vm384, %v249, 0
        %388 = vmatprep.subr.bf16.mxu0 0
        %389 = vmatpush1.bf16.msra.mxu0 %v386
        %390 = vmatprep.subr.bf16.mxu0 0
        %391 = vmatpush1.bf16.msra.mxu0 0
        %392 = vmatprep.subr.bf16.mxu0 0
        %393 = vmatpush1.bf16.msra.mxu0 0
        %394 = vmatprep.subr.bf16.mxu0 0
        %395 = vmatpush1.bf16.msra.mxu0 0
        %396 = vmatprep.subr.bf16.mxu0 0
        %397 = vmatpush1.bf16.msra.mxu0 0
        %398 = vmatprep.subr.bf16.mxu0 0
        %399 = vmatpush1.bf16.msra.mxu0 0
        %400 = vmatprep.subr.bf16.mxu0 0
        %401 = vmatpush1.bf16.msra.mxu0 0
        %402 = vmatprep.subr.bf16.mxu0 0
        %403 = vmatpush1.bf16.msra.mxu0 0
        %404 = vmatprep.subr.bf16.mxu0 0
        %405 = vmatpush1.bf16.msra.mxu0 0
        %406 = vmatprep.subr.bf16.mxu0 0
        %407 = vmatpush1.bf16.msra.mxu0 0
        %408 = vmatprep.subr.bf16.mxu0 0
        %409 = vmatpush1.bf16.msra.mxu0 0
        %410 = vmatprep.subr.bf16.mxu0 0
        %411 = vmatpush1.bf16.msra.mxu0 0
        %412 = vmatprep.subr.bf16.mxu0 0
        %413 = vmatpush1.bf16.msra.mxu0 0
        %414 = vmatprep.subr.bf16.mxu0 0
        %415 = vmatpush1.bf16.msra.mxu0 0
        %416 = vmatprep.subr.bf16.mxu0 0
        %417 = vmatpush1.bf16.msra.mxu0 0
        %418 = vmatprep.subr.bf16.mxu0 0
        %419 = vmatpush1.bf16.msra.mxu0 0
        %420 = vmatprep.mubr.bf16.mxu0 0
        %421 = vmatmul.mubr.bf16.gmra.mrb[0].mxu0 %v337
        %v422 = vpop.f32.mrb[0].mxu0
        %v423 = vadd.f32 %v254, %v422
        %v424 = vpop.f32.mrb[0].mxu0
        %v425 = vpop.f32.mrb[0].mxu0
        %v426 = vadd.f32 %v254, %v425
        %v427 = vpop.f32.mrb[0].mxu0
        %428 = vmatprep.mubr.bf16.mxu0 0
        %429 = vmatmul.mubr.bf16.gmra.mrb[0].mxu0 %v340
        %v430 = vpop.f32.mrb[0].mxu0
        %v431 = vadd.f32 %v254, %v430
        %v432 = vpop.f32.mrb[0].mxu0
        %v433 = vpop.f32.mrb[0].mxu0
        %v434 = vadd.f32 %v254, %v433
        %v435 = vpop.f32.mrb[0].mxu0
        %436 = vmatprep.mubr.bf16.mxu0 0
        %437 = vmatmul.mubr.bf16.gmra.mrb[0].mxu0 %v343
        %v438 = vpop.f32.mrb[0].mxu0
        %v439 = vadd.f32 %v254, %v438
        %v440 = vpop.f32.mrb[0].mxu0
        %v441 = vpop.f32.mrb[0].mxu0
        %v442 = vadd.f32 %v254, %v441
        %v443 = vpop.f32.mrb[0].mxu0
        %444 = vmatprep.mubr.bf16.mxu0 0
        %445 = vmatmul.mubr.bf16.gmra.mrb[0].mxu0 %v346
        %v446 = vpop.f32.mrb[0].mxu0
        %v447 = vadd.f32 %v254, %v446
        %v448 = vpop.f32.mrb[0].mxu0
        %v449 = vpop.f32.mrb[0].mxu0
        %v450 = vadd.f32 %v254, %v449
        %v451 = vpop.f32.mrb[0].mxu0
        %452 = vmatprep.mubr.bf16.mxu0 0
        %453 = vmatmul.mubr.bf16.gmra.mrb[0].mxu0 %v349
        %v454 = vpop.f32.mrb[0].mxu0
        %v455 = vadd.f32 %v254, %v454
        %v456 = vpop.f32.mrb[0].mxu0
        %v457 = vpop.f32.mrb[0].mxu0
        %v458 = vadd.f32 %v254, %v457
        %v459 = vpop.f32.mrb[0].mxu0
        %460 = vmatprep.mubr.bf16.mxu0 0
        %461 = vmatmul.mubr.bf16.gmra.mrb[0].mxu0 %v352
        %v462 = vpop.f32.mrb[0].mxu0
        %v463 = vadd.f32 %v254, %v462
        %v464 = vpop.f32.mrb[0].mxu0
        %v465 = vpop.f32.mrb[0].mxu0
        %v466 = vadd.f32 %v254, %v465
        %v467 = vpop.f32.mrb[0].mxu0
        %468 = vmatprep.mubr.bf16.mxu0 0
        %469 = vmatmul.mubr.bf16.gmra.mrb[0].mxu0 %v355
        %v470 = vpop.f32.mrb[0].mxu0
        %v471 = vadd.f32 %v254, %v470
        %v472 = vpop.f32.mrb[0].mxu0
        %v473 = vpop.f32.mrb[0].mxu0
        %v474 = vadd.f32 %v254, %v473
        %v475 = vpop.f32.mrb[0].mxu0
        %476 = vmatprep.mubr.bf16.mxu0 0
        %477 = vmatmul.mubr.bf16.gmra.mrb[0].mxu0 %v358
        %v478 = vpop.f32.mrb[0].mxu0
        %v479 = vadd.f32 %v254, %v478
        %v480 = vpop.f32.mrb[0].mxu0
        %v481 = vpop.f32.mrb[0].mxu0
        %v482 = vadd.f32 %v254, %v481
        %v483 = vpop.f32.mrb[0].mxu0
        %484 = vmatprep.mubr.bf16.mxu0 0
        %485 = vmatmul.mubr.bf16.gmra.mrb[0].mxu0 %v361
        %v486 = vpop.f32.mrb[0].mxu0
        %v487 = vadd.f32 %v254, %v486
        %v488 = vpop.f32.mrb[0].mxu0
        %v489 = vpop.f32.mrb[0].mxu0
        %v490 = vadd.f32 %v254, %v489
        %v491 = vpop.f32.mrb[0].mxu0
        %492 = vmatprep.mubr.bf16.mxu0 0
        %493 = vmatmul.mubr.bf16.gmra.mrb[0].mxu0 %v364
        %v494 = vpop.f32.mrb[0].mxu0
        %v495 = vadd.f32 %v254, %v494
        %v496 = vpop.f32.mrb[0].mxu0
        %v497 = vpop.f32.mrb[0].mxu0
        %v498 = vadd.f32 %v254, %v497
        %v499 = vpop.f32.mrb[0].mxu0
        %500 = vmatprep.mubr.bf16.mxu0 0
        %501 = vmatmul.mubr.bf16.gmra.mrb[0].mxu0 %v367
        %v502 = vpop.f32.mrb[0].mxu0
        %v503 = vadd.f32 %v254, %v502
        %v504 = vpop.f32.mrb[0].mxu0
        %v505 = vpop.f32.mrb[0].mxu0
        %v506 = vadd.f32 %v254, %v505
        %v507 = vpop.f32.mrb[0].mxu0
        %508 = vmatprep.mubr.bf16.mxu0 0
        %509 = vmatmul.mubr.bf16.gmra.mrb[0].mxu0 %v370
        %v510 = vpop.f32.mrb[0].mxu0
        %v511 = vadd.f32 %v254, %v510
        %v512 = vpop.f32.mrb[0].mxu0
        %v513 = vpop.f32.mrb[0].mxu0
        %v514 = vadd.f32 %v254, %v513
        %v515 = vpop.f32.mrb[0].mxu0
        %516 = vmatprep.mubr.bf16.mxu0 0
        %517 = vmatmul.mubr.bf16.gmra.mrb[0].mxu0 %v373
        %v518 = vpop.f32.mrb[0].mxu0
        %v519 = vadd.f32 %v254, %v518
        %v520 = vpop.f32.mrb[0].mxu0
        %v521 = vpop.f32.mrb[0].mxu0
        %v522 = vadd.f32 %v254, %v521
        %v523 = vpop.f32.mrb[0].mxu0
        %524 = vmatprep.mubr.bf16.mxu0 0
        %525 = vmatmul.mubr.bf16.gmra.mrb[0].mxu0 %v376
        %v526 = vpop.f32.mrb[0].mxu0
        %v527 = vadd.f32 %v254, %v526
        %v528 = vpop.f32.mrb[0].mxu0
        %v529 = vpop.f32.mrb[0].mxu0
        %v530 = vadd.f32 %v254, %v529
        %v531 = vpop.f32.mrb[0].mxu0
        %532 = vmatprep.mubr.bf16.mxu0 0
        %533 = vmatmul.mubr.bf16.gmra.mrb[0].mxu0 %v379
        %v534 = vpop.f32.mrb[0].mxu0
        %v535 = vadd.f32 %v254, %v534
        %v536 = vpop.f32.mrb[0].mxu0
        %v537 = vpop.f32.mrb[0].mxu0
        %v538 = vadd.f32 %v254, %v537
        %v539 = vpop.f32.mrb[0].mxu0
        %540 = vmatprep.mubr.bf16.mxu0 0
        %541 = vmatmul.mubr.bf16.gmra.mrb[0].mxu0 %v382
        %v542 = vpop.f32.mrb[0].mxu0
        %v543 = vadd.f32 %v254, %v542
        %v544 = vpop.f32.mrb[0].mxu0
        %v545 = vpop.f32.mrb[0].mxu0
        %v546 = vadd.f32 %v254, %v545
        %v547 = vpop.f32.mrb[0].mxu0
        %548 = vdwg.mxu0
        %vm549 = vcmp.ge.f32.partialorder %v423, 0.0
        %vm550 = vcmp.ge.f32.partialorder %v426, 0.0
        %vm551 = vcmp.ge.f32.partialorder %v431, 0.0
        %vm552 = vcmp.ge.f32.partialorder %v434, 0.0
        %vm553 = vcmp.ge.f32.partialorder %v439, 0.0
        %vm554 = vcmp.ge.f32.partialorder %v442, 0.0
        %vm555 = vcmp.ge.f32.partialorder %v447, 0.0
        %vm556 = vcmp.ge.f32.partialorder %v450, 0.0
        %vm557 = vcmp.ge.f32.partialorder %v455, 0.0
        %vm558 = vcmp.ge.f32.partialorder %v458, 0.0
        %vm559 = vcmp.ge.f32.partialorder %v463, 0.0
        %vm560 = vcmp.ge.f32.partialorder %v466, 0.0
        %vm561 = vcmp.ge.f32.partialorder %v471, 0.0
        %vm562 = vcmp.ge.f32.partialorder %v474, 0.0
        %vm563 = vcmp.ge.f32.partialorder %v479, 0.0
        %vm564 = vcmp.ge.f32.partialorder %v482, 0.0
        %vm565 = vcmp.ge.f32.partialorder %v487, 0.0
        %vm566 = vcmp.ge.f32.partialorder %v490, 0.0
        %vm567 = vcmp.ge.f32.partialorder %v495, 0.0
        %vm568 = vcmp.ge.f32.partialorder %v498, 0.0
        %vm569 = vcmp.ge.f32.partialorder %v503, 0.0
        %vm570 = vcmp.ge.f32.partialorder %v506, 0.0
        %vm571 = vcmp.ge.f32.partialorder %v511, 0.0
        %vm572 = vcmp.ge.f32.partialorder %v514, 0.0
        %vm573 = vcmp.ge.f32.partialorder %v519, 0.0
        %vm574 = vcmp.ge.f32.partialorder %v522, 0.0
        %vm575 = vcmp.ge.f32.partialorder %v527, 0.0
        %vm576 = vcmp.ge.f32.partialorder %v530, 0.0
        %vm577 = vcmp.ge.f32.partialorder %v535, 0.0
        %vm578 = vcmp.ge.f32.partialorder %v538, 0.0
        %vm579 = vcmp.ge.f32.partialorder %v543, 0.0
        %vm580 = vcmp.ge.f32.partialorder %v546, 0.0
        %v581 = vld [vmem:[#allocation7 + $0x1] sm:$0x1]
        %v582 = vlaneseq
        %v583 = vshrl.u32 %v582, 7
        %v584 = vsub.s32 0, %v583
        %v585 = vrot.slane %v581, %v584
        %v586 = vmul.f32 %v585, %v423
        %v587 = vmul.f32 %v585, %v426
        %v588 = vmul.f32 %v585, %v431
        %v589 = vmul.f32 %v585, %v434
        %v590 = vmul.f32 %v585, %v439
        %v591 = vmul.f32 %v585, %v442
        %v592 = vmul.f32 %v585, %v447
        %v593 = vmul.f32 %v585, %v450
        %v594 = vmul.f32 %v585, %v455
        %v595 = vmul.f32 %v585, %v458
        %v596 = vmul.f32 %v585, %v463
        %v597 = vmul.f32 %v585, %v466
        %v598 = vmul.f32 %v585, %v471
        %v599 = vmul.f32 %v585, %v474
        %v600 = vmul.f32 %v585, %v479
        %v601 = vmul.f32 %v585, %v482
        %v602 = vmul.f32 %v585, %v487
        %v603 = vmul.f32 %v585, %v490
        %v604 = vmul.f32 %v585, %v495
        %v605 = vmul.f32 %v585, %v498
        %v606 = vmul.f32 %v585, %v503
        %v607 = vmul.f32 %v585, %v506
        %v608 = vmul.f32 %v585, %v511
        %v609 = vmul.f32 %v585, %v514
        %v610 = vmul.f32 %v585, %v519
        %v611 = vmul.f32 %v585, %v522
        %v612 = vmul.f32 %v585, %v527
        %v613 = vmul.f32 %v585, %v530
        %v614 = vmul.f32 %v585, %v535
        %v615 = vmul.f32 %v585, %v538
        %v616 = vmul.f32 %v585, %v543
        %v617 = vmul.f32 %v585, %v546
        %v618 = vsel %vm549, %v423, %v586
        %v619 = vsel %vm550, %v426, %v587
        %v620 = vsel %vm551, %v431, %v588
        %v621 = vsel %vm552, %v434, %v589
        %v622 = vsel %vm553, %v439, %v590
        %v623 = vsel %vm554, %v442, %v591
        %v624 = vsel %vm555, %v447, %v592
        %v625 = vsel %vm556, %v450, %v593
        %v626 = vsel %vm557, %v455, %v594
        %v627 = vsel %vm558, %v458, %v595
        %v628 = vsel %vm559, %v463, %v596
        %v629 = vsel %vm560, %v466, %v597
        %v630 = vsel %vm561, %v471, %v598
        %v631 = vsel %vm562, %v474, %v599
        %v632 = vsel %vm563, %v479, %v600
        %v633 = vsel %vm564, %v482, %v601
        %v634 = vsel %vm565, %v487, %v602
        %v635 = vsel %vm566, %v490, %v603
        %v636 = vsel %vm567, %v495, %v604
        %v637 = vsel %vm568, %v498, %v605
        %v638 = vsel %vm569, %v503, %v606
        %v639 = vsel %vm570, %v506, %v607
        %v640 = vsel %vm571, %v511, %v608
        %v641 = vsel %vm572, %v514, %v609
        %v642 = vsel %vm573, %v519, %v610
        %v643 = vsel %vm574, %v522, %v611
        %v644 = vsel %vm575, %v527, %v612
        %v645 = vsel %vm576, %v530, %v613
        %v646 = vsel %vm577, %v535, %v614
        %v647 = vsel %vm578, %v538, %v615
        %v648 = vsel %vm579, %v543, %v616
        %v649 = vsel %vm580, %v546, %v617
        %v650 = vpack.c.bf16 %v619, %v618
        %v651 = vpack.c.bf16 %v621, %v620
        %v652 = vpack.c.bf16 %v623, %v622
        %v653 = vpack.c.bf16 %v625, %v624
        %v654 = vpack.c.bf16 %v627, %v626
        %v655 = vpack.c.bf16 %v629, %v628
        %v656 = vpack.c.bf16 %v631, %v630
        %v657 = vpack.c.bf16 %v633, %v632
        %v658 = vpack.c.bf16 %v635, %v634
        %v659 = vpack.c.bf16 %v637, %v636
        %v660 = vpack.c.bf16 %v639, %v638
        %v661 = vpack.c.bf16 %v641, %v640
        %v662 = vpack.c.bf16 %v643, %v642
        %v663 = vpack.c.bf16 %v645, %v644
        %v664 = vpack.c.bf16 %v647, %v646
        %v665 = vpack.c.bf16 %v649, %v648
        %v682 = vunpack.c.l.b16 %v650
        %v683 = vunpack.c.h.b16 %v650
        %v684 = vunpack.c.l.b16 %v651
        %v685 = vunpack.c.h.b16 %v651
        %v686 = vunpack.c.l.b16 %v652
        %v687 = vunpack.c.h.b16 %v652
        %v688 = vunpack.c.l.b16 %v653
        %v689 = vunpack.c.h.b16 %v653
        %v690 = vunpack.c.l.b16 %v654
        %v691 = vunpack.c.h.b16 %v654
        %v692 = vunpack.c.l.b16 %v655
        %v693 = vunpack.c.h.b16 %v655
        %v694 = vunpack.c.l.b16 %v656
        %v695 = vunpack.c.h.b16 %v656
        %v696 = vunpack.c.l.b16 %v657
        %v697 = vunpack.c.h.b16 %v657
        %v698 = vunpack.c.l.b16 %v658
        %v699 = vunpack.c.h.b16 %v658
        %v700 = vunpack.c.l.b16 %v659
        %v701 = vunpack.c.h.b16 %v659
        %v702 = vunpack.c.l.b16 %v660
        %v703 = vunpack.c.h.b16 %v660
        %v704 = vunpack.c.l.b16 %v661
        %v705 = vunpack.c.h.b16 %v661
        %v706 = vunpack.c.l.b16 %v662
        %v707 = vunpack.c.h.b16 %v662
        %v708 = vunpack.c.l.b16 %v663
        %v709 = vunpack.c.h.b16 %v663
        %v710 = vunpack.c.l.b16 %v664
        %v711 = vunpack.c.h.b16 %v664
        %v712 = vunpack.c.l.b16 %v665
        %v713 = vunpack.c.h.b16 %v665
        %v714 = vpack.c.b16 %v682, %v682
        %v715 = vpack.c.b16 %v683, %v683
        %v716 = vpack.c.b16 %v684, %v684
        %v717 = vpack.c.b16 %v685, %v685
        %v718 = vpack.c.b16 %v686, %v686
        %v719 = vpack.c.b16 %v687, %v687
        %v720 = vpack.c.b16 %v688, %v688
        %v721 = vpack.c.b16 %v689, %v689
        %v722 = vpack.c.b16 %v690, %v690
        %v723 = vpack.c.b16 %v691, %v691
        %v724 = vpack.c.b16 %v692, %v692
        %v725 = vpack.c.b16 %v693, %v693
        %v726 = vpack.c.b16 %v694, %v694
        %v727 = vpack.c.b16 %v695, %v695
        %v728 = vpack.c.b16 %v696, %v696
        %v729 = vpack.c.b16 %v697, %v697
        %v730 = vpack.c.b16 %v698, %v698
        %v731 = vpack.c.b16 %v699, %v699
        %v732 = vpack.c.b16 %v700, %v700
        %v733 = vpack.c.b16 %v701, %v701
        %v734 = vpack.c.b16 %v702, %v702
        %v735 = vpack.c.b16 %v703, %v703
        %v736 = vpack.c.b16 %v704, %v704
        %v737 = vpack.c.b16 %v705, %v705
        %v738 = vpack.c.b16 %v706, %v706
        %v739 = vpack.c.b16 %v707, %v707
        %v740 = vpack.c.b16 %v708, %v708
        %v741 = vpack.c.b16 %v709, %v709
        %v742 = vpack.c.b16 %v710, %v710
        %v743 = vpack.c.b16 %v711, %v711
        %v744 = vpack.c.b16 %v712, %v712
        %v745 = vpack.c.b16 %v713, %v713
        %778 = vst [vmem:[%s213] sm:$0xf] %v714
        %779 = vst [vmem:[%s213 + $0x4] sm:$0xf] %v715
        %780 = vst [vmem:[%s213 + $0x8] sm:$0xf] %v716
        %781 = vst [vmem:[%s213 + $0xc] sm:$0xf] %v717
        %782 = vst [vmem:[%s213 + $0x10] sm:$0xf] %v718
        %783 = vst [vmem:[%s213 + $0x14] sm:$0xf] %v719
        %784 = vst [vmem:[%s213 + $0x18] sm:$0xf] %v720
        %785 = vst [vmem:[%s213 + $0x1c] sm:$0xf] %v721
        %786 = vst [vmem:[%s213 + $0x20] sm:$0xf] %v722
        %787 = vst [vmem:[%s213 + $0x24] sm:$0xf] %v723
        %788 = vst [vmem:[%s213 + $0x28] sm:$0xf] %v724
        %789 = vst [vmem:[%s213 + $0x2c] sm:$0xf] %v725
        %790 = vst [vmem:[%s213 + $0x30] sm:$0xf] %v726
        %791 = vst [vmem:[%s213 + $0x34] sm:$0xf] %v727
        %792 = vst [vmem:[%s213 + $0x38] sm:$0xf] %v728
        %793 = vst [vmem:[%s213 + $0x3c] sm:$0xf] %v729
        %794 = vst [vmem:[%s213 + $0x40] sm:$0xf] %v730
        %795 = vst [vmem:[%s213 + $0x44] sm:$0xf] %v731
        %796 = vst [vmem:[%s213 + $0x48] sm:$0xf] %v732
        %797 = vst [vmem:[%s213 + $0x4c] sm:$0xf] %v733
        %798 = vst [vmem:[%s213 + $0x50] sm:$0xf] %v734
        %799 = vst [vmem:[%s213 + $0x54] sm:$0xf] %v735
        %800 = vst [vmem:[%s213 + $0x58] sm:$0xf] %v736
        %801 = vst [vmem:[%s213 + $0x5c] sm:$0xf] %v737
        %802 = vst [vmem:[%s213 + $0x60] sm:$0xf] %v738
        %803 = vst [vmem:[%s213 + $0x64] sm:$0xf] %v739
        %804 = vst [vmem:[%s213 + $0x68] sm:$0xf] %v740
        %805 = vst [vmem:[%s213 + $0x6c] sm:$0xf] %v741
        %806 = vst [vmem:[%s213 + $0x70] sm:$0xf] %v742
        %807 = vst [vmem:[%s213 + $0x74] sm:$0xf] %v743
        %808 = vst [vmem:[%s213 + $0x78] sm:$0xf] %v744
        %809 = vst [vmem:[%s213 + $0x7c] sm:$0xf] %v745
        %s810 = sand.u32 %s97, 1
        %s811 = scalar_lea.sflag [#allocation4], %s810
        %s812 = sand.u32 %s97, 1
        %s813 = smul.addr %s812, 128
        %s814 = scalar_lea.vmem [#allocation8], %s813
        // Predicated region
        $region45: #{_lambda_.4} parent=31 // pred_check
          %p815 = pneg %p107
        $region46: #{_lambda_.4} parent=31 // pred_check_branch
          %817 = sbr.rel (%p815) target = $region48
        $region47: #{_lambda_.4} parent=31 // pred_region
          %s818 = smul.u32 32, %s21
          %s820 = ssub.s32 2048, 2048
          %821 = vsyncadd %s811, %s820
          %s822 = smul.addr %s818, 64
          %s823 = scalar_lea.hbm %s3, %s822
          %s824 = sshll.u32 %s814, 4
          %s825 = int_to_ptr.vmem [resolvable:$true] %s824
          %830 = dma.vmem_to_hbm [thread:$0]  %s825, 2048, %s823, %s811, 64, 64, 4
        $region48: #{_lambda_.4} parent=31 // pred_fallthru
          _
      $region32: #{_lambda_.4} parent=5 // pred_fallthru
        _
      %p831 = scmp.le.s32.totalorder 2, %s16
      // Predicated region
      $region49: #{_lambda_.4} parent=5 // pred_check
        %p832 = pneg %p831
      $region50: #{_lambda_.4} parent=5 // pred_check_branch
        %834 = sbr.rel (%p832) target = $region52
      $region51: #{_lambda_.4} parent=5 // pred_region
        %s835 = ssub.s32 %s16, 2
        // Predicated region
        $region53: #{_lambda_.4} parent=51 // pred_check
          %p836 = pneg %p113
        $region54: #{_lambda_.4} parent=51 // pred_check_branch
          %838 = sbr.rel (%p836) target = $region56
        $region55: #{_lambda_.4} parent=51 // pred_region
          %s839 = sand.u32 %s98, 1
          %s840 = scalar_lea.sflag [#allocation4], %s839
          %s841 = sand.u32 %s98, 1
          %s842 = smul.addr %s841, 128
          %s843 = scalar_lea.vmem [#allocation8], %s842
          %844 = dma.done %s840, 2048
        $region56: #{_lambda_.4} parent=51 // pred_fallthru
          _
      $region52: #{_lambda_.4} parent=5 // pred_fallthru
        _
    $region6: #{_lambda_.4} parent=1 // loop_footer
      %s20 = sadd.s32 1, %s16
    $region7: #{_lambda_.4} parent=1 // loop_footer_branch
      %15 = sbr.rel target = $region3
    $region8: #{_lambda_.4} parent=1 // loop_exit
      _
    %845 = vsyncpa [#allocation3], 1
    %s846 = scalar_lea.sflag [#allocation3], 1
    %847 = vsyncpa %s846, 1
    %848 = vsyncpa [#allocation6], 1
    %849 = vsyncpa [#allocation4], 1
    %s850 = scalar_lea.sflag [#allocation4], 1
    %851 = vsyncpa %s850, 1

// kernel: tile.23
$region0: #{tile.23}
  #allocation0 [shape = 's32[1]{0}', space=sflag, size = 0x4, scoped, tag = 'scoped memory for tile.23']
  %s0 = inlined_call_operand.vmem [shape: f32[8], index: 0, kind: input, shape index: {}]
  %s1 = inlined_call_operand.vmem [shape: f32[4,8], index: 1, kind: output, shape index: {}]
  // Predicated region
  $region2: #{tile.23} parent=0 // pred_check
    _
  $region3: #{tile.23} parent=0 // pred_check_branch
    %3 = sbr.rel (0) target = $region5
  $region4: #{tile.23} parent=0 // pred_region
    _
  $region5: #{tile.23} parent=0 // pred_fallthru
    _
  %v4 = vld [vmem:[%s0] ss:$0 sm:$0xff]
  %5 = vst [vmem:[%s1] sm:$0xf] %v4

// kernel: tile.24
$region0: #{tile.24}
  %s0 = inlined_call_operand.vmem [shape: f32[4,8], index: 0, kind: input, shape index: {}]
  %s1 = inlined_call_operand.vmem [shape: f32[32], index: 1, kind: output, shape index: {}]
  $region1: #{tile.24} parent=0
    #allocation0 [shape = 'u8[4096]{0}', space=vmem, size = 0x1000, scoped, tag = 'scoped mem for output reshape']
    #allocation1 [shape = 'u8[4096]{0}', space=vmem, size = 0x1000, scoped, tag = 'scoped mem for input reshape']
    %s3 = sshllo.u32 0, 4
    %v4 = vld [vmem:[%s0] sm:%s3]
    %5 = vst [vmem:[#allocation1] sm:%s3] %v4
    %v6 = vld [vmem:[#allocation1] sm:$0x1]
    %vm7 = vcmask 64512
    %8 = vst.msk [vmem:[#allocation0] sm:$0x1] %vm7, %v6
    %s9 = scalar_lea.vmem [#allocation1], 3
    %v10 = vld [vmem:[%s9] sm:$0x1]
    %11 = vrot.lane.b32.xlu0 %v10, 24
    %v12 = vpop.permute.xlu0 %11
    %vm13 = vcmask 261312
    %14 = vst.msk [vmem:[#allocation0] sm:$0x1] %vm13, %v12
    %s15 = scalar_lea.vmem [#allocation1], 2
    %v16 = vld [vmem:[%s15] sm:$0x1]
    %17 = vrot.lane.b32.xlu0 %v16, 16
    %v18 = vpop.permute.xlu0 %17
    %vm19 = vcmask 195712
    %20 = vst.msk [vmem:[#allocation0] sm:$0x1] %vm19, %v18
    %s21 = scalar_lea.vmem [#allocation1], 1
    %v22 = vld [vmem:[%s21] sm:$0x1]
    %23 = vrot.lane.b32.xlu0 %v22, 8
    %v24 = vpop.permute.xlu0 %23
    %vm25 = vcmask 130112
    %26 = vst.msk [vmem:[#allocation0] sm:$0x1] %vm25, %v24
    %s28 = sshllo.u32 0, 1
    %v30 = vld [vmem:[#allocation0] sm:%s28]
    %s31 = sshllo.u32 0, 1
    %32 = vst [vmem:[%s1] sm:%s31] %v30

// kernel: _lambda_.5
$region0: #{_lambda_.5}
  #allocation0 [shape = 'u32[]', space=smem, size = 0x4, offset = 0x4, fixed_abs, tag = 'smem constant byte address 0x4 - core index']
  #allocation1 [shape = 'u32[144,128]{1,0:T(1,128)}', space=vmem, size = 0x12000, scoped, tag = 'internal scratch']
  %s0 = inlined_call_operand.hbm [shape: bf16[512,72], index: 0, kind: input, shape index: {}]
  %s1 = inlined_call_operand.hbm [shape: bf16[72,128], index: 1, kind: input, shape index: {}]
  %s2 = inlined_call_operand.hbm [shape: f32[2,128], index: 2, kind: input, shape index: {}]
  %s3 = inlined_call_operand.hbm [shape: bf16[512,128], index: 3, kind: output, shape index: {}]
  %s4 = sld [smem:[#allocation0]]
  $region57: #{_lambda_.5} parent=0
    _
  %s6 = ssub.s32 1, %s4
  %s7 = scalar_select 0, %s6, %s4
  $region1: #{_lambda_.5} parent=0
    #allocation2 [shape = 'u8[131072]{0}', space=vmem, size = 0x20000, scoped, tag = 'input window, operand 0']
    #allocation3 [shape = 's32[2]{0}', space=sflag, size = 0x8, scoped, tag = 'scoped memory for _lambda_.5']
    #allocation4 [shape = 's32[2]{0}', space=sflag, size = 0x8, scoped, tag = 'scoped memory for _lambda_.5']
    #allocation5 [shape = 'u8[18432]{0}', space=vmem, size = 0x4800, scoped, tag = 'input window, operand 1, single buffered']
    #allocation6 [shape = 's32[1]{0}', space=sflag, size = 0x4, scoped, tag = 'scoped memory for _lambda_.5']
    #allocation7 [shape = 'u8[1024]{0}', space=vmem, size = 0x400, scoped, tag = 'input window, operand 2, single buffered']
    #allocation8 [shape = 'u8[131072]{0}', space=vmem, size = 0x20000, scoped, tag = 'output window, operand 0']
    %8 = vsyncpa [#allocation3], 0
    %s9 = scalar_lea.sflag [#allocation3], 1
    %10 = vsyncpa %s9, 0
    %11 = vsyncpa [#allocation6], 0
    %12 = vsyncpa [#allocation4], 0
    %s13 = scalar_lea.sflag [#allocation4], 1
    %14 = vsyncpa %s13, 0
    loop: start=0, step=1, limit=4
    $region2: #{_lambda_.5} parent=1 // loop_pre_header
      _
    $region3: #{_lambda_.5} parent=1 // loop_header
      %s16 = sphi 0, %s20
      %p17 = scmp.ge.s32.totalorder %s16, 4
      %s26 = sphi 0, %s28
      %s29 = sphi 0, %s26
      %s30 = sphi 0, %s29
      %s46 = sphi 0, %s30
      %s50 = sphi 0, %s50
      %s52 = sphi 0, %s50
      %s53 = sphi 0, %s52
      %s67 = sphi 0, %s53
      %s71 = sphi 0, %s71
      %s73 = sphi 0, %s71
      %s74 = sphi 0, %s73
      %s88 = sphi 0, %s74
      %s94 = sphi 0, %s96
      %s97 = sphi 0, %s94
      %s98 = sphi 0, %s97
      %s114 = sphi 0, %s98
    $region4: #{_lambda_.5} parent=1 // loop_header_branch
      %19 = sbr.rel (%p17) target = $region8
    $region5: #{_lambda_.5} parent=1 // loop_body
      %s21 = ssub.s32 %s16, 1
      %s22 = ssub.s32 %s16, 2
      %s23 = sadd.s32 %s16, 1
      %s24 = ssub.s32 %s16, %s23
      %p25 = scmp.eq.s32.totalorder %s24, 0
      %s27 = sadd.s32 %s26, 1
      %s28 = scalar_select %p25, %s26, %s27
      %p31 = pneg %p25
      %p32 = scmp.eq.s32.totalorder %s16, 1
      %p33 = por %p31, %p32
      %p34 = scmp.ne.s32.totalorder %s26, %s29
      %p35 = scmp.eq.s32.totalorder %s16, 0
      %p36 = por %p34, %p35
      %p37 = scmp.ne.s32.totalorder %s26, %s29
      %p38 = scmp.eq.s32.totalorder %s21, 1
      %p39 = por %p37, %p38
      %p40 = scmp.ne.s32.totalorder %s29, %s30
      %p41 = scmp.eq.s32.totalorder %s21, 0
      %p42 = por %p40, %p41
      %p43 = scmp.ne.s32.totalorder %s29, %s30
      %p44 = scmp.eq.s32.totalorder %s22, 1
      %p45 = por %p43, %p44
      %p47 = scmp.ne.s32.totalorder %s30, %s46
      %p48 = scmp.eq.s32.totalorder %s22, 0
      %p49 = por %p47, %p48
      %s51 = sadd.s32 %s50, 1
      %p54 = scmp.eq.s32.totalorder %s16, 1
      %p55 = scmp.ne.s32.totalorder %s50, %s52
      %p56 = scmp.eq.s32.totalorder %s16, 0
      %p57 = por %p55, %p56
      %p58 = scmp.ne.s32.totalorder %s50, %s52
      %p59 = scmp.eq.s32.totalorder %s21, 1
      %p60 = por %p58, %p59
      %p61 = scmp.ne.s32.totalorder %s52, %s53
      %p62 = scmp.eq.s32.totalorder %s21, 0
      %p63 = por %p61, %p62
      %p64 = scmp.ne.s32.totalorder %s52, %s53
      %p65 = scmp.eq.s32.totalorder %s22, 1
      %p66 = por %p64, %p65
      %p68 = scmp.ne.s32.totalorder %s53, %s67
      %p69 = scmp.eq.s32.totalorder %s22, 0
      %p70 = por %p68, %p69
      %s72 = sadd.s32 %s71, 1
      %p75 = scmp.eq.s32.totalorder %s16, 1
      %p76 = scmp.ne.s32.totalorder %s71, %s73
      %p77 = scmp.eq.s32.totalorder %s16, 0
      %p78 = por %p76, %p77
      %p79 = scmp.ne.s32.totalorder %s71, %s73
      %p80 = scmp.eq.s32.totalorder %s21, 1
      %p81 = por %p79, %p80
      %p82 = scmp.ne.s32.totalorder %s73, %s74
      %p83 = scmp.eq.s32.totalorder %s21, 0
      %p84 = por %p82, %p83
      %p85 = scmp.ne.s32.totalorder %s73, %s74
      %p86 = scmp.eq.s32.totalorder %s22, 1
      %p87 = por %p85, %p86
      %p89 = scmp.ne.s32.totalorder %s74, %s88
      %p90 = scmp.eq.s32.totalorder %s22, 0
      %p91 = por %p89, %p90
      %s92 = ssub.s32 %s16, %s23
      %p93 = scmp.eq.s32.totalorder %s92, 0
      %s95 = sadd.s32 %s94, 1
      %s96 = scalar_select %p93, %s94, %s95
      %p99 = pneg %p93
      %p100 = scmp.eq.s32.totalorder %s16, 1
      %p101 = por %p99, %p100
      %p102 = scmp.ne.s32.totalorder %s94, %s97
      %p103 = scmp.eq.s32.totalorder %s16, 0
      %p104 = por %p102, %p103
      %p105 = scmp.ne.s32.totalorder %s94, %s97
      %p106 = scmp.eq.s32.totalorder %s21, 1
      %p107 = por %p105, %p106
      %p108 = scmp.ne.s32.totalorder %s97, %s98
      %p109 = scmp.eq.s32.totalorder %s21, 0
      %p110 = por %p108, %p109
      %p111 = scmp.ne.s32.totalorder %s97, %s98
      %p112 = scmp.eq.s32.totalorder %s22, 1
      %p113 = por %p111, %p112
      %p115 = scmp.ne.s32.totalorder %s98, %s114
      %p116 = scmp.eq.s32.totalorder %s22, 0
      %p117 = por %p115, %p116
      %p118 = scmp.le.s32.totalorder 1, %s16
      %p119 = scmp.lt.s32.totalorder %s16, 3
      %p120 = pnand %p118, %p119
      %p121 = pneg %p120
      // Predicated region
      $region9: #{_lambda_.5} parent=5 // pred_check
        _
      $region10: #{_lambda_.5} parent=5 // pred_check_branch
        %123 = sbr.rel (%p120) target = $region12
      $region11: #{_lambda_.5} parent=5 // pred_region
        %s124 = ssub.s32 %s16, 1
        // Predicated region
        $region13: #{_lambda_.5} parent=11 // pred_check
          %p125 = pneg %p63
        $region14: #{_lambda_.5} parent=11 // pred_check_branch
          %127 = sbr.rel (%p125) target = $region16
        $region15: #{_lambda_.5} parent=11 // pred_region
          %s129 = ssub.s32 576, 576
          %130 = vsyncadd [#allocation6], %s129
          %s131 = sshll.u32 [#allocation5], 4
          %s132 = int_to_ptr.vmem [resolvable:$true] %s131
          %137 = dma.hbm_to_vmem [thread:$0]  %s1, 576, %s132, [#allocation6], 64, 64, 4
        $region16: #{_lambda_.5} parent=11 // pred_fallthru
          _
        // Predicated region
        $region17: #{_lambda_.5} parent=11 // pred_check
          %p138 = pneg %p84
        $region18: #{_lambda_.5} parent=11 // pred_check_branch
          %140 = sbr.rel (%p138) target = $region20
        $region19: #{_lambda_.5} parent=11 // pred_region
          %s142 = ssub.s32 32, 32
          %143 = vsyncadd [#allocation6], %s142
          %s145 = sshll.u32 [#allocation7], 4
          %s146 = int_to_ptr.vmem [resolvable:$true] %s145
          %148 = dma.hbm_to_vmem [thread:$0]  %s2, 32, %s146, [#allocation6]
        $region20: #{_lambda_.5} parent=11 // pred_fallthru
          _
      $region12: #{_lambda_.5} parent=5 // pred_fallthru
        _
      %p149 = scmp.lt.s32.totalorder %s16, 2
      // Predicated region
      $region21: #{_lambda_.5} parent=5 // pred_check
        %p150 = pneg %p149
      $region22: #{_lambda_.5} parent=5 // pred_check_branch
        %152 = sbr.rel (%p150) target = $region24
      $region23: #{_lambda_.5} parent=5 // pred_region
        // Predicated region
        $region25: #{_lambda_.5} parent=23 // pred_check
          %p153 = pneg %p36
        $region26: #{_lambda_.5} parent=23 // pred_check_branch
          %155 = sbr.rel (%p153) target = $region28
        $region27: #{_lambda_.5} parent=23 // pred_region
          %s156 = sand.u32 %s26, 1
          %s157 = scalar_lea.sflag [#allocation3], %s156
          %s158 = sand.u32 %s26, 1
          %s159 = smul.addr %s158, 128
          %s160 = scalar_lea.vmem [#allocation2], %s159
          %s161 = smul.u32 32, %s16
          %s163 = ssub.s32 2048, 2048
          %164 = vsyncadd %s157, %s163
          %s165 = smul.addr %s161, 64
          %s166 = scalar_lea.hbm %s0, %s165
          %s167 = sshll.u32 %s160, 4
          %s168 = int_to_ptr.vmem [resolvable:$true] %s167
          %173 = dma.hbm_to_vmem [thread:$0]  %s166, 2048, %s168, %s157, 64, 64, 4
        $region28: #{_lambda_.5} parent=23 // pred_fallthru
          _
      $region24: #{_lambda_.5} parent=5 // pred_fallthru
        _
      %p174 = scmp.le.s32.totalorder 1, %s16
      %p175 = scmp.lt.s32.totalorder %s16, 3
      %p176 = pnand %p174, %p175
      %p177 = pneg %p176
      // Predicated region
      $region29: #{_lambda_.5} parent=5 // pred_check
        _
      $region30: #{_lambda_.5} parent=5 // pred_check_branch
        %179 = sbr.rel (%p176) target = $region32
      $region31: #{_lambda_.5} parent=5 // pred_region
        %s180 = ssub.s32 %s16, 1
        %s181 = sand.u32 %s29, 1
        %s182 = scalar_lea.sflag [#allocation3], %s181
        %s183 = sand.u32 %s29, 1
        %s184 = smul.addr %s183, 128
        %s185 = scalar_lea.vmem [#allocation2], %s184
        // Predicated region
        $region33: #{_lambda_.5} parent=31 // pred_check
          %p186 = pneg %p42
        $region34: #{_lambda_.5} parent=31 // pred_check_branch
          %188 = sbr.rel (%p186) target = $region36
        $region35: #{_lambda_.5} parent=31 // pred_region
          %189 = dma.done %s182, 2048
        $region36: #{_lambda_.5} parent=31 // pred_fallthru
          _
        // Predicated region
        $region37: #{_lambda_.5} parent=31 // pred_check
          %p190 = pneg %p63
        $region38: #{_lambda_.5} parent=31 // pred_check_branch
          %192 = sbr.rel (%p190) target = $region40
        $region39: #{_lambda_.5} parent=31 // pred_region
          %193 = dma.done [#allocation6], 576
        $region40: #{_lambda_.5} parent=31 // pred_fallthru
          _
        // Predicated region
        $region41: #{_lambda_.5} parent=31 // pred_check
          %p194 = pneg %p84
        $region42: #{_lambda_.5} parent=31 // pred_check_branch
          %196 = sbr.rel (%p194) target = $region44
        $region43: #{_lambda_.5} parent=31 // pred_region
          %197 = dma.done [#allocation6], 32
        $region44: #{_lambda_.5} parent=31 // pred_fallthru
          _
        %s198 = sand.u32 %s29, 1
        %s199 = scalar_lea.sflag [#allocation3], %s198
        %s200 = sand.u32 %s29, 1
        %s201 = smul.addr %s200, 128
        %s202 = scalar_lea.vmem [#allocation2], %s201
        %p203 = pneg %p42
        %p204 = pneg %p39
        %p205 = pneg %p63
        %p206 = pneg %p60
        %p207 = pneg %p84
        %p208 = pneg %p81
        %p209 = pneg %p110
        %p210 = pneg %p107
        %s211 = sand.u32 %s97, 1
        %s212 = scalar_lea.sflag [#allocation4], %s211
        %s213 = sand.u32 %s97, 1
        %s214 = smul.addr %s213, 128
        %s215 = scalar_lea.vmem [#allocation8], %s214
        %s216 = smul.u32 32, %s21
        %s217 = smul.u32 32, %s21
        %v219 = vld [vmem:[%s185] sm:$0xf]
        %v220 = vld [vmem:[%s185 + $0x4] sm:$0xf]
        %v221 = vld [vmem:[%s185 + $0x8] sm:$0xf]
        %v222 = vld [vmem:[%s185 + $0xc] sm:$0xf]
        %v223 = vld [vmem:[%s185 + $0x10] sm:$0xf]
        %v224 = vld [vmem:[%s185 + $0x14] sm:$0xf]
        %v225 = vld [vmem:[%s185 + $0x18] sm:$0xf]
        %v226 = vld [vmem:[%s185 + $0x1c] sm:$0xf]
        %v227 = vld [vmem:[%s185 + $0x20] sm:$0xf]
        %v228 = vld [vmem:[%s185 + $0x24] sm:$0xf]
        %v229 = vld [vmem:[%s185 + $0x28] sm:$0xf]
        %v230 = vld [vmem:[%s185 + $0x2c] sm:$0xf]
        %v231 = vld [vmem:[%s185 + $0x30] sm:$0xf]
        %v232 = vld [vmem:[%s185 + $0x34] sm:$0xf]
        %v233 = vld [vmem:[%s185 + $0x38] sm:$0xf]
        %v234 = vld [vmem:[%s185 + $0x3c] sm:$0xf]
        %v235 = vld [vmem:[%s185 + $0x40] sm:$0xf]
        %v236 = vld [vmem:[%s185 + $0x44] sm:$0xf]
        %v237 = vld [vmem:[%s185 + $0x48] sm:$0xf]
        %v238 = vld [vmem:[%s185 + $0x4c] sm:$0xf]
        %v239 = vld [vmem:[%s185 + $0x50] sm:$0xf]
        %v240 = vld [vmem:[%s185 + $0x54] sm:$0xf]
        %v241 = vld [vmem:[%s185 + $0x58] sm:$0xf]
        %v242 = vld [vmem:[%s185 + $0x5c] sm:$0xf]
        %v243 = vld [vmem:[%s185 + $0x60] sm:$0xf]
        %v244 = vld [vmem:[%s185 + $0x64] sm:$0xf]
        %v245 = vld [vmem:[%s185 + $0x68] sm:$0xf]
        %v246 = vld [vmem:[%s185 + $0x6c] sm:$0xf]
        %v247 = vld [vmem:[%s185 + $0x70] sm:$0xf]
        %v248 = vld [vmem:[%s185 + $0x74] sm:$0xf]
        %v249 = vld [vmem:[%s185 + $0x78] sm:$0xf]
        %v250 = vld [vmem:[%s185 + $0x7c] sm:$0xf]
        %v251 = vld [vmem:[#allocation5] sm:$0xf]
        %v252 = vld [vmem:[#allocation5 + $0x4] sm:$0xf]
        %v253 = vld [vmem:[#allocation5 + $0x8] sm:$0xf]
        %v254 = vld [vmem:[#allocation5 + $0xc] sm:$0xf]
        %v255 = vld [vmem:[#allocation5 + $0x10] sm:$0xf]
        %v256 = vld [vmem:[#allocation5 + $0x14] sm:$0xf]
        %v257 = vld [vmem:[#allocation5 + $0x18] sm:$0xf]
        %v258 = vld [vmem:[#allocation5 + $0x1c] sm:$0xf]
        %v259 = vld [vmem:[#allocation5 + $0x20] sm:$0xf]
        %v260 = vld [vmem:[#allocation7] sm:$0x1]
        %v261 = vlaneseq
        %v262 = vshrl.u32 %v261, 7
        %v263 = vsub.s32 0, %v262
        %v264 = vrot.slane %v260, %v263
        %v297 = vunpack.c.l.b16 %v219
        %v298 = vunpack.c.l.b16 %v220
        %v299 = vunpack.c.l.b16 %v221
        %v300 = vunpack.c.l.b16 %v222
        %v301 = vunpack.c.l.b16 %v223
        %v302 = vunpack.c.l.b16 %v224
        %v303 = vunpack.c.l.b16 %v225
        %v304 = vunpack.c.l.b16 %v226
        %v305 = vunpack.c.l.b16 %v227
        %v306 = vunpack.c.l.b16 %v228
        %v307 = vunpack.c.l.b16 %v229
        %v308 = vunpack.c.l.b16 %v230
        %v309 = vunpack.c.l.b16 %v231
        %v310 = vunpack.c.l.b16 %v232
        %v311 = vunpack.c.l.b16 %v233
        %v312 = vunpack.c.l.b16 %v234
        %v313 = vunpack.c.l.b16 %v235
        %v314 = vunpack.c.l.b16 %v236
        %v315 = vunpack.c.l.b16 %v237
        %v316 = vunpack.c.l.b16 %v238
        %v317 = vunpack.c.l.b16 %v239
        %v318 = vunpack.c.l.b16 %v240
        %v319 = vunpack.c.l.b16 %v241
        %v320 = vunpack.c.l.b16 %v242
        %v321 = vunpack.c.l.b16 %v243
        %v322 = vunpack.c.l.b16 %v244
        %v323 = vunpack.c.l.b16 %v245
        %v324 = vunpack.c.l.b16 %v246
        %v325 = vunpack.c.l.b16 %v247
        %v326 = vunpack.c.l.b16 %v248
        %v327 = vunpack.c.l.b16 %v249
        %v328 = vunpack.c.l.b16 %v250
        %v329 = vpack.c.b16 %v298, %v297
        %v330 = vpack.c.b16 %v300, %v299
        %v331 = vpack.c.b16 %v302, %v301
        %v332 = vpack.c.b16 %v304, %v303
        %v333 = vpack.c.b16 %v306, %v305
        %v334 = vpack.c.b16 %v308, %v307
        %v335 = vpack.c.b16 %v310, %v309
        %v336 = vpack.c.b16 %v312, %v311
        %v337 = vpack.c.b16 %v314, %v313
        %v338 = vpack.c.b16 %v316, %v315
        %v339 = vpack.c.b16 %v318, %v317
        %v340 = vpack.c.b16 %v320, %v319
        %v341 = vpack.c.b16 %v322, %v321
        %v342 = vpack.c.b16 %v324, %v323
        %v343 = vpack.c.b16 %v326, %v325
        %v344 = vpack.c.b16 %v328, %v327
        %v354 = vunpack.c.l.b16 %v251
        %v355 = vunpack.c.l.b16 %v252
        %v356 = vunpack.c.l.b16 %v253
        %v357 = vunpack.c.l.b16 %v254
        %v358 = vunpack.c.l.b16 %v255
        %v359 = vunpack.c.l.b16 %v256
        %v360 = vunpack.c.l.b16 %v257
        %v361 = vunpack.c.l.b16 %v258
        %v362 = vunpack.c.l.b16 %v259
        %v363 = vpack.c.b16 %v355, %v354
        %v364 = vpack.c.b16 %v357, %v356
        %v365 = vpack.c.b16 %v359, %v358
        %v366 = vpack.c.b16 %v361, %v360
        %v367 = vpack.c.b16 %v362, %v362
        %vm372 = vcmask 588800
        %v374 = vsel %vm372, %v329, 0
        %v377 = vsel %vm372, %v330, 0
        %v380 = vsel %vm372, %v331, 0
        %v383 = vsel %vm372, %v332, 0
        %v386 = vsel %vm372, %v333, 0
        %v389 = vsel %vm372, %v334, 0
        %v392 = vsel %vm372, %v335, 0
        %v395 = vsel %vm372, %v336, 0
        %v398 = vsel %vm372, %v337, 0
        %v401 = vsel %vm372, %v338, 0
        %v404 = vsel %vm372, %v339, 0
        %v407 = vsel %vm372, %v340, 0
        %v410 = vsel %vm372, %v341, 0
        %v413 = vsel %vm372, %v342, 0
        %v416 = vsel %vm372, %v343, 0
        %v419 = vsel %vm372, %v344, 0
        %vm421 = vcmask 1043456
        %v423 = vsel %vm421, %v367, 0
        %425 = vmatprep.subr.bf16.mxu0 0
        %426 = vmatpush1.bf16.msra.mxu0 %v363
        %427 = vmatprep.subr.bf16.mxu0 0
        %428 = vmatpush1.bf16.msra.mxu0 %v364
        %429 = vmatprep.subr.bf16.mxu0 0
        %430 = vmatpush1.bf16.msra.mxu0 %v365
        %431 = vmatprep.subr.bf16.mxu0 0
        %432 = vmatpush1.bf16.msra.mxu0 %v366
        %433 = vmatprep.subr.bf16.mxu0 0
        %434 = vmatpush1.bf16.msra.mxu0 %v423
        %435 = vmatprep.subr.bf16.mxu0 0
        %436 = vmatpush1.bf16.msra.mxu0 0
        %437 = vmatprep.subr.bf16.mxu0 0
        %438 = vmatpush1.bf16.msra.mxu0 0
        %439 = vmatprep.subr.bf16.mxu0 0
        %440 = vmatpush1.bf16.msra.mxu0 0
        %441 = vmatprep.subr.bf16.mxu0 0
        %442 = vmatpush1.bf16.msra.mxu0 0
        %443 = vmatprep.subr.bf16.mxu0 0
        %444 = vmatpush1.bf16.msra.mxu0 0
        %445 = vmatprep.subr.bf16.mxu0 0
        %446 = vmatpush1.bf16.msra.mxu0 0
        %447 = vmatprep.subr.bf16.mxu0 0
        %448 = vmatpush1.bf16.msra.mxu0 0
        %449 = vmatprep.subr.bf16.mxu0 0
        %450 = vmatpush1.bf16.msra.mxu0 0
        %451 = vmatprep.subr.bf16.mxu0 0
        %452 = vmatpush1.bf16.msra.mxu0 0
        %453 = vmatprep.subr.bf16.mxu0 0
        %454 = vmatpush1.bf16.msra.mxu0 0
        %455 = vmatprep.subr.bf16.mxu0 0
        %456 = vmatpush1.bf16.msra.mxu0 0
        %457 = vmatprep.mubr.bf16.mxu0 0
        %458 = vmatmul.mubr.bf16.gmra.mrb[0].mxu0 %v374
        %v459 = vpop.f32.mrb[0].mxu0
        %v460 = vadd.f32 %v264, %v459
        %v461 = vpop.f32.mrb[0].mxu0
        %v462 = vpop.f32.mrb[0].mxu0
        %v463 = vadd.f32 %v264, %v462
        %v464 = vpop.f32.mrb[0].mxu0
        %465 = vmatprep.mubr.bf16.mxu0 0
        %466 = vmatmul.mubr.bf16.gmra.mrb[0].mxu0 %v377
        %v467 = vpop.f32.mrb[0].mxu0
        %v468 = vadd.f32 %v264, %v467
        %v469 = vpop.f32.mrb[0].mxu0
        %v470 = vpop.f32.mrb[0].mxu0
        %v471 = vadd.f32 %v264, %v470
        %v472 = vpop.f32.mrb[0].mxu0
        %473 = vmatprep.mubr.bf16.mxu0 0
        %474 = vmatmul.mubr.bf16.gmra.mrb[0].mxu0 %v380
        %v475 = vpop.f32.mrb[0].mxu0
        %v476 = vadd.f32 %v264, %v475
        %v477 = vpop.f32.mrb[0].mxu0
        %v478 = vpop.f32.mrb[0].mxu0
        %v479 = vadd.f32 %v264, %v478
        %v480 = vpop.f32.mrb[0].mxu0
        %481 = vmatprep.mubr.bf16.mxu0 0
        %482 = vmatmul.mubr.bf16.gmra.mrb[0].mxu0 %v383
        %v483 = vpop.f32.mrb[0].mxu0
        %v484 = vadd.f32 %v264, %v483
        %v485 = vpop.f32.mrb[0].mxu0
        %v486 = vpop.f32.mrb[0].mxu0
        %v487 = vadd.f32 %v264, %v486
        %v488 = vpop.f32.mrb[0].mxu0
        %489 = vmatprep.mubr.bf16.mxu0 0
        %490 = vmatmul.mubr.bf16.gmra.mrb[0].mxu0 %v386
        %v491 = vpop.f32.mrb[0].mxu0
        %v492 = vadd.f32 %v264, %v491
        %v493 = vpop.f32.mrb[0].mxu0
        %v494 = vpop.f32.mrb[0].mxu0
        %v495 = vadd.f32 %v264, %v494
        %v496 = vpop.f32.mrb[0].mxu0
        %497 = vmatprep.mubr.bf16.mxu0 0
        %498 = vmatmul.mubr.bf16.gmra.mrb[0].mxu0 %v389
        %v499 = vpop.f32.mrb[0].mxu0
        %v500 = vadd.f32 %v264, %v499
        %v501 = vpop.f32.mrb[0].mxu0
        %v502 = vpop.f32.mrb[0].mxu0
        %v503 = vadd.f32 %v264, %v502
        %v504 = vpop.f32.mrb[0].mxu0
        %505 = vmatprep.mubr.bf16.mxu0 0
        %506 = vmatmul.mubr.bf16.gmra.mrb[0].mxu0 %v392
        %v507 = vpop.f32.mrb[0].mxu0
        %v508 = vadd.f32 %v264, %v507
        %v509 = vpop.f32.mrb[0].mxu0
        %v510 = vpop.f32.mrb[0].mxu0
        %v511 = vadd.f32 %v264, %v510
        %v512 = vpop.f32.mrb[0].mxu0
        %513 = vmatprep.mubr.bf16.mxu0 0
        %514 = vmatmul.mubr.bf16.gmra.mrb[0].mxu0 %v395
        %v515 = vpop.f32.mrb[0].mxu0
        %v516 = vadd.f32 %v264, %v515
        %v517 = vpop.f32.mrb[0].mxu0
        %v518 = vpop.f32.mrb[0].mxu0
        %v519 = vadd.f32 %v264, %v518
        %v520 = vpop.f32.mrb[0].mxu0
        %521 = vmatprep.mubr.bf16.mxu0 0
        %522 = vmatmul.mubr.bf16.gmra.mrb[0].mxu0 %v398
        %v523 = vpop.f32.mrb[0].mxu0
        %v524 = vadd.f32 %v264, %v523
        %v525 = vpop.f32.mrb[0].mxu0
        %v526 = vpop.f32.mrb[0].mxu0
        %v527 = vadd.f32 %v264, %v526
        %v528 = vpop.f32.mrb[0].mxu0
        %529 = vmatprep.mubr.bf16.mxu0 0
        %530 = vmatmul.mubr.bf16.gmra.mrb[0].mxu0 %v401
        %v531 = vpop.f32.mrb[0].mxu0
        %v532 = vadd.f32 %v264, %v531
        %v533 = vpop.f32.mrb[0].mxu0
        %v534 = vpop.f32.mrb[0].mxu0
        %v535 = vadd.f32 %v264, %v534
        %v536 = vpop.f32.mrb[0].mxu0
        %537 = vmatprep.mubr.bf16.mxu0 0
        %538 = vmatmul.mubr.bf16.gmra.mrb[0].mxu0 %v404
        %v539 = vpop.f32.mrb[0].mxu0
        %v540 = vadd.f32 %v264, %v539
        %v541 = vpop.f32.mrb[0].mxu0
        %v542 = vpop.f32.mrb[0].mxu0
        %v543 = vadd.f32 %v264, %v542
        %v544 = vpop.f32.mrb[0].mxu0
        %545 = vmatprep.mubr.bf16.mxu0 0
        %546 = vmatmul.mubr.bf16.gmra.mrb[0].mxu0 %v407
        %v547 = vpop.f32.mrb[0].mxu0
        %v548 = vadd.f32 %v264, %v547
        %v549 = vpop.f32.mrb[0].mxu0
        %v550 = vpop.f32.mrb[0].mxu0
        %v551 = vadd.f32 %v264, %v550
        %v552 = vpop.f32.mrb[0].mxu0
        %553 = vmatprep.mubr.bf16.mxu0 0
        %554 = vmatmul.mubr.bf16.gmra.mrb[0].mxu0 %v410
        %v555 = vpop.f32.mrb[0].mxu0
        %v556 = vadd.f32 %v264, %v555
        %v557 = vpop.f32.mrb[0].mxu0
        %v558 = vpop.f32.mrb[0].mxu0
        %v559 = vadd.f32 %v264, %v558
        %v560 = vpop.f32.mrb[0].mxu0
        %561 = vmatprep.mubr.bf16.mxu0 0
        %562 = vmatmul.mubr.bf16.gmra.mrb[0].mxu0 %v413
        %v563 = vpop.f32.mrb[0].mxu0
        %v564 = vadd.f32 %v264, %v563
        %v565 = vpop.f32.mrb[0].mxu0
        %v566 = vpop.f32.mrb[0].mxu0
        %v567 = vadd.f32 %v264, %v566
        %v568 = vpop.f32.mrb[0].mxu0
        %569 = vmatprep.mubr.bf16.mxu0 0
        %570 = vmatmul.mubr.bf16.gmra.mrb[0].mxu0 %v416
        %v571 = vpop.f32.mrb[0].mxu0
        %v572 = vadd.f32 %v264, %v571
        %v573 = vpop.f32.mrb[0].mxu0
        %v574 = vpop.f32.mrb[0].mxu0
        %v575 = vadd.f32 %v264, %v574
        %v576 = vpop.f32.mrb[0].mxu0
        %577 = vmatprep.mubr.bf16.mxu0 0
        %578 = vmatmul.mubr.bf16.gmra.mrb[0].mxu0 %v419
        %v579 = vpop.f32.mrb[0].mxu0
        %v580 = vadd.f32 %v264, %v579
        %v581 = vpop.f32.mrb[0].mxu0
        %v582 = vpop.f32.mrb[0].mxu0
        %v583 = vadd.f32 %v264, %v582
        %v584 = vpop.f32.mrb[0].mxu0
        %585 = vdwg.mxu0
        %vm586 = vcmp.ge.f32.partialorder %v460, 0.0
        %vm587 = vcmp.ge.f32.partialorder %v463, 0.0
        %vm588 = vcmp.ge.f32.partialorder %v468, 0.0
        %vm589 = vcmp.ge.f32.partialorder %v471, 0.0
        %vm590 = vcmp.ge.f32.partialorder %v476, 0.0
        %vm591 = vcmp.ge.f32.partialorder %v479, 0.0
        %vm592 = vcmp.ge.f32.partialorder %v484, 0.0
        %vm593 = vcmp.ge.f32.partialorder %v487, 0.0
        %vm594 = vcmp.ge.f32.partialorder %v492, 0.0
        %vm595 = vcmp.ge.f32.partialorder %v495, 0.0
        %vm596 = vcmp.ge.f32.partialorder %v500, 0.0
        %vm597 = vcmp.ge.f32.partialorder %v503, 0.0
        %vm598 = vcmp.ge.f32.partialorder %v508, 0.0
        %vm599 = vcmp.ge.f32.partialorder %v511, 0.0
        %vm600 = vcmp.ge.f32.partialorder %v516, 0.0
        %vm601 = vcmp.ge.f32.partialorder %v519, 0.0
        %vm602 = vcmp.ge.f32.partialorder %v524, 0.0
        %vm603 = vcmp.ge.f32.partialorder %v527, 0.0
        %vm604 = vcmp.ge.f32.partialorder %v532, 0.0
        %vm605 = vcmp.ge.f32.partialorder %v535, 0.0
        %vm606 = vcmp.ge.f32.partialorder %v540, 0.0
        %vm607 = vcmp.ge.f32.partialorder %v543, 0.0
        %vm608 = vcmp.ge.f32.partialorder %v548, 0.0
        %vm609 = vcmp.ge.f32.partialorder %v551, 0.0
        %vm610 = vcmp.ge.f32.partialorder %v556, 0.0
        %vm611 = vcmp.ge.f32.partialorder %v559, 0.0
        %vm612 = vcmp.ge.f32.partialorder %v564, 0.0
        %vm613 = vcmp.ge.f32.partialorder %v567, 0.0
        %vm614 = vcmp.ge.f32.partialorder %v572, 0.0
        %vm615 = vcmp.ge.f32.partialorder %v575, 0.0
        %vm616 = vcmp.ge.f32.partialorder %v580, 0.0
        %vm617 = vcmp.ge.f32.partialorder %v583, 0.0
        %v618 = vld [vmem:[#allocation7 + $0x1] sm:$0x1]
        %v619 = vlaneseq
        %v620 = vshrl.u32 %v619, 7
        %v621 = vsub.s32 0, %v620
        %v622 = vrot.slane %v618, %v621
        %v623 = vmul.f32 %v622, %v460
        %v624 = vmul.f32 %v622, %v463
        %v625 = vmul.f32 %v622, %v468
        %v626 = vmul.f32 %v622, %v471
        %v627 = vmul.f32 %v622, %v476
        %v628 = vmul.f32 %v622, %v479
        %v629 = vmul.f32 %v622, %v484
        %v630 = vmul.f32 %v622, %v487
        %v631 = vmul.f32 %v622, %v492
        %v632 = vmul.f32 %v622, %v495
        %v633 = vmul.f32 %v622, %v500
        %v634 = vmul.f32 %v622, %v503
        %v635 = vmul.f32 %v622, %v508
        %v636 = vmul.f32 %v622, %v511
        %v637 = vmul.f32 %v622, %v516
        %v638 = vmul.f32 %v622, %v519
        %v639 = vmul.f32 %v622, %v524
        %v640 = vmul.f32 %v622, %v527
        %v641 = vmul.f32 %v622, %v532
        %v642 = vmul.f32 %v622, %v535
        %v643 = vmul.f32 %v622, %v540
        %v644 = vmul.f32 %v622, %v543
        %v645 = vmul.f32 %v622, %v548
        %v646 = vmul.f32 %v622, %v551
        %v647 = vmul.f32 %v622, %v556
        %v648 = vmul.f32 %v622, %v559
        %v649 = vmul.f32 %v622, %v564
        %v650 = vmul.f32 %v622, %v567
        %v651 = vmul.f32 %v622, %v572
        %v652 = vmul.f32 %v622, %v575
        %v653 = vmul.f32 %v622, %v580
        %v654 = vmul.f32 %v622, %v583
        %v655 = vsel %vm586, %v460, %v623
        %v656 = vsel %vm587, %v463, %v624
        %v657 = vsel %vm588, %v468, %v625
        %v658 = vsel %vm589, %v471, %v626
        %v659 = vsel %vm590, %v476, %v627
        %v660 = vsel %vm591, %v479, %v628
        %v661 = vsel %vm592, %v484, %v629
        %v662 = vsel %vm593, %v487, %v630
        %v663 = vsel %vm594, %v492, %v631
        %v664 = vsel %vm595, %v495, %v632
        %v665 = vsel %vm596, %v500, %v633
        %v666 = vsel %vm597, %v503, %v634
        %v667 = vsel %vm598, %v508, %v635
        %v668 = vsel %vm599, %v511, %v636
        %v669 = vsel %vm600, %v516, %v637
        %v670 = vsel %vm601, %v519, %v638
        %v671 = vsel %vm602, %v524, %v639
        %v672 = vsel %vm603, %v527, %v640
        %v673 = vsel %vm604, %v532, %v641
        %v674 = vsel %vm605, %v535, %v642
        %v675 = vsel %vm606, %v540, %v643
        %v676 = vsel %vm607, %v543, %v644
        %v677 = vsel %vm608, %v548, %v645
        %v678 = vsel %vm609, %v551, %v646
        %v679 = vsel %vm610, %v556, %v647
        %v680 = vsel %vm611, %v559, %v648
        %v681 = vsel %vm612, %v564, %v649
        %v682 = vsel %vm613, %v567, %v650
        %v683 = vsel %vm614, %v572, %v651
        %v684 = vsel %vm615, %v575, %v652
        %v685 = vsel %vm616, %v580, %v653
        %v686 = vsel %vm617, %v583, %v654
        %v687 = vpack.c.bf16 %v656, %v655
        %v688 = vpack.c.bf16 %v658, %v657
        %v689 = vpack.c.bf16 %v660, %v659
        %v690 = vpack.c.bf16 %v662, %v661
        %v691 = vpack.c.bf16 %v664, %v663
        %v692 = vpack.c.bf16 %v666, %v665
        %v693 = vpack.c.bf16 %v668, %v667
        %v694 = vpack.c.bf16 %v670, %v669
        %v695 = vpack.c.bf16 %v672, %v671
        %v696 = vpack.c.bf16 %v674, %v673
        %v697 = vpack.c.bf16 %v676, %v675
        %v698 = vpack.c.bf16 %v678, %v677
        %v699 = vpack.c.bf16 %v680, %v679
        %v700 = vpack.c.bf16 %v682, %v681
        %v701 = vpack.c.bf16 %v684, %v683
        %v702 = vpack.c.bf16 %v686, %v685
        %v719 = vunpack.c.l.b16 %v687
        %v720 = vunpack.c.h.b16 %v687
        %v721 = vunpack.c.l.b16 %v688
        %v722 = vunpack.c.h.b16 %v688
        %v723 = vunpack.c.l.b16 %v689
        %v724 = vunpack.c.h.b16 %v689
        %v725 = vunpack.c.l.b16 %v690
        %v726 = vunpack.c.h.b16 %v690
        %v727 = vunpack.c.l.b16 %v691
        %v728 = vunpack.c.h.b16 %v691
        %v729 = vunpack.c.l.b16 %v692
        %v730 = vunpack.c.h.b16 %v692
        %v731 = vunpack.c.l.b16 %v693
        %v732 = vunpack.c.h.b16 %v693
        %v733 = vunpack.c.l.b16 %v694
        %v734 = vunpack.c.h.b16 %v694
        %v735 = vunpack.c.l.b16 %v695
        %v736 = vunpack.c.h.b16 %v695
        %v737 = vunpack.c.l.b16 %v696
        %v738 = vunpack.c.h.b16 %v696
        %v739 = vunpack.c.l.b16 %v697
        %v740 = vunpack.c.h.b16 %v697
        %v741 = vunpack.c.l.b16 %v698
        %v742 = vunpack.c.h.b16 %v698
        %v743 = vunpack.c.l.b16 %v699
        %v744 = vunpack.c.h.b16 %v699
        %v745 = vunpack.c.l.b16 %v700
        %v746 = vunpack.c.h.b16 %v700
        %v747 = vunpack.c.l.b16 %v701
        %v748 = vunpack.c.h.b16 %v701
        %v749 = vunpack.c.l.b16 %v702
        %v750 = vunpack.c.h.b16 %v702
        %v751 = vpack.c.b16 %v719, %v719
        %v752 = vpack.c.b16 %v720, %v720
        %v753 = vpack.c.b16 %v721, %v721
        %v754 = vpack.c.b16 %v722, %v722
        %v755 = vpack.c.b16 %v723, %v723
        %v756 = vpack.c.b16 %v724, %v724
        %v757 = vpack.c.b16 %v725, %v725
        %v758 = vpack.c.b16 %v726, %v726
        %v759 = vpack.c.b16 %v727, %v727
        %v760 = vpack.c.b16 %v728, %v728
        %v761 = vpack.c.b16 %v729, %v729
        %v762 = vpack.c.b16 %v730, %v730
        %v763 = vpack.c.b16 %v731, %v731
        %v764 = vpack.c.b16 %v732, %v732
        %v765 = vpack.c.b16 %v733, %v733
        %v766 = vpack.c.b16 %v734, %v734
        %v767 = vpack.c.b16 %v735, %v735
        %v768 = vpack.c.b16 %v736, %v736
        %v769 = vpack.c.b16 %v737, %v737
        %v770 = vpack.c.b16 %v738, %v738
        %v771 = vpack.c.b16 %v739, %v739
        %v772 = vpack.c.b16 %v740, %v740
        %v773 = vpack.c.b16 %v741, %v741
        %v774 = vpack.c.b16 %v742, %v742
        %v775 = vpack.c.b16 %v743, %v743
        %v776 = vpack.c.b16 %v744, %v744
        %v777 = vpack.c.b16 %v745, %v745
        %v778 = vpack.c.b16 %v746, %v746
        %v779 = vpack.c.b16 %v747, %v747
        %v780 = vpack.c.b16 %v748, %v748
        %v781 = vpack.c.b16 %v749, %v749
        %v782 = vpack.c.b16 %v750, %v750
        %815 = vst [vmem:[%s215] sm:$0xf] %v751
        %816 = vst [vmem:[%s215 + $0x4] sm:$0xf] %v752
        %817 = vst [vmem:[%s215 + $0x8] sm:$0xf] %v753
        %818 = vst [vmem:[%s215 + $0xc] sm:$0xf] %v754
        %819 = vst [vmem:[%s215 + $0x10] sm:$0xf] %v755
        %820 = vst [vmem:[%s215 + $0x14] sm:$0xf] %v756
        %821 = vst [vmem:[%s215 + $0x18] sm:$0xf] %v757
        %822 = vst [vmem:[%s215 + $0x1c] sm:$0xf] %v758
        %823 = vst [vmem:[%s215 + $0x20] sm:$0xf] %v759
        %824 = vst [vmem:[%s215 + $0x24] sm:$0xf] %v760
        %825 = vst [vmem:[%s215 + $0x28] sm:$0xf] %v761
        %826 = vst [vmem:[%s215 + $0x2c] sm:$0xf] %v762
        %827 = vst [vmem:[%s215 + $0x30] sm:$0xf] %v763
        %828 = vst [vmem:[%s215 + $0x34] sm:$0xf] %v764
        %829 = vst [vmem:[%s215 + $0x38] sm:$0xf] %v765
        %830 = vst [vmem:[%s215 + $0x3c] sm:$0xf] %v766
        %831 = vst [vmem:[%s215 + $0x40] sm:$0xf] %v767
        %832 = vst [vmem:[%s215 + $0x44] sm:$0xf] %v768
        %833 = vst [vmem:[%s215 + $0x48] sm:$0xf] %v769
        %834 = vst [vmem:[%s215 + $0x4c] sm:$0xf] %v770
        %835 = vst [vmem:[%s215 + $0x50] sm:$0xf] %v771
        %836 = vst [vmem:[%s215 + $0x54] sm:$0xf] %v772
        %837 = vst [vmem:[%s215 + $0x58] sm:$0xf] %v773
        %838 = vst [vmem:[%s215 + $0x5c] sm:$0xf] %v774
        %839 = vst [vmem:[%s215 + $0x60] sm:$0xf] %v775
        %840 = vst [vmem:[%s215 + $0x64] sm:$0xf] %v776
        %841 = vst [vmem:[%s215 + $0x68] sm:$0xf] %v777
        %842 = vst [vmem:[%s215 + $0x6c] sm:$0xf] %v778
        %843 = vst [vmem:[%s215 + $0x70] sm:$0xf] %v779
        %844 = vst [vmem:[%s215 + $0x74] sm:$0xf] %v780
        %845 = vst [vmem:[%s215 + $0x78] sm:$0xf] %v781
        %846 = vst [vmem:[%s215 + $0x7c] sm:$0xf] %v782
        %s847 = sand.u32 %s97, 1
        %s848 = scalar_lea.sflag [#allocation4], %s847
        %s849 = sand.u32 %s97, 1
        %s850 = smul.addr %s849, 128
        %s851 = scalar_lea.vmem [#allocation8], %s850
        // Predicated region
        $region45: #{_lambda_.5} parent=31 // pred_check
          %p852 = pneg %p107
        $region46: #{_lambda_.5} parent=31 // pred_check_branch
          %854 = sbr.rel (%p852) target = $region48
        $region47: #{_lambda_.5} parent=31 // pred_region
          %s855 = smul.u32 32, %s21
          %s857 = ssub.s32 2048, 2048
          %858 = vsyncadd %s848, %s857
          %s859 = smul.addr %s855, 64
          %s860 = scalar_lea.hbm %s3, %s859
          %s861 = sshll.u32 %s851, 4
          %s862 = int_to_ptr.vmem [resolvable:$true] %s861
          %867 = dma.vmem_to_hbm [thread:$0]  %s862, 2048, %s860, %s848, 64, 64, 4
        $region48: #{_lambda_.5} parent=31 // pred_fallthru
          _
      $region32: #{_lambda_.5} parent=5 // pred_fallthru
        _
      %p868 = scmp.le.s32.totalorder 2, %s16
      // Predicated region
      $region49: #{_lambda_.5} parent=5 // pred_check
        %p869 = pneg %p868
      $region50: #{_lambda_.5} parent=5 // pred_check_branch
        %871 = sbr.rel (%p869) target = $region52
      $region51: #{_lambda_.5} parent=5 // pred_region
        %s872 = ssub.s32 %s16, 2
        // Predicated region
        $region53: #{_lambda_.5} parent=51 // pred_check
          %p873 = pneg %p113
        $region54: #{_lambda_.5} parent=51 // pred_check_branch
          %875 = sbr.rel (%p873) target = $region56
        $region55: #{_lambda_.5} parent=51 // pred_region
          %s876 = sand.u32 %s98, 1
          %s877 = scalar_lea.sflag [#allocation4], %s876
          %s878 = sand.u32 %s98, 1
          %s879 = smul.addr %s878, 128
          %s880 = scalar_lea.vmem [#allocation8], %s879
          %881 = dma.done %s877, 2048
        $region56: #{_lambda_.5} parent=51 // pred_fallthru
          _
      $region52: #{_lambda_.5} parent=5 // pred_fallthru
        _
    $region6: #{_lambda_.5} parent=1 // loop_footer
      %s20 = sadd.s32 1, %s16
    $region7: #{_lambda_.5} parent=1 // loop_footer_branch
      %15 = sbr.rel target = $region3
    $region8: #{_lambda_.5} parent=1 // loop_exit
      _
    %882 = vsyncpa [#allocation3], 1
    %s883 = scalar_lea.sflag [#allocation3], 1
    %884 = vsyncpa %s883, 1
    %885 = vsyncpa [#allocation6], 1
    %886 = vsyncpa [#allocation4], 1
    %s887 = scalar_lea.sflag [#allocation4], 1
    %888 = vsyncpa %s887, 1

// kernel: _lambda_.6
$region0: #{_lambda_.6}
  #allocation0 [shape = 'u32[]', space=smem, size = 0x4, offset = 0x4, fixed_abs, tag = 'smem constant byte address 0x4 - core index']
  #allocation1 [shape = 'u32[144,128]{1,0:T(1,128)}', space=vmem, size = 0x12000, scoped, tag = 'internal scratch']
  %s0 = inlined_call_operand.hbm [shape: bf16[512,288], index: 0, kind: input, shape index: {}]
  %s1 = inlined_call_operand.hbm [shape: bf16[288,128], index: 1, kind: input, shape index: {}]
  %s2 = inlined_call_operand.hbm [shape: f32[2,128], index: 2, kind: input, shape index: {}]
  %s3 = inlined_call_operand.hbm [shape: bf16[512,128], index: 3, kind: input, shape index: {}]
  %s4 = inlined_call_operand.hbm [shape: bf16[512,128], index: 4, kind: output, shape index: {}]
  %s5 = sld [smem:[#allocation0]]
  $region65: #{_lambda_.6} parent=0
    _
  %s7 = ssub.s32 1, %s5
  %s8 = scalar_select 0, %s7, %s5
  $region1: #{_lambda_.6} parent=0
    #allocation2 [shape = 'u8[393216]{0}', space=vmem, size = 0x60000, scoped, tag = 'input window, operand 0']
    #allocation3 [shape = 's32[2]{0}', space=sflag, size = 0x8, scoped, tag = 'scoped memory for _lambda_.6']
    #allocation4 [shape = 's32[2]{0}', space=sflag, size = 0x8, scoped, tag = 'scoped memory for _lambda_.6']
    #allocation5 [shape = 'u8[73728]{0}', space=vmem, size = 0x12000, scoped, tag = 'input window, operand 1, single buffered']
    #allocation6 [shape = 's32[1]{0}', space=sflag, size = 0x4, scoped, tag = 'scoped memory for _lambda_.6']
    #allocation7 [shape = 'u8[1024]{0}', space=vmem, size = 0x400, scoped, tag = 'input window, operand 2, single buffered']
    #allocation8 [shape = 'u8[131072]{0}', space=vmem, size = 0x20000, scoped, tag = 'input window, operand 3']
    #allocation9 [shape = 's32[2]{0}', space=sflag, size = 0x8, scoped, tag = 'scoped memory for _lambda_.6']
    #allocation10 [shape = 'u8[131072]{0}', space=vmem, size = 0x20000, scoped, tag = 'output window, operand 0']
    %9 = vsyncpa [#allocation3], 0
    %s10 = scalar_lea.sflag [#allocation3], 1
    %11 = vsyncpa %s10, 0
    %12 = vsyncpa [#allocation6], 0
    %13 = vsyncpa [#allocation9], 0
    %s14 = scalar_lea.sflag [#allocation9], 1
    %15 = vsyncpa %s14, 0
    %16 = vsyncpa [#allocation4], 0
    %s17 = scalar_lea.sflag [#allocation4], 1
    %18 = vsyncpa %s17, 0
    loop: start=0, step=1, limit=4
    $region2: #{_lambda_.6} parent=1 // loop_pre_header
      _
    $region3: #{_lambda_.6} parent=1 // loop_header
      %s20 = sphi 0, %s24
      %p21 = scmp.ge.s32.totalorder %s20, 4
      %s30 = sphi 0, %s32
      %s33 = sphi 0, %s30
      %s34 = sphi 0, %s33
      %s50 = sphi 0, %s34
      %s54 = sphi 0, %s54
      %s56 = sphi 0, %s54
      %s57 = sphi 0, %s56
      %s71 = sphi 0, %s57
      %s75 = sphi 0, %s75
      %s77 = sphi 0, %s75
      %s78 = sphi 0, %s77
      %s92 = sphi 0, %s78
      %s98 = sphi 0, %s100
      %s101 = sphi 0, %s98
      %s102 = sphi 0, %s101
      %s118 = sphi 0, %s102
      %s124 = sphi 0, %s126
      %s127 = sphi 0, %s124
      %s128 = sphi 0, %s127
      %s144 = sphi 0, %s128
    $region4: #{_lambda_.6} parent=1 // loop_header_branch
      %23 = sbr.rel (%p21) target = $region8
    $region5: #{_lambda_.6} parent=1 // loop_body
      %s25 = ssub.s32 %s20, 1
      %s26 = ssub.s32 %s20, 2
      %s27 = sadd.s32 %s20, 1
      %s28 = ssub.s32 %s20, %s27
      %p29 = scmp.eq.s32.totalorder %s28, 0
      %s31 = sadd.s32 %s30, 1
      %s32 = scalar_select %p29, %s30, %s31
      %p35 = pneg %p29
      %p36 = scmp.eq.s32.totalorder %s20, 1
      %p37 = por %p35, %p36
      %p38 = scmp.ne.s32.totalorder %s30, %s33
      %p39 = scmp.eq.s32.totalorder %s20, 0
      %p40 = por %p38, %p39
      %p41 = scmp.ne.s32.totalorder %s30, %s33
      %p42 = scmp.eq.s32.totalorder %s25, 1
      %p43 = por %p41, %p42
      %p44 = scmp.ne.s32.totalorder %s33, %s34
      %p45 = scmp.eq.s32.totalorder %s25, 0
      %p46 = por %p44, %p45
      %p47 = scmp.ne.s32.totalorder %s33, %s34
      %p48 = scmp.eq.s32.totalorder %s26, 1
      %p49 = por %p47, %p48
      %p51 = scmp.ne.s32.totalorder %s34, %s50
      %p52 = scmp.eq.s32.totalorder %s26, 0
      %p53 = por %p51, %p52
      %s55 = sadd.s32 %s54, 1
      %p58 = scmp.eq.s32.totalorder %s20, 1
      %p59 = scmp.ne.s32.totalorder %s54, %s56
      %p60 = scmp.eq.s32.totalorder %s20, 0
      %p61 = por %p59, %p60
      %p62 = scmp.ne.s32.totalorder %s54, %s56
      %p63 = scmp.eq.s32.totalorder %s25, 1
      %p64 = por %p62, %p63
      %p65 = scmp.ne.s32.totalorder %s56, %s57
      %p66 = scmp.eq.s32.totalorder %s25, 0
      %p67 = por %p65, %p66
      %p68 = scmp.ne.s32.totalorder %s56, %s57
      %p69 = scmp.eq.s32.totalorder %s26, 1
      %p70 = por %p68, %p69
      %p72 = scmp.ne.s32.totalorder %s57, %s71
      %p73 = scmp.eq.s32.totalorder %s26, 0
      %p74 = por %p72, %p73
      %s76 = sadd.s32 %s75, 1
      %p79 = scmp.eq.s32.totalorder %s20, 1
      %p80 = scmp.ne.s32.totalorder %s75, %s77
      %p81 = scmp.eq.s32.totalorder %s20, 0
      %p82 = por %p80, %p81
      %p83 = scmp.ne.s32.totalorder %s75, %s77
      %p84 = scmp.eq.s32.totalorder %s25, 1
      %p85 = por %p83, %p84
      %p86 = scmp.ne.s32.totalorder %s77, %s78
      %p87 = scmp.eq.s32.totalorder %s25, 0
      %p88 = por %p86, %p87
      %p89 = scmp.ne.s32.totalorder %s77, %s78
      %p90 = scmp.eq.s32.totalorder %s26, 1
      %p91 = por %p89, %p90
      %p93 = scmp.ne.s32.totalorder %s78, %s92
      %p94 = scmp.eq.s32.totalorder %s26, 0
      %p95 = por %p93, %p94
      %s96 = ssub.s32 %s20, %s27
      %p97 = scmp.eq.s32.totalorder %s96, 0
      %s99 = sadd.s32 %s98, 1
      %s100 = scalar_select %p97, %s98, %s99
      %p103 = pneg %p97
      %p104 = scmp.eq.s32.totalorder %s20, 1
      %p105 = por %p103, %p104
      %p106 = scmp.ne.s32.totalorder %s98, %s101
      %p107 = scmp.eq.s32.totalorder %s20, 0
      %p108 = por %p106, %p107
      %p109 = scmp.ne.s32.totalorder %s98, %s101
      %p110 = scmp.eq.s32.totalorder %s25, 1
      %p111 = por %p109, %p110
      %p112 = scmp.ne.s32.totalorder %s101, %s102
      %p113 = scmp.eq.s32.totalorder %s25, 0
      %p114 = por %p112, %p113
      %p115 = scmp.ne.s32.totalorder %s101, %s102
      %p116 = scmp.eq.s32.totalorder %s26, 1
      %p117 = por %p115, %p116
      %p119 = scmp.ne.s32.totalorder %s102, %s118
      %p120 = scmp.eq.s32.totalorder %s26, 0
      %p121 = por %p119, %p120
      %s122 = ssub.s32 %s20, %s27
      %p123 = scmp.eq.s32.totalorder %s122, 0
      %s125 = sadd.s32 %s124, 1
      %s126 = scalar_select %p123, %s124, %s125
      %p129 = pneg %p123
      %p130 = scmp.eq.s32.totalorder %s20, 1
      %p131 = por %p129, %p130
      %p132 = scmp.ne.s32.totalorder %s124, %s127
      %p133 = scmp.eq.s32.totalorder %s20, 0
      %p134 = por %p132, %p133
      %p135 = scmp.ne.s32.totalorder %s124, %s127
      %p136 = scmp.eq.s32.totalorder %s25, 1
      %p137 = por %p135, %p136
      %p138 = scmp.ne.s32.totalorder %s127, %s128
      %p139 = scmp.eq.s32.totalorder %s25, 0
      %p140 = por %p138, %p139
      %p141 = scmp.ne.s32.totalorder %s127, %s128
      %p142 = scmp.eq.s32.totalorder %s26, 1
      %p143 = por %p141, %p142
      %p145 = scmp.ne.s32.totalorder %s128, %s144
      %p146 = scmp.eq.s32.totalorder %s26, 0
      %p147 = por %p145, %p146
      %p148 = scmp.le.s32.totalorder 1, %s20
      %p149 = scmp.lt.s32.totalorder %s20, 3
      %p150 = pnand %p148, %p149
      %p151 = pneg %p150
      // Predicated region
      $region9: #{_lambda_.6} parent=5 // pred_check
        _
      $region10: #{_lambda_.6} parent=5 // pred_check_branch
        %153 = sbr.rel (%p150) target = $region12
      $region11: #{_lambda_.6} parent=5 // pred_region
        %s154 = ssub.s32 %s20, 1
        // Predicated region
        $region13: #{_lambda_.6} parent=11 // pred_check
          %p155 = pneg %p67
        $region14: #{_lambda_.6} parent=11 // pred_check_branch
          %157 = sbr.rel (%p155) target = $region16
        $region15: #{_lambda_.6} parent=11 // pred_region
          %s159 = ssub.s32 2304, 2304
          %160 = vsyncadd [#allocation6], %s159
          %s161 = sshll.u32 [#allocation5], 4
          %s162 = int_to_ptr.vmem [resolvable:$true] %s161
          %167 = dma.hbm_to_vmem [thread:$0]  %s1, 2304, %s162, [#allocation6], 64, 64, 4
        $region16: #{_lambda_.6} parent=11 // pred_fallthru
          _
        // Predicated region
        $region17: #{_lambda_.6} parent=11 // pred_check
          %p168 = pneg %p88
        $region18: #{_lambda_.6} parent=11 // pred_check_branch
          %170 = sbr.rel (%p168) target = $region20
        $region19: #{_lambda_.6} parent=11 // pred_region
          %s172 = ssub.s32 32, 32
          %173 = vsyncadd [#allocation6], %s172
          %s175 = sshll.u32 [#allocation7], 4
          %s176 = int_to_ptr.vmem [resolvable:$true] %s175
          %178 = dma.hbm_to_vmem [thread:$0]  %s2, 32, %s176, [#allocation6]
        $region20: #{_lambda_.6} parent=11 // pred_fallthru
          _
      $region12: #{_lambda_.6} parent=5 // pred_fallthru
        _
      %p179 = scmp.lt.s32.totalorder %s20, 2
      // Predicated region
      $region21: #{_lambda_.6} parent=5 // pred_check
        %p180 = pneg %p179
      $region22: #{_lambda_.6} parent=5 // pred_check_branch
        %182 = sbr.rel (%p180) target = $region24
      $region23: #{_lambda_.6} parent=5 // pred_region
        // Predicated region
        $region25: #{_lambda_.6} parent=23 // pred_check
          %p183 = pneg %p40
        $region26: #{_lambda_.6} parent=23 // pred_check_branch
          %185 = sbr.rel (%p183) target = $region28
        $region27: #{_lambda_.6} parent=23 // pred_region
          %s186 = sand.u32 %s30, 1
          %s187 = scalar_lea.sflag [#allocation3], %s186
          %s188 = sand.u32 %s30, 1
          %s189 = smul.addr %s188, 384
          %s190 = scalar_lea.vmem [#allocation2], %s189
          %s191 = smul.u32 32, %s20
          %s193 = ssub.s32 6144, 6144
          %194 = vsyncadd %s187, %s193
          %s195 = smul.addr %s191, 3
          %s196 = smul.addr %s195, 64
          %s197 = scalar_lea.hbm %s0, %s196
          %s198 = sshll.u32 %s190, 4
          %s199 = int_to_ptr.vmem [resolvable:$true] %s198
          %204 = dma.hbm_to_vmem [thread:$0]  %s197, 6144, %s199, %s187, 192, 192, 12
        $region28: #{_lambda_.6} parent=23 // pred_fallthru
          _
        // Predicated region
        $region29: #{_lambda_.6} parent=23 // pred_check
          %p205 = pneg %p108
        $region30: #{_lambda_.6} parent=23 // pred_check_branch
          %207 = sbr.rel (%p205) target = $region32
        $region31: #{_lambda_.6} parent=23 // pred_region
          %s208 = sand.u32 %s98, 1
          %s209 = scalar_lea.sflag [#allocation9], %s208
          %s210 = sand.u32 %s98, 1
          %s211 = smul.addr %s210, 128
          %s212 = scalar_lea.vmem [#allocation8], %s211
          %s213 = smul.u32 32, %s20
          %s215 = ssub.s32 2048, 2048
          %216 = vsyncadd %s209, %s215
          %s217 = smul.addr %s213, 64
          %s218 = scalar_lea.hbm %s3, %s217
          %s219 = sshll.u32 %s212, 4
          %s220 = int_to_ptr.vmem [resolvable:$true] %s219
          %225 = dma.hbm_to_vmem [thread:$0]  %s218, 2048, %s220, %s209, 64, 64, 4
        $region32: #{_lambda_.6} parent=23 // pred_fallthru
          _
      $region24: #{_lambda_.6} parent=5 // pred_fallthru
        _
      %p226 = scmp.le.s32.totalorder 1, %s20
      %p227 = scmp.lt.s32.totalorder %s20, 3
      %p228 = pnand %p226, %p227
      %p229 = pneg %p228
      // Predicated region
      $region33: #{_lambda_.6} parent=5 // pred_check
        _
      $region34: #{_lambda_.6} parent=5 // pred_check_branch
        %231 = sbr.rel (%p228) target = $region36
      $region35: #{_lambda_.6} parent=5 // pred_region
        %s232 = ssub.s32 %s20, 1
        %s233 = sand.u32 %s33, 1
        %s234 = scalar_lea.sflag [#allocation3], %s233
        %s235 = sand.u32 %s33, 1
        %s236 = smul.addr %s235, 384
        %s237 = scalar_lea.vmem [#allocation2], %s236
        // Predicated region
        $region37: #{_lambda_.6} parent=35 // pred_check
          %p238 = pneg %p46
        $region38: #{_lambda_.6} parent=35 // pred_check_branch
          %240 = sbr.rel (%p238) target = $region40
        $region39: #{_lambda_.6} parent=35 // pred_region
          %241 = dma.done %s234, 6144
        $region40: #{_lambda_.6} parent=35 // pred_fallthru
          _
        // Predicated region
        $region41: #{_lambda_.6} parent=35 // pred_check
          %p242 = pneg %p67
        $region42: #{_lambda_.6} parent=35 // pred_check_branch
          %244 = sbr.rel (%p242) target = $region44
        $region43: #{_lambda_.6} parent=35 // pred_region
          %245 = dma.done [#allocation6], 2304
        $region44: #{_lambda_.6} parent=35 // pred_fallthru
          _
        // Predicated region
        $region45: #{_lambda_.6} parent=35 // pred_check
          %p246 = pneg %p88
        $region46: #{_lambda_.6} parent=35 // pred_check_branch
          %248 = sbr.rel (%p246) target = $region48
        $region47: #{_lambda_.6} parent=35 // pred_region
          %249 = dma.done [#allocation6], 32
        $region48: #{_lambda_.6} parent=35 // pred_fallthru
          _
        %s250 = sand.u32 %s101, 1
        %s251 = scalar_lea.sflag [#allocation9], %s250
        %s252 = sand.u32 %s101, 1
        %s253 = smul.addr %s252, 128
        %s254 = scalar_lea.vmem [#allocation8], %s253
        // Predicated region
        $region49: #{_lambda_.6} parent=35 // pred_check
          %p255 = pneg %p114
        $region50: #{_lambda_.6} parent=35 // pred_check_branch
          %257 = sbr.rel (%p255) target = $region52
        $region51: #{_lambda_.6} parent=35 // pred_region
          %258 = dma.done %s251, 2048
        $region52: #{_lambda_.6} parent=35 // pred_fallthru
          _
        %s259 = sand.u32 %s33, 1
        %s260 = scalar_lea.sflag [#allocation3], %s259
        %s261 = sand.u32 %s33, 1
        %s262 = smul.addr %s261, 384
        %s263 = scalar_lea.vmem [#allocation2], %s262
        %p264 = pneg %p46
        %p265 = pneg %p43
        %p266 = pneg %p67
        %p267 = pneg %p64
        %p268 = pneg %p88
        %p269 = pneg %p85
        %s270 = sand.u32 %s101, 1
        %s271 = scalar_lea.sflag [#allocation9], %s270
        %s272 = sand.u32 %s101, 1
        %s273 = smul.addr %s272, 128
        %s274 = scalar_lea.vmem [#allocation8], %s273
        %p275 = pneg %p114
        %p276 = pneg %p111
        %p277 = pneg %p140
        %p278 = pneg %p137
        %s279 = sand.u32 %s127, 1
        %s280 = scalar_lea.sflag [#allocation4], %s279
        %s281 = sand.u32 %s127, 1
        %s282 = smul.addr %s281, 128
        %s283 = scalar_lea.vmem [#allocation10], %s282
        %s284 = smul.u32 32, %s25
        %s285 = smul.u32 32, %s25
        %s286 = smul.u32 32, %s25
        %v288 = vld [vmem:[%s237] sm:$0xff]
        %v289 = vld [vmem:[%s237 + $0x8] sm:$0xf]
        %v290 = vld [vmem:[%s237 + $0xc] sm:$0xff]
        %v291 = vld [vmem:[%s237 + $0x14] sm:$0xf]
        %v292 = vld [vmem:[%s237 + $0x18] sm:$0xff]
        %v293 = vld [vmem:[%s237 + $0x20] sm:$0xf]
        %v294 = vld [vmem:[%s237 + $0x24] sm:$0xff]
        %v295 = vld [vmem:[%s237 + $0x2c] sm:$0xf]
        %v296 = vld [vmem:[%s237 + $0x30] sm:$0xff]
        %v297 = vld [vmem:[%s237 + $0x38] sm:$0xf]
        %v298 = vld [vmem:[%s237 + $0x3c] sm:$0xff]
        %v299 = vld [vmem:[%s237 + $0x44] sm:$0xf]
        %v300 = vld [vmem:[%s237 + $0x48] sm:$0xff]
        %v301 = vld [vmem:[%s237 + $0x50] sm:$0xf]
        %v302 = vld [vmem:[%s237 + $0x54] sm:$0xff]
        %v303 = vld [vmem:[%s237 + $0x5c] sm:$0xf]
        %v304 = vld [vmem:[%s237 + $0x60] sm:$0xff]
        %v305 = vld [vmem:[%s237 + $0x68] sm:$0xf]
        %v306 = vld [vmem:[%s237 + $0x6c] sm:$0xff]
        %v307 = vld [vmem:[%s237 + $0x74] sm:$0xf]
        %v308 = vld [vmem:[%s237 + $0x78] sm:$0xff]
        %v309 = vld [vmem:[%s237 + $0x80] sm:$0xf]
        %v310 = vld [vmem:[%s237 + $0x84] sm:$0xff]
        %v311 = vld [vmem:[%s237 + $0x8c] sm:$0xf]
        %v312 = vld [vmem:[%s237 + $0x90] sm:$0xff]
        %v313 = vld [vmem:[%s237 + $0x98] sm:$0xf]
        %v314 = vld [vmem:[%s237 + $0x9c] sm:$0xff]
        %v315 = vld [vmem:[%s237 + $0xa4] sm:$0xf]
        %v316 = vld [vmem:[%s237 + $0xa8] sm:$0xff]
        %v317 = vld [vmem:[%s237 + $0xb0] sm:$0xf]
        %v318 = vld [vmem:[%s237 + $0xb4] sm:$0xff]
        %v319 = vld [vmem:[%s237 + $0xbc] sm:$0xf]
        %v320 = vld [vmem:[%s237 + $0xc0] sm:$0xff]
        %v321 = vld [vmem:[%s237 + $0xc8] sm:$0xf]
        %v322 = vld [vmem:[%s237 + $0xcc] sm:$0xff]
        %v323 = vld [vmem:[%s237 + $0xd4] sm:$0xf]
        %v324 = vld [vmem:[%s237 + $0xd8] sm:$0xff]
        %v325 = vld [vmem:[%s237 + $0xe0] sm:$0xf]
        %v326 = vld [vmem:[%s237 + $0xe4] sm:$0xff]
        %v327 = vld [vmem:[%s237 + $0xec] sm:$0xf]
        %v328 = vld [vmem:[%s237 + $0xf0] sm:$0xff]
        %v329 = vld [vmem:[%s237 + $0xf8] sm:$0xf]
        %v330 = vld [vmem:[%s237 + $0xfc] sm:$0xff]
        %v331 = vld [vmem:[%s237 + $0x104] sm:$0xf]
        %v332 = vld [vmem:[%s237 + $0x108] sm:$0xff]
        %v333 = vld [vmem:[%s237 + $0x110] sm:$0xf]
        %v334 = vld [vmem:[%s237 + $0x114] sm:$0xff]
        %v335 = vld [vmem:[%s237 + $0x11c] sm:$0xf]
        %v336 = vld [vmem:[%s237 + $0x120] sm:$0xff]
        %v337 = vld [vmem:[%s237 + $0x128] sm:$0xf]
        %v338 = vld [vmem:[%s237 + $0x12c] sm:$0xff]
        %v339 = vld [vmem:[%s237 + $0x134] sm:$0xf]
        %v340 = vld [vmem:[%s237 + $0x138] sm:$0xff]
        %v341 = vld [vmem:[%s237 + $0x140] sm:$0xf]
        %v342 = vld [vmem:[%s237 + $0x144] sm:$0xff]
        %v343 = vld [vmem:[%s237 + $0x14c] sm:$0xf]
        %v344 = vld [vmem:[%s237 + $0x150] sm:$0xff]
        %v345 = vld [vmem:[%s237 + $0x158] sm:$0xf]
        %v346 = vld [vmem:[%s237 + $0x15c] sm:$0xff]
        %v347 = vld [vmem:[%s237 + $0x164] sm:$0xf]
        %v348 = vld [vmem:[%s237 + $0x168] sm:$0xff]
        %v349 = vld [vmem:[%s237 + $0x170] sm:$0xf]
        %v350 = vld [vmem:[%s237 + $0x174] sm:$0xff]
        %v351 = vld [vmem:[%s237 + $0x17c] sm:$0xf]
        %v352 = vld [vmem:[#allocation5] sm:$0xf]
        %v353 = vld [vmem:[#allocation5 + $0x4] sm:$0xf]
        %v354 = vld [vmem:[#allocation5 + $0x8] sm:$0xf]
        %v355 = vld [vmem:[#allocation5 + $0xc] sm:$0xf]
        %v356 = vld [vmem:[#allocation5 + $0x10] sm:$0xf]
        %v357 = vld [vmem:[#allocation5 + $0x14] sm:$0xf]
        %v358 = vld [vmem:[#allocation5 + $0x18] sm:$0xf]
        %v359 = vld [vmem:[#allocation5 + $0x1c] sm:$0xf]
        %v360 = vld [vmem:[#allocation5 + $0x20] sm:$0xf]
        %v361 = vld [vmem:[#allocation5 + $0x24] sm:$0xf]
        %v362 = vld [vmem:[#allocation5 + $0x28] sm:$0xf]
        %v363 = vld [vmem:[#allocation5 + $0x2c] sm:$0xf]
        %v364 = vld [vmem:[#allocation5 + $0x30] sm:$0xf]
        %v365 = vld [vmem:[#allocation5 + $0x34] sm:$0xf]
        %v366 = vld [vmem:[#allocation5 + $0x38] sm:$0xf]
        %v367 = vld [vmem:[#allocation5 + $0x3c] sm:$0xf]
        %v368 = vld [vmem:[#allocation5 + $0x40] sm:$0xf]
        %v369 = vld [vmem:[#allocation5 + $0x44] sm:$0xf]
        %v370 = vld [vmem:[#allocation5 + $0x48] sm:$0xf]
        %v371 = vld [vmem:[#allocation5 + $0x4c] sm:$0xf]
        %v372 = vld [vmem:[#allocation5 + $0x50] sm:$0xf]
        %v373 = vld [vmem:[#allocation5 + $0x54] sm:$0xf]
        %v374 = vld [vmem:[#allocation5 + $0x58] sm:$0xf]
        %v375 = vld [vmem:[#allocation5 + $0x5c] sm:$0xf]
        %v376 = vld [vmem:[#allocation5 + $0x60] sm:$0xf]
        %v377 = vld [vmem:[#allocation5 + $0x64] sm:$0xf]
        %v378 = vld [vmem:[#allocation5 + $0x68] sm:$0xf]
        %v379 = vld [vmem:[#allocation5 + $0x6c] sm:$0xf]
        %v380 = vld [vmem:[#allocation5 + $0x70] sm:$0xf]
        %v381 = vld [vmem:[#allocation5 + $0x74] sm:$0xf]
        %v382 = vld [vmem:[#allocation5 + $0x78] sm:$0xf]
        %v383 = vld [vmem:[#allocation5 + $0x7c] sm:$0xf]
        %v384 = vld [vmem:[#allocation5 + $0x80] sm:$0xf]
        %v385 = vld [vmem:[#allocation5 + $0x84] sm:$0xf]
        %v386 = vld [vmem:[#allocation5 + $0x88] sm:$0xf]
        %v387 = vld [vmem:[#allocation5 + $0x8c] sm:$0xf]
        %v388 = vld [vmem:[#allocation7] sm:$0x1]
        %v389 = vlaneseq
        %v390 = vshrl.u32 %v389, 7
        %v391 = vsub.s32 0, %v390
        %v392 = vrot.slane %v388, %v391
        %v457 = vunpack.c.l.b16 %v288
        %v458 = vunpack.c.h.b16 %v288
        %v459 = vunpack.c.l.b16 %v289
        %v460 = vunpack.c.l.b16 %v290
        %v461 = vunpack.c.h.b16 %v290
        %v462 = vunpack.c.l.b16 %v291
        %v463 = vunpack.c.l.b16 %v292
        %v464 = vunpack.c.h.b16 %v292
        %v465 = vunpack.c.l.b16 %v293
        %v466 = vunpack.c.l.b16 %v294
        %v467 = vunpack.c.h.b16 %v294
        %v468 = vunpack.c.l.b16 %v295
        %v469 = vunpack.c.l.b16 %v296
        %v470 = vunpack.c.h.b16 %v296
        %v471 = vunpack.c.l.b16 %v297
        %v472 = vunpack.c.l.b16 %v298
        %v473 = vunpack.c.h.b16 %v298
        %v474 = vunpack.c.l.b16 %v299
        %v475 = vunpack.c.l.b16 %v300
        %v476 = vunpack.c.h.b16 %v300
        %v477 = vunpack.c.l.b16 %v301
        %v478 = vunpack.c.l.b16 %v302
        %v479 = vunpack.c.h.b16 %v302
        %v480 = vunpack.c.l.b16 %v303
        %v481 = vunpack.c.l.b16 %v304
        %v482 = vunpack.c.h.b16 %v304
        %v483 = vunpack.c.l.b16 %v305
        %v484 = vunpack.c.l.b16 %v306
        %v485 = vunpack.c.h.b16 %v306
        %v486 = vunpack.c.l.b16 %v307
        %v487 = vunpack.c.l.b16 %v308
        %v488 = vunpack.c.h.b16 %v308
        %v489 = vunpack.c.l.b16 %v309
        %v490 = vunpack.c.l.b16 %v310
        %v491 = vunpack.c.h.b16 %v310
        %v492 = vunpack.c.l.b16 %v311
        %v493 = vunpack.c.l.b16 %v312
        %v494 = vunpack.c.h.b16 %v312
        %v495 = vunpack.c.l.b16 %v313
        %v496 = vunpack.c.l.b16 %v314
        %v497 = vunpack.c.h.b16 %v314
        %v498 = vunpack.c.l.b16 %v315
        %v499 = vunpack.c.l.b16 %v316
        %v500 = vunpack.c.h.b16 %v316
        %v501 = vunpack.c.l.b16 %v317
        %v502 = vunpack.c.l.b16 %v318
        %v503 = vunpack.c.h.b16 %v318
        %v504 = vunpack.c.l.b16 %v319
        %v505 = vunpack.c.l.b16 %v320
        %v506 = vunpack.c.h.b16 %v320
        %v507 = vunpack.c.l.b16 %v321
        %v508 = vunpack.c.l.b16 %v322
        %v509 = vunpack.c.h.b16 %v322
        %v510 = vunpack.c.l.b16 %v323
        %v511 = vunpack.c.l.b16 %v324
        %v512 = vunpack.c.h.b16 %v324
        %v513 = vunpack.c.l.b16 %v325
        %v514 = vunpack.c.l.b16 %v326
        %v515 = vunpack.c.h.b16 %v326
        %v516 = vunpack.c.l.b16 %v327
        %v517 = vunpack.c.l.b16 %v328
        %v518 = vunpack.c.h.b16 %v328
        %v519 = vunpack.c.l.b16 %v329
        %v520 = vunpack.c.l.b16 %v330
        %v521 = vunpack.c.h.b16 %v330
        %v522 = vunpack.c.l.b16 %v331
        %v523 = vunpack.c.l.b16 %v332
        %v524 = vunpack.c.h.b16 %v332
        %v525 = vunpack.c.l.b16 %v333
        %v526 = vunpack.c.l.b16 %v334
        %v527 = vunpack.c.h.b16 %v334
        %v528 = vunpack.c.l.b16 %v335
        %v529 = vunpack.c.l.b16 %v336
        %v530 = vunpack.c.h.b16 %v336
        %v531 = vunpack.c.l.b16 %v337
        %v532 = vunpack.c.l.b16 %v338
        %v533 = vunpack.c.h.b16 %v338
        %v534 = vunpack.c.l.b16 %v339
        %v535 = vunpack.c.l.b16 %v340
        %v536 = vunpack.c.h.b16 %v340
        %v537 = vunpack.c.l.b16 %v341
        %v538 = vunpack.c.l.b16 %v342
        %v539 = vunpack.c.h.b16 %v342
        %v540 = vunpack.c.l.b16 %v343
        %v541 = vunpack.c.l.b16 %v344
        %v542 = vunpack.c.h.b16 %v344
        %v543 = vunpack.c.l.b16 %v345
        %v544 = vunpack.c.l.b16 %v346
        %v545 = vunpack.c.h.b16 %v346
        %v546 = vunpack.c.l.b16 %v347
        %v547 = vunpack.c.l.b16 %v348
        %v548 = vunpack.c.h.b16 %v348
        %v549 = vunpack.c.l.b16 %v349
        %v550 = vunpack.c.l.b16 %v350
        %v551 = vunpack.c.h.b16 %v350
        %v552 = vunpack.c.l.b16 %v351
        %v553 = vpack.c.b16 %v460, %v457
        %v554 = vpack.c.b16 %v461, %v458
        %v555 = vpack.c.b16 %v462, %v459
        %v556 = vpack.c.b16 %v466, %v463
        %v557 = vpack.c.b16 %v467, %v464
        %v558 = vpack.c.b16 %v468, %v465
        %v559 = vpack.c.b16 %v472, %v469
        %v560 = vpack.c.b16 %v473, %v470
        %v561 = vpack.c.b16 %v474, %v471
        %v562 = vpack.c.b16 %v478, %v475
        %v563 = vpack.c.b16 %v479, %v476
        %v564 = vpack.c.b16 %v480, %v477
        %v565 = vpack.c.b16 %v484, %v481
        %v566 = vpack.c.b16 %v485, %v482
        %v567 = vpack.c.b16 %v486, %v483
        %v568 = vpack.c.b16 %v490, %v487
        %v569 = vpack.c.b16 %v491, %v488
        %v570 = vpack.c.b16 %v492, %v489
        %v571 = vpack.c.b16 %v496, %v493
        %v572 = vpack.c.b16 %v497, %v494
        %v573 = vpack.c.b16 %v498, %v495
        %v574 = vpack.c.b16 %v502, %v499
        %v575 = vpack.c.b16 %v503, %v500
        %v576 = vpack.c.b16 %v504, %v501
        %v577 = vpack.c.b16 %v508, %v505
        %v578 = vpack.c.b16 %v509, %v506
        %v579 = vpack.c.b16 %v510, %v507
        %v580 = vpack.c.b16 %v514, %v511
        %v581 = vpack.c.b16 %v515, %v512
        %v582 = vpack.c.b16 %v516, %v513
        %v583 = vpack.c.b16 %v520, %v517
        %v584 = vpack.c.b16 %v521, %v518
        %v585 = vpack.c.b16 %v522, %v519
        %v586 = vpack.c.b16 %v526, %v523
        %v587 = vpack.c.b16 %v527, %v524
        %v588 = vpack.c.b16 %v528, %v525
        %v589 = vpack.c.b16 %v532, %v529
        %v590 = vpack.c.b16 %v533, %v530
        %v591 = vpack.c.b16 %v534, %v531
        %v592 = vpack.c.b16 %v538, %v535
        %v593 = vpack.c.b16 %v539, %v536
        %v594 = vpack.c.b16 %v540, %v537
        %v595 = vpack.c.b16 %v544, %v541
        %v596 = vpack.c.b16 %v545, %v542
        %v597 = vpack.c.b16 %v546, %v543
        %v598 = vpack.c.b16 %v550, %v547
        %v599 = vpack.c.b16 %v551, %v548
        %v600 = vpack.c.b16 %v552, %v549
        %v669 = vunpack.c.l.b16 %v352
        %v670 = vunpack.c.l.b16 %v353
        %v671 = vunpack.c.l.b16 %v354
        %v672 = vunpack.c.l.b16 %v355
        %v673 = vunpack.c.l.b16 %v356
        %v674 = vunpack.c.l.b16 %v357
        %v675 = vunpack.c.l.b16 %v358
        %v676 = vunpack.c.l.b16 %v359
        %v677 = vunpack.c.l.b16 %v360
        %v678 = vunpack.c.l.b16 %v361
        %v679 = vunpack.c.l.b16 %v362
        %v680 = vunpack.c.l.b16 %v363
        %v681 = vunpack.c.l.b16 %v364
        %v682 = vunpack.c.l.b16 %v365
        %v683 = vunpack.c.l.b16 %v366
        %v684 = vunpack.c.l.b16 %v367
        %v685 = vunpack.c.l.b16 %v368
        %v686 = vunpack.c.l.b16 %v369
        %v687 = vunpack.c.l.b16 %v370
        %v688 = vunpack.c.l.b16 %v371
        %v689 = vunpack.c.l.b16 %v372
        %v690 = vunpack.c.l.b16 %v373
        %v691 = vunpack.c.l.b16 %v374
        %v692 = vunpack.c.l.b16 %v375
        %v693 = vunpack.c.l.b16 %v376
        %v694 = vunpack.c.l.b16 %v377
        %v695 = vunpack.c.l.b16 %v378
        %v696 = vunpack.c.l.b16 %v379
        %v697 = vunpack.c.l.b16 %v380
        %v698 = vunpack.c.l.b16 %v381
        %v699 = vunpack.c.l.b16 %v382
        %v700 = vunpack.c.l.b16 %v383
        %v701 = vunpack.c.l.b16 %v384
        %v702 = vunpack.c.l.b16 %v385
        %v703 = vunpack.c.l.b16 %v386
        %v704 = vunpack.c.l.b16 %v387
        %v705 = vpack.c.b16 %v670, %v669
        %v706 = vpack.c.b16 %v672, %v671
        %v707 = vpack.c.b16 %v674, %v673
        %v708 = vpack.c.b16 %v676, %v675
        %v709 = vpack.c.b16 %v678, %v677
        %v710 = vpack.c.b16 %v680, %v679
        %v711 = vpack.c.b16 %v682, %v681
        %v712 = vpack.c.b16 %v684, %v683
        %v713 = vpack.c.b16 %v686, %v685
        %v714 = vpack.c.b16 %v688, %v687
        %v715 = vpack.c.b16 %v690, %v689
        %v716 = vpack.c.b16 %v692, %v691
        %v717 = vpack.c.b16 %v694, %v693
        %v718 = vpack.c.b16 %v696, %v695
        %v719 = vpack.c.b16 %v698, %v697
        %v720 = vpack.c.b16 %v700, %v699
        %v721 = vpack.c.b16 %v702, %v701
        %v722 = vpack.c.b16 %v704, %v703
        %vm741 = vcmask 261120
        %v743 = vsel %vm741, %v555, 0
        %v746 = vsel %vm741, %v558, 0
        %v749 = vsel %vm741, %v561, 0
        %v752 = vsel %vm741, %v564, 0
        %v755 = vsel %vm741, %v567, 0
        %v758 = vsel %vm741, %v570, 0
        %v761 = vsel %vm741, %v573, 0
        %v764 = vsel %vm741, %v576, 0
        %v767 = vsel %vm741, %v579, 0
        %v770 = vsel %vm741, %v582, 0
        %v773 = vsel %vm741, %v585, 0
        %v776 = vsel %vm741, %v588, 0
        %v779 = vsel %vm741, %v591, 0
        %v782 = vsel %vm741, %v594, 0
        %v785 = vsel %vm741, %v597, 0
        %v788 = vsel %vm741, %v600, 0
        %790 = vmatprep.subr.bf16.mxu0 0
        %791 = vmatpush1.bf16.msra.mxu0 %v705
        %792 = vmatprep.subr.bf16.mxu0 0
        %793 = vmatpush1.bf16.msra.mxu0 %v706
        %794 = vmatprep.subr.bf16.mxu0 0
        %795 = vmatpush1.bf16.msra.mxu0 %v707
        %796 = vmatprep.subr.bf16.mxu0 0
        %797 = vmatpush1.bf16.msra.mxu0 %v708
        %798 = vmatprep.subr.bf16.mxu0 0
        %799 = vmatpush1.bf16.msra.mxu0 %v709
        %800 = vmatprep.subr.bf16.mxu0 0
        %801 = vmatpush1.bf16.msra.mxu0 %v710
        %802 = vmatprep.subr.bf16.mxu0 0
        %803 = vmatpush1.bf16.msra.mxu0 %v711
        %804 = vmatprep.subr.bf16.mxu0 0
        %805 = vmatpush1.bf16.msra.mxu0 %v712
        %806 = vmatprep.subr.bf16.mxu0 0
        %807 = vmatpush1.bf16.msra.mxu0 %v713
        %808 = vmatprep.subr.bf16.mxu0 0
        %809 = vmatpush1.bf16.msra.mxu0 %v714
        %810 = vmatprep.subr.bf16.mxu0 0
        %811 = vmatpush1.bf16.msra.mxu0 %v715
        %812 = vmatprep.subr.bf16.mxu0 0
        %813 = vmatpush1.bf16.msra.mxu0 %v716
        %814 = vmatprep.subr.bf16.mxu0 0
        %815 = vmatpush1.bf16.msra.mxu0 %v717
        %816 = vmatprep.subr.bf16.mxu0 0
        %817 = vmatpush1.bf16.msra.mxu0 %v718
        %818 = vmatprep.subr.bf16.mxu0 0
        %819 = vmatpush1.bf16.msra.mxu0 %v719
        %820 = vmatprep.subr.bf16.mxu0 0
        %821 = vmatpush1.bf16.msra.mxu0 %v720
        %822 = vmatprep.mubr.bf16.mxu0 %v554
        %823 = vmatmul.mubr.bf16.gmra.mrb[0].mxu0 %v553
        %v824 = vpop.f32.mrb[0].mxu0
        %v825 = vadd.f32 %v392, %v824
        %v826 = vpop.f32.mrb[0].mxu0
        %v827 = vpop.f32.mrb[0].mxu0
        %v828 = vadd.f32 %v392, %v827
        %v829 = vpop.f32.mrb[0].mxu0
        %830 = vmatprep.mubr.bf16.mxu0 %v557
        %831 = vmatmul.mubr.bf16.gmra.mrb[0].mxu0 %v556
        %v832 = vpop.f32.mrb[0].mxu0
        %v833 = vadd.f32 %v392, %v832
        %v834 = vpop.f32.mrb[0].mxu0
        %v835 = vpop.f32.mrb[0].mxu0
        %v836 = vadd.f32 %v392, %v835
        %v837 = vpop.f32.mrb[0].mxu0
        %838 = vmatprep.mubr.bf16.mxu0 %v560
        %839 = vmatmul.mubr.bf16.gmra.mrb[0].mxu0 %v559
        %v840 = vpop.f32.mrb[0].mxu0
        %v841 = vadd.f32 %v392, %v840
        %v842 = vpop.f32.mrb[0].mxu0
        %v843 = vpop.f32.mrb[0].mxu0
        %v844 = vadd.f32 %v392, %v843
        %v845 = vpop.f32.mrb[0].mxu0
        %846 = vmatprep.mubr.bf16.mxu0 %v563
        %847 = vmatmul.mubr.bf16.gmra.mrb[0].mxu0 %v562
        %v848 = vpop.f32.mrb[0].mxu0
        %v849 = vadd.f32 %v392, %v848
        %v850 = vpop.f32.mrb[0].mxu0
        %v851 = vpop.f32.mrb[0].mxu0
        %v852 = vadd.f32 %v392, %v851
        %v853 = vpop.f32.mrb[0].mxu0
        %854 = vmatprep.mubr.bf16.mxu0 %v566
        %855 = vmatmul.mubr.bf16.gmra.mrb[0].mxu0 %v565
        %v856 = vpop.f32.mrb[0].mxu0
        %v857 = vadd.f32 %v392, %v856
        %v858 = vpop.f32.mrb[0].mxu0
        %v859 = vpop.f32.mrb[0].mxu0
        %v860 = vadd.f32 %v392, %v859
        %v861 = vpop.f32.mrb[0].mxu0
        %862 = vmatprep.mubr.bf16.mxu0 %v569
        %863 = vmatmul.mubr.bf16.gmra.mrb[0].mxu0 %v568
        %v864 = vpop.f32.mrb[0].mxu0
        %v865 = vadd.f32 %v392, %v864
        %v866 = vpop.f32.mrb[0].mxu0
        %v867 = vpop.f32.mrb[0].mxu0
        %v868 = vadd.f32 %v392, %v867
        %v869 = vpop.f32.mrb[0].mxu0
        %870 = vmatprep.mubr.bf16.mxu0 %v572
        %871 = vmatmul.mubr.bf16.gmra.mrb[0].mxu0 %v571
        %v872 = vpop.f32.mrb[0].mxu0
        %v873 = vadd.f32 %v392, %v872
        %v874 = vpop.f32.mrb[0].mxu0
        %v875 = vpop.f32.mrb[0].mxu0
        %v876 = vadd.f32 %v392, %v875
        %v877 = vpop.f32.mrb[0].mxu0
        %878 = vmatprep.mubr.bf16.mxu0 %v575
        %879 = vmatmul.mubr.bf16.gmra.mrb[0].mxu0 %v574
        %v880 = vpop.f32.mrb[0].mxu0
        %v881 = vadd.f32 %v392, %v880
        %v882 = vpop.f32.mrb[0].mxu0
        %v883 = vpop.f32.mrb[0].mxu0
        %v884 = vadd.f32 %v392, %v883
        %v885 = vpop.f32.mrb[0].mxu0
        %886 = vmatprep.mubr.bf16.mxu0 %v578
        %887 = vmatmul.mubr.bf16.gmra.mrb[0].mxu0 %v577
        %v888 = vpop.f32.mrb[0].mxu0
        %v889 = vadd.f32 %v392, %v888
        %v890 = vpop.f32.mrb[0].mxu0
        %v891 = vpop.f32.mrb[0].mxu0
        %v892 = vadd.f32 %v392, %v891
        %v893 = vpop.f32.mrb[0].mxu0
        %894 = vmatprep.mubr.bf16.mxu0 %v581
        %895 = vmatmul.mubr.bf16.gmra.mrb[0].mxu0 %v580
        %v896 = vpop.f32.mrb[0].mxu0
        %v897 = vadd.f32 %v392, %v896
        %v898 = vpop.f32.mrb[0].mxu0
        %v899 = vpop.f32.mrb[0].mxu0
        %v900 = vadd.f32 %v392, %v899
        %v901 = vpop.f32.mrb[0].mxu0
        %902 = vmatprep.mubr.bf16.mxu0 %v584
        %903 = vmatmul.mubr.bf16.gmra.mrb[0].mxu0 %v583
        %v904 = vpop.f32.mrb[0].mxu0
        %v905 = vadd.f32 %v392, %v904
        %v906 = vpop.f32.mrb[0].mxu0
        %v907 = vpop.f32.mrb[0].mxu0
        %v908 = vadd.f32 %v392, %v907
        %v909 = vpop.f32.mrb[0].mxu0
        %910 = vmatprep.mubr.bf16.mxu0 %v587
        %911 = vmatmul.mubr.bf16.gmra.mrb[0].mxu0 %v586
        %v912 = vpop.f32.mrb[0].mxu0
        %v913 = vadd.f32 %v392, %v912
        %v914 = vpop.f32.mrb[0].mxu0
        %v915 = vpop.f32.mrb[0].mxu0
        %v916 = vadd.f32 %v392, %v915
        %v917 = vpop.f32.mrb[0].mxu0
        %918 = vmatprep.mubr.bf16.mxu0 %v590
        %919 = vmatmul.mubr.bf16.gmra.mrb[0].mxu0 %v589
        %v920 = vpop.f32.mrb[0].mxu0
        %v921 = vadd.f32 %v392, %v920
        %v922 = vpop.f32.mrb[0].mxu0
        %v923 = vpop.f32.mrb[0].mxu0
        %v924 = vadd.f32 %v392, %v923
        %v925 = vpop.f32.mrb[0].mxu0
        %926 = vmatprep.mubr.bf16.mxu0 %v593
        %927 = vmatmul.mubr.bf16.gmra.mrb[0].mxu0 %v592
        %v928 = vpop.f32.mrb[0].mxu0
        %v929 = vadd.f32 %v392, %v928
        %v930 = vpop.f32.mrb[0].mxu0
        %v931 = vpop.f32.mrb[0].mxu0
        %v932 = vadd.f32 %v392, %v931
        %v933 = vpop.f32.mrb[0].mxu0
        %934 = vmatprep.mubr.bf16.mxu0 %v596
        %935 = vmatmul.mubr.bf16.gmra.mrb[0].mxu0 %v595
        %v936 = vpop.f32.mrb[0].mxu0
        %v937 = vadd.f32 %v392, %v936
        %v938 = vpop.f32.mrb[0].mxu0
        %v939 = vpop.f32.mrb[0].mxu0
        %v940 = vadd.f32 %v392, %v939
        %v941 = vpop.f32.mrb[0].mxu0
        %942 = vmatprep.mubr.bf16.mxu0 %v599
        %943 = vmatmul.mubr.bf16.gmra.mrb[0].mxu0 %v598
        %v944 = vpop.f32.mrb[0].mxu0
        %v945 = vadd.f32 %v392, %v944
        %v946 = vpop.f32.mrb[0].mxu0
        %v947 = vpop.f32.mrb[0].mxu0
        %v948 = vadd.f32 %v392, %v947
        %v949 = vpop.f32.mrb[0].mxu0
        %950 = vdwg.mxu0
        %951 = vmatprep.subr.bf16.mxu0 0
        %952 = vmatpush1.bf16.msra.mxu0 %v721
        %953 = vmatprep.subr.bf16.mxu0 0
        %954 = vmatpush1.bf16.msra.mxu0 %v722
        %955 = vmatprep.subr.bf16.mxu0 0
        %956 = vmatpush1.bf16.msra.mxu0 0
        %957 = vmatprep.subr.bf16.mxu0 0
        %958 = vmatpush1.bf16.msra.mxu0 0
        %959 = vmatprep.subr.bf16.mxu0 0
        %960 = vmatpush1.bf16.msra.mxu0 0
        %961 = vmatprep.subr.bf16.mxu0 0
        %962 = vmatpush1.bf16.msra.mxu0 0
        %963 = vmatprep.subr.bf16.mxu0 0
        %964 = vmatpush1.bf16.msra.mxu0 0
        %965 = vmatprep.subr.bf16.mxu0 0
        %966 = vmatpush1.bf16.msra.mxu0 0
        %967 = vmatprep.subr.bf16.mxu0 0
        %968 = vmatpush1.bf16.msra.mxu0 0
        %969 = vmatprep.subr.bf16.mxu0 0
        %970 = vmatpush1.bf16.msra.mxu0 0
        %971 = vmatprep.subr.bf16.mxu0 0
        %972 = vmatpush1.bf16.msra.mxu0 0
        %973 = vmatprep.subr.bf16.mxu0 0
        %974 = vmatpush1.bf16.msra.mxu0 0
        %975 = vmatprep.subr.bf16.mxu0 0
        %976 = vmatpush1.bf16.msra.mxu0 0
        %977 = vmatprep.subr.bf16.mxu0 0
        %978 = vmatpush1.bf16.msra.mxu0 0
        %979 = vmatprep.subr.bf16.mxu0 0
        %980 = vmatpush1.bf16.msra.mxu0 0
        %981 = vmatprep.subr.bf16.mxu0 0
        %982 = vmatpush1.bf16.msra.mxu0 0
        %983 = vmatprep.mubr.bf16.mxu0 0
        %984 = vmatmul.mubr.bf16.gmra.mrb[0].mxu0 %v743
        %v985 = vpop.f32.mrb[0].mxu0
        %v986 = vadd.f32 %v825, %v985
        %v987 = vpop.f32.mrb[0].mxu0
        %v988 = vpop.f32.mrb[0].mxu0
        %v989 = vadd.f32 %v828, %v988
        %v990 = vpop.f32.mrb[0].mxu0
        %991 = vmatprep.mubr.bf16.mxu0 0
        %992 = vmatmul.mubr.bf16.gmra.mrb[0].mxu0 %v746
        %v993 = vpop.f32.mrb[0].mxu0
        %v994 = vadd.f32 %v833, %v993
        %v995 = vpop.f32.mrb[0].mxu0
        %v996 = vpop.f32.mrb[0].mxu0
        %v997 = vadd.f32 %v836, %v996
        %v998 = vpop.f32.mrb[0].mxu0
        %999 = vmatprep.mubr.bf16.mxu0 0
        %1000 = vmatmul.mubr.bf16.gmra.mrb[0].mxu0 %v749
        %v1001 = vpop.f32.mrb[0].mxu0
        %v1002 = vadd.f32 %v841, %v1001
        %v1003 = vpop.f32.mrb[0].mxu0
        %v1004 = vpop.f32.mrb[0].mxu0
        %v1005 = vadd.f32 %v844, %v1004
        %v1006 = vpop.f32.mrb[0].mxu0
        %1007 = vmatprep.mubr.bf16.mxu0 0
        %1008 = vmatmul.mubr.bf16.gmra.mrb[0].mxu0 %v752
        %v1009 = vpop.f32.mrb[0].mxu0
        %v1010 = vadd.f32 %v849, %v1009
        %v1011 = vpop.f32.mrb[0].mxu0
        %v1012 = vpop.f32.mrb[0].mxu0
        %v1013 = vadd.f32 %v852, %v1012
        %v1014 = vpop.f32.mrb[0].mxu0
        %1015 = vmatprep.mubr.bf16.mxu0 0
        %1016 = vmatmul.mubr.bf16.gmra.mrb[0].mxu0 %v755
        %v1017 = vpop.f32.mrb[0].mxu0
        %v1018 = vadd.f32 %v857, %v1017
        %v1019 = vpop.f32.mrb[0].mxu0
        %v1020 = vpop.f32.mrb[0].mxu0
        %v1021 = vadd.f32 %v860, %v1020
        %v1022 = vpop.f32.mrb[0].mxu0
        %1023 = vmatprep.mubr.bf16.mxu0 0
        %1024 = vmatmul.mubr.bf16.gmra.mrb[0].mxu0 %v758
        %v1025 = vpop.f32.mrb[0].mxu0
        %v1026 = vadd.f32 %v865, %v1025
        %v1027 = vpop.f32.mrb[0].mxu0
        %v1028 = vpop.f32.mrb[0].mxu0
        %v1029 = vadd.f32 %v868, %v1028
        %v1030 = vpop.f32.mrb[0].mxu0
        %1031 = vmatprep.mubr.bf16.mxu0 0
        %1032 = vmatmul.mubr.bf16.gmra.mrb[0].mxu0 %v761
        %v1033 = vpop.f32.mrb[0].mxu0
        %v1034 = vadd.f32 %v873, %v1033
        %v1035 = vpop.f32.mrb[0].mxu0
        %v1036 = vpop.f32.mrb[0].mxu0
        %v1037 = vadd.f32 %v876, %v1036
        %v1038 = vpop.f32.mrb[0].mxu0
        %1039 = vmatprep.mubr.bf16.mxu0 0
        %1040 = vmatmul.mubr.bf16.gmra.mrb[0].mxu0 %v764
        %v1041 = vpop.f32.mrb[0].mxu0
        %v1042 = vadd.f32 %v881, %v1041
        %v1043 = vpop.f32.mrb[0].mxu0
        %v1044 = vpop.f32.mrb[0].mxu0
        %v1045 = vadd.f32 %v884, %v1044
        %v1046 = vpop.f32.mrb[0].mxu0
        %1047 = vmatprep.mubr.bf16.mxu0 0
        %1048 = vmatmul.mubr.bf16.gmra.mrb[0].mxu0 %v767
        %v1049 = vpop.f32.mrb[0].mxu0
        %v1050 = vadd.f32 %v889, %v1049
        %v1051 = vpop.f32.mrb[0].mxu0
        %v1052 = vpop.f32.mrb[0].mxu0
        %v1053 = vadd.f32 %v892, %v1052
        %v1054 = vpop.f32.mrb[0].mxu0
        %1055 = vmatprep.mubr.bf16.mxu0 0
        %1056 = vmatmul.mubr.bf16.gmra.mrb[0].mxu0 %v770
        %v1057 = vpop.f32.mrb[0].mxu0
        %v1058 = vadd.f32 %v897, %v1057
        %v1059 = vpop.f32.mrb[0].mxu0
        %v1060 = vpop.f32.mrb[0].mxu0
        %v1061 = vadd.f32 %v900, %v1060
        %v1062 = vpop.f32.mrb[0].mxu0
        %1063 = vmatprep.mubr.bf16.mxu0 0
        %1064 = vmatmul.mubr.bf16.gmra.mrb[0].mxu0 %v773
        %v1065 = vpop.f32.mrb[0].mxu0
        %v1066 = vadd.f32 %v905, %v1065
        %v1067 = vpop.f32.mrb[0].mxu0
        %v1068 = vpop.f32.mrb[0].mxu0
        %v1069 = vadd.f32 %v908, %v1068
        %v1070 = vpop.f32.mrb[0].mxu0
        %1071 = vmatprep.mubr.bf16.mxu0 0
        %1072 = vmatmul.mubr.bf16.gmra.mrb[0].mxu0 %v776
        %v1073 = vpop.f32.mrb[0].mxu0
        %v1074 = vadd.f32 %v913, %v1073
        %v1075 = vpop.f32.mrb[0].mxu0
        %v1076 = vpop.f32.mrb[0].mxu0
        %v1077 = vadd.f32 %v916, %v1076
        %v1078 = vpop.f32.mrb[0].mxu0
        %1079 = vmatprep.mubr.bf16.mxu0 0
        %1080 = vmatmul.mubr.bf16.gmra.mrb[0].mxu0 %v779
        %v1081 = vpop.f32.mrb[0].mxu0
        %v1082 = vadd.f32 %v921, %v1081
        %v1083 = vpop.f32.mrb[0].mxu0
        %v1084 = vpop.f32.mrb[0].mxu0
        %v1085 = vadd.f32 %v924, %v1084
        %v1086 = vpop.f32.mrb[0].mxu0
        %1087 = vmatprep.mubr.bf16.mxu0 0
        %1088 = vmatmul.mubr.bf16.gmra.mrb[0].mxu0 %v782
        %v1089 = vpop.f32.mrb[0].mxu0
        %v1090 = vadd.f32 %v929, %v1089
        %v1091 = vpop.f32.mrb[0].mxu0
        %v1092 = vpop.f32.mrb[0].mxu0
        %v1093 = vadd.f32 %v932, %v1092
        %v1094 = vpop.f32.mrb[0].mxu0
        %1095 = vmatprep.mubr.bf16.mxu0 0
        %1096 = vmatmul.mubr.bf16.gmra.mrb[0].mxu0 %v785
        %v1097 = vpop.f32.mrb[0].mxu0
        %v1098 = vadd.f32 %v937, %v1097
        %v1099 = vpop.f32.mrb[0].mxu0
        %v1100 = vpop.f32.mrb[0].mxu0
        %v1101 = vadd.f32 %v940, %v1100
        %v1102 = vpop.f32.mrb[0].mxu0
        %1103 = vmatprep.mubr.bf16.mxu0 0
        %1104 = vmatmul.mubr.bf16.gmra.mrb[0].mxu0 %v788
        %v1105 = vpop.f32.mrb[0].mxu0
        %v1106 = vadd.f32 %v945, %v1105
        %v1107 = vpop.f32.mrb[0].mxu0
        %v1108 = vpop.f32.mrb[0].mxu0
        %v1109 = vadd.f32 %v948, %v1108
        %v1110 = vpop.f32.mrb[0].mxu0
        %1111 = vdwg.mxu0
        %vm1112 = vcmp.ge.f32.partialorder %v986, 0.0
        %vm1113 = vcmp.ge.f32.partialorder %v989, 0.0
        %vm1114 = vcmp.ge.f32.partialorder %v994, 0.0
        %vm1115 = vcmp.ge.f32.partialorder %v997, 0.0
        %vm1116 = vcmp.ge.f32.partialorder %v1002, 0.0
        %vm1117 = vcmp.ge.f32.partialorder %v1005, 0.0
        %vm1118 = vcmp.ge.f32.partialorder %v1010, 0.0
        %vm1119 = vcmp.ge.f32.partialorder %v1013, 0.0
        %vm1120 = vcmp.ge.f32.partialorder %v1018, 0.0
        %vm1121 = vcmp.ge.f32.partialorder %v1021, 0.0
        %vm1122 = vcmp.ge.f32.partialorder %v1026, 0.0
        %vm1123 = vcmp.ge.f32.partialorder %v1029, 0.0
        %vm1124 = vcmp.ge.f32.partialorder %v1034, 0.0
        %vm1125 = vcmp.ge.f32.partialorder %v1037, 0.0
        %vm1126 = vcmp.ge.f32.partialorder %v1042, 0.0
        %vm1127 = vcmp.ge.f32.partialorder %v1045, 0.0
        %vm1128 = vcmp.ge.f32.partialorder %v1050, 0.0
        %vm1129 = vcmp.ge.f32.partialorder %v1053, 0.0
        %vm1130 = vcmp.ge.f32.partialorder %v1058, 0.0
        %vm1131 = vcmp.ge.f32.partialorder %v1061, 0.0
        %vm1132 = vcmp.ge.f32.partialorder %v1066, 0.0
        %vm1133 = vcmp.ge.f32.partialorder %v1069, 0.0
        %vm1134 = vcmp.ge.f32.partialorder %v1074, 0.0
        %vm1135 = vcmp.ge.f32.partialorder %v1077, 0.0
        %vm1136 = vcmp.ge.f32.partialorder %v1082, 0.0
        %vm1137 = vcmp.ge.f32.partialorder %v1085, 0.0
        %vm1138 = vcmp.ge.f32.partialorder %v1090, 0.0
        %vm1139 = vcmp.ge.f32.partialorder %v1093, 0.0
        %vm1140 = vcmp.ge.f32.partialorder %v1098, 0.0
        %vm1141 = vcmp.ge.f32.partialorder %v1101, 0.0
        %vm1142 = vcmp.ge.f32.partialorder %v1106, 0.0
        %vm1143 = vcmp.ge.f32.partialorder %v1109, 0.0
        %v1144 = vld [vmem:[#allocation7 + $0x1] sm:$0x1]
        %v1145 = vlaneseq
        %v1146 = vshrl.u32 %v1145, 7
        %v1147 = vsub.s32 0, %v1146
        %v1148 = vrot.slane %v1144, %v1147
        %v1149 = vmul.f32 %v1148, %v986
        %v1150 = vmul.f32 %v1148, %v989
        %v1151 = vmul.f32 %v1148, %v994
        %v1152 = vmul.f32 %v1148, %v997
        %v1153 = vmul.f32 %v1148, %v1002
        %v1154 = vmul.f32 %v1148, %v1005
        %v1155 = vmul.f32 %v1148, %v1010
        %v1156 = vmul.f32 %v1148, %v1013
        %v1157 = vmul.f32 %v1148, %v1018
        %v1158 = vmul.f32 %v1148, %v1021
        %v1159 = vmul.f32 %v1148, %v1026
        %v1160 = vmul.f32 %v1148, %v1029
        %v1161 = vmul.f32 %v1148, %v1034
        %v1162 = vmul.f32 %v1148, %v1037
        %v1163 = vmul.f32 %v1148, %v1042
        %v1164 = vmul.f32 %v1148, %v1045
        %v1165 = vmul.f32 %v1148, %v1050
        %v1166 = vmul.f32 %v1148, %v1053
        %v1167 = vmul.f32 %v1148, %v1058
        %v1168 = vmul.f32 %v1148, %v1061
        %v1169 = vmul.f32 %v1148, %v1066
        %v1170 = vmul.f32 %v1148, %v1069
        %v1171 = vmul.f32 %v1148, %v1074
        %v1172 = vmul.f32 %v1148, %v1077
        %v1173 = vmul.f32 %v1148, %v1082
        %v1174 = vmul.f32 %v1148, %v1085
        %v1175 = vmul.f32 %v1148, %v1090
        %v1176 = vmul.f32 %v1148, %v1093
        %v1177 = vmul.f32 %v1148, %v1098
        %v1178 = vmul.f32 %v1148, %v1101
        %v1179 = vmul.f32 %v1148, %v1106
        %v1180 = vmul.f32 %v1148, %v1109
        %v1181 = vsel %vm1112, %v986, %v1149
        %v1182 = vsel %vm1113, %v989, %v1150
        %v1183 = vsel %vm1114, %v994, %v1151
        %v1184 = vsel %vm1115, %v997, %v1152
        %v1185 = vsel %vm1116, %v1002, %v1153
        %v1186 = vsel %vm1117, %v1005, %v1154
        %v1187 = vsel %vm1118, %v1010, %v1155
        %v1188 = vsel %vm1119, %v1013, %v1156
        %v1189 = vsel %vm1120, %v1018, %v1157
        %v1190 = vsel %vm1121, %v1021, %v1158
        %v1191 = vsel %vm1122, %v1026, %v1159
        %v1192 = vsel %vm1123, %v1029, %v1160
        %v1193 = vsel %vm1124, %v1034, %v1161
        %v1194 = vsel %vm1125, %v1037, %v1162
        %v1195 = vsel %vm1126, %v1042, %v1163
        %v1196 = vsel %vm1127, %v1045, %v1164
        %v1197 = vsel %vm1128, %v1050, %v1165
        %v1198 = vsel %vm1129, %v1053, %v1166
        %v1199 = vsel %vm1130, %v1058, %v1167
        %v1200 = vsel %vm1131, %v1061, %v1168
        %v1201 = vsel %vm1132, %v1066, %v1169
        %v1202 = vsel %vm1133, %v1069, %v1170
        %v1203 = vsel %vm1134, %v1074, %v1171
        %v1204 = vsel %vm1135, %v1077, %v1172
        %v1205 = vsel %vm1136, %v1082, %v1173
        %v1206 = vsel %vm1137, %v1085, %v1174
        %v1207 = vsel %vm1138, %v1090, %v1175
        %v1208 = vsel %vm1139, %v1093, %v1176
        %v1209 = vsel %vm1140, %v1098, %v1177
        %v1210 = vsel %vm1141, %v1101, %v1178
        %v1211 = vsel %vm1142, %v1106, %v1179
        %v1212 = vsel %vm1143, %v1109, %v1180
        %v1213 = vld [vmem:[%s254] sm:$0xf]
        %v1214 = vld [vmem:[%s254 + $0x4] sm:$0xf]
        %v1215 = vld [vmem:[%s254 + $0x8] sm:$0xf]
        %v1216 = vld [vmem:[%s254 + $0xc] sm:$0xf]
        %v1217 = vld [vmem:[%s254 + $0x10] sm:$0xf]
        %v1218 = vld [vmem:[%s254 + $0x14] sm:$0xf]
        %v1219 = vld [vmem:[%s254 + $0x18] sm:$0xf]
        %v1220 = vld [vmem:[%s254 + $0x1c] sm:$0xf]
        %v1221 = vld [vmem:[%s254 + $0x20] sm:$0xf]
        %v1222 = vld [vmem:[%s254 + $0x24] sm:$0xf]
        %v1223 = vld [vmem:[%s254 + $0x28] sm:$0xf]
        %v1224 = vld [vmem:[%s254 + $0x2c] sm:$0xf]
        %v1225 = vld [vmem:[%s254 + $0x30] sm:$0xf]
        %v1226 = vld [vmem:[%s254 + $0x34] sm:$0xf]
        %v1227 = vld [vmem:[%s254 + $0x38] sm:$0xf]
        %v1228 = vld [vmem:[%s254 + $0x3c] sm:$0xf]
        %v1229 = vld [vmem:[%s254 + $0x40] sm:$0xf]
        %v1230 = vld [vmem:[%s254 + $0x44] sm:$0xf]
        %v1231 = vld [vmem:[%s254 + $0x48] sm:$0xf]
        %v1232 = vld [vmem:[%s254 + $0x4c] sm:$0xf]
        %v1233 = vld [vmem:[%s254 + $0x50] sm:$0xf]
        %v1234 = vld [vmem:[%s254 + $0x54] sm:$0xf]
        %v1235 = vld [vmem:[%s254 + $0x58] sm:$0xf]
        %v1236 = vld [vmem:[%s254 + $0x5c] sm:$0xf]
        %v1237 = vld [vmem:[%s254 + $0x60] sm:$0xf]
        %v1238 = vld [vmem:[%s254 + $0x64] sm:$0xf]
        %v1239 = vld [vmem:[%s254 + $0x68] sm:$0xf]
        %v1240 = vld [vmem:[%s254 + $0x6c] sm:$0xf]
        %v1241 = vld [vmem:[%s254 + $0x70] sm:$0xf]
        %v1242 = vld [vmem:[%s254 + $0x74] sm:$0xf]
        %v1243 = vld [vmem:[%s254 + $0x78] sm:$0xf]
        %v1244 = vld [vmem:[%s254 + $0x7c] sm:$0xf]
        %v1245 = vunpack.c.l.bf16 %v1213
        %v1246 = vunpack.c.l.bf16 %v1214
        %v1247 = vunpack.c.l.bf16 %v1215
        %v1248 = vunpack.c.l.bf16 %v1216
        %v1249 = vunpack.c.l.bf16 %v1217
        %v1250 = vunpack.c.l.bf16 %v1218
        %v1251 = vunpack.c.l.bf16 %v1219
        %v1252 = vunpack.c.l.bf16 %v1220
        %v1253 = vunpack.c.l.bf16 %v1221
        %v1254 = vunpack.c.l.bf16 %v1222
        %v1255 = vunpack.c.l.bf16 %v1223
        %v1256 = vunpack.c.l.bf16 %v1224
        %v1257 = vunpack.c.l.bf16 %v1225
        %v1258 = vunpack.c.l.bf16 %v1226
        %v1259 = vunpack.c.l.bf16 %v1227
        %v1260 = vunpack.c.l.bf16 %v1228
        %v1261 = vunpack.c.l.bf16 %v1229
        %v1262 = vunpack.c.l.bf16 %v1230
        %v1263 = vunpack.c.l.bf16 %v1231
        %v1264 = vunpack.c.l.bf16 %v1232
        %v1265 = vunpack.c.l.bf16 %v1233
        %v1266 = vunpack.c.l.bf16 %v1234
        %v1267 = vunpack.c.l.bf16 %v1235
        %v1268 = vunpack.c.l.bf16 %v1236
        %v1269 = vunpack.c.l.bf16 %v1237
        %v1270 = vunpack.c.l.bf16 %v1238
        %v1271 = vunpack.c.l.bf16 %v1239
        %v1272 = vunpack.c.l.bf16 %v1240
        %v1273 = vunpack.c.l.bf16 %v1241
        %v1274 = vunpack.c.l.bf16 %v1242
        %v1275 = vunpack.c.l.bf16 %v1243
        %v1276 = vunpack.c.l.bf16 %v1244
        %v1277 = vsub.f32 %v1181, %v1245
        %v1278 = vsub.f32 %v1182, %v1246
        %v1279 = vsub.f32 %v1183, %v1247
        %v1280 = vsub.f32 %v1184, %v1248
        %v1281 = vsub.f32 %v1185, %v1249
        %v1282 = vsub.f32 %v1186, %v1250
        %v1283 = vsub.f32 %v1187, %v1251
        %v1284 = vsub.f32 %v1188, %v1252
        %v1285 = vsub.f32 %v1189, %v1253
        %v1286 = vsub.f32 %v1190, %v1254
        %v1287 = vsub.f32 %v1191, %v1255
        %v1288 = vsub.f32 %v1192, %v1256
        %v1289 = vsub.f32 %v1193, %v1257
        %v1290 = vsub.f32 %v1194, %v1258
        %v1291 = vsub.f32 %v1195, %v1259
        %v1292 = vsub.f32 %v1196, %v1260
        %v1293 = vsub.f32 %v1197, %v1261
        %v1294 = vsub.f32 %v1198, %v1262
        %v1295 = vsub.f32 %v1199, %v1263
        %v1296 = vsub.f32 %v1200, %v1264
        %v1297 = vsub.f32 %v1201, %v1265
        %v1298 = vsub.f32 %v1202, %v1266
        %v1299 = vsub.f32 %v1203, %v1267
        %v1300 = vsub.f32 %v1204, %v1268
        %v1301 = vsub.f32 %v1205, %v1269
        %v1302 = vsub.f32 %v1206, %v1270
        %v1303 = vsub.f32 %v1207, %v1271
        %v1304 = vsub.f32 %v1208, %v1272
        %v1305 = vsub.f32 %v1209, %v1273
        %v1306 = vsub.f32 %v1210, %v1274
        %v1307 = vsub.f32 %v1211, %v1275
        %v1308 = vsub.f32 %v1212, %v1276
        %v1309 = vpack.c.bf16 %v1278, %v1277
        %v1310 = vpack.c.bf16 %v1280, %v1279
        %v1311 = vpack.c.bf16 %v1282, %v1281
        %v1312 = vpack.c.bf16 %v1284, %v1283
        %v1313 = vpack.c.bf16 %v1286, %v1285
        %v1314 = vpack.c.bf16 %v1288, %v1287
        %v1315 = vpack.c.bf16 %v1290, %v1289
        %v1316 = vpack.c.bf16 %v1292, %v1291
        %v1317 = vpack.c.bf16 %v1294, %v1293
        %v1318 = vpack.c.bf16 %v1296, %v1295
        %v1319 = vpack.c.bf16 %v1298, %v1297
        %v1320 = vpack.c.bf16 %v1300, %v1299
        %v1321 = vpack.c.bf16 %v1302, %v1301
        %v1322 = vpack.c.bf16 %v1304, %v1303
        %v1323 = vpack.c.bf16 %v1306, %v1305
        %v1324 = vpack.c.bf16 %v1308, %v1307
        %v1341 = vunpack.c.l.b16 %v1309
        %v1342 = vunpack.c.h.b16 %v1309
        %v1343 = vunpack.c.l.b16 %v1310
        %v1344 = vunpack.c.h.b16 %v1310
        %v1345 = vunpack.c.l.b16 %v1311
        %v1346 = vunpack.c.h.b16 %v1311
        %v1347 = vunpack.c.l.b16 %v1312
        %v1348 = vunpack.c.h.b16 %v1312
        %v1349 = vunpack.c.l.b16 %v1313
        %v1350 = vunpack.c.h.b16 %v1313
        %v1351 = vunpack.c.l.b16 %v1314
        %v1352 = vunpack.c.h.b16 %v1314
        %v1353 = vunpack.c.l.b16 %v1315
        %v1354 = vunpack.c.h.b16 %v1315
        %v1355 = vunpack.c.l.b16 %v1316
        %v1356 = vunpack.c.h.b16 %v1316
        %v1357 = vunpack.c.l.b16 %v1317
        %v1358 = vunpack.c.h.b16 %v1317
        %v1359 = vunpack.c.l.b16 %v1318
        %v1360 = vunpack.c.h.b16 %v1318
        %v1361 = vunpack.c.l.b16 %v1319
        %v1362 = vunpack.c.h.b16 %v1319
        %v1363 = vunpack.c.l.b16 %v1320
        %v1364 = vunpack.c.h.b16 %v1320
        %v1365 = vunpack.c.l.b16 %v1321
        %v1366 = vunpack.c.h.b16 %v1321
        %v1367 = vunpack.c.l.b16 %v1322
        %v1368 = vunpack.c.h.b16 %v1322
        %v1369 = vunpack.c.l.b16 %v1323
        %v1370 = vunpack.c.h.b16 %v1323
        %v1371 = vunpack.c.l.b16 %v1324
        %v1372 = vunpack.c.h.b16 %v1324
        %v1373 = vpack.c.b16 %v1341, %v1341
        %v1374 = vpack.c.b16 %v1342, %v1342
        %v1375 = vpack.c.b16 %v1343, %v1343
        %v1376 = vpack.c.b16 %v1344, %v1344
        %v1377 = vpack.c.b16 %v1345, %v1345
        %v1378 = vpack.c.b16 %v1346, %v1346
        %v1379 = vpack.c.b16 %v1347, %v1347
        %v1380 = vpack.c.b16 %v1348, %v1348
        %v1381 = vpack.c.b16 %v1349, %v1349
        %v1382 = vpack.c.b16 %v1350, %v1350
        %v1383 = vpack.c.b16 %v1351, %v1351
        %v1384 = vpack.c.b16 %v1352, %v1352
        %v1385 = vpack.c.b16 %v1353, %v1353
        %v1386 = vpack.c.b16 %v1354, %v1354
        %v1387 = vpack.c.b16 %v1355, %v1355
        %v1388 = vpack.c.b16 %v1356, %v1356
        %v1389 = vpack.c.b16 %v1357, %v1357
        %v1390 = vpack.c.b16 %v1358, %v1358
        %v1391 = vpack.c.b16 %v1359, %v1359
        %v1392 = vpack.c.b16 %v1360, %v1360
        %v1393 = vpack.c.b16 %v1361, %v1361
        %v1394 = vpack.c.b16 %v1362, %v1362
        %v1395 = vpack.c.b16 %v1363, %v1363
        %v1396 = vpack.c.b16 %v1364, %v1364
        %v1397 = vpack.c.b16 %v1365, %v1365
        %v1398 = vpack.c.b16 %v1366, %v1366
        %v1399 = vpack.c.b16 %v1367, %v1367
        %v1400 = vpack.c.b16 %v1368, %v1368
        %v1401 = vpack.c.b16 %v1369, %v1369
        %v1402 = vpack.c.b16 %v1370, %v1370
        %v1403 = vpack.c.b16 %v1371, %v1371
        %v1404 = vpack.c.b16 %v1372, %v1372
        %1437 = vst [vmem:[%s283] sm:$0xf] %v1373
        %1438 = vst [vmem:[%s283 + $0x4] sm:$0xf] %v1374
        %1439 = vst [vmem:[%s283 + $0x8] sm:$0xf] %v1375
        %1440 = vst [vmem:[%s283 + $0xc] sm:$0xf] %v1376
        %1441 = vst [vmem:[%s283 + $0x10] sm:$0xf] %v1377
        %1442 = vst [vmem:[%s283 + $0x14] sm:$0xf] %v1378
        %1443 = vst [vmem:[%s283 + $0x18] sm:$0xf] %v1379
        %1444 = vst [vmem:[%s283 + $0x1c] sm:$0xf] %v1380
        %1445 = vst [vmem:[%s283 + $0x20] sm:$0xf] %v1381
        %1446 = vst [vmem:[%s283 + $0x24] sm:$0xf] %v1382
        %1447 = vst [vmem:[%s283 + $0x28] sm:$0xf] %v1383
        %1448 = vst [vmem:[%s283 + $0x2c] sm:$0xf] %v1384
        %1449 = vst [vmem:[%s283 + $0x30] sm:$0xf] %v1385
        %1450 = vst [vmem:[%s283 + $0x34] sm:$0xf] %v1386
        %1451 = vst [vmem:[%s283 + $0x38] sm:$0xf] %v1387
        %1452 = vst [vmem:[%s283 + $0x3c] sm:$0xf] %v1388
        %1453 = vst [vmem:[%s283 + $0x40] sm:$0xf] %v1389
        %1454 = vst [vmem:[%s283 + $0x44] sm:$0xf] %v1390
        %1455 = vst [vmem:[%s283 + $0x48] sm:$0xf] %v1391
        %1456 = vst [vmem:[%s283 + $0x4c] sm:$0xf] %v1392
        %1457 = vst [vmem:[%s283 + $0x50] sm:$0xf] %v1393
        %1458 = vst [vmem:[%s283 + $0x54] sm:$0xf] %v1394
        %1459 = vst [vmem:[%s283 + $0x58] sm:$0xf] %v1395
        %1460 = vst [vmem:[%s283 + $0x5c] sm:$0xf] %v1396
        %1461 = vst [vmem:[%s283 + $0x60] sm:$0xf] %v1397
        %1462 = vst [vmem:[%s283 + $0x64] sm:$0xf] %v1398
        %1463 = vst [vmem:[%s283 + $0x68] sm:$0xf] %v1399
        %1464 = vst [vmem:[%s283 + $0x6c] sm:$0xf] %v1400
        %1465 = vst [vmem:[%s283 + $0x70] sm:$0xf] %v1401
        %1466 = vst [vmem:[%s283 + $0x74] sm:$0xf] %v1402
        %1467 = vst [vmem:[%s283 + $0x78] sm:$0xf] %v1403
        %1468 = vst [vmem:[%s283 + $0x7c] sm:$0xf] %v1404
        %s1469 = sand.u32 %s127, 1
        %s1470 = scalar_lea.sflag [#allocation4], %s1469
        %s1471 = sand.u32 %s127, 1
        %s1472 = smul.addr %s1471, 128
        %s1473 = scalar_lea.vmem [#allocation10], %s1472
        // Predicated region
        $region53: #{_lambda_.6} parent=35 // pred_check
          %p1474 = pneg %p137
        $region54: #{_lambda_.6} parent=35 // pred_check_branch
          %1476 = sbr.rel (%p1474) target = $region56
        $region55: #{_lambda_.6} parent=35 // pred_region
          %s1477 = smul.u32 32, %s25
          %s1479 = ssub.s32 2048, 2048
          %1480 = vsyncadd %s1470, %s1479
          %s1481 = smul.addr %s1477, 64
          %s1482 = scalar_lea.hbm %s4, %s1481
          %s1483 = sshll.u32 %s1473, 4
          %s1484 = int_to_ptr.vmem [resolvable:$true] %s1483
          %1489 = dma.vmem_to_hbm [thread:$0]  %s1484, 2048, %s1482, %s1470, 64, 64, 4
        $region56: #{_lambda_.6} parent=35 // pred_fallthru
          _
      $region36: #{_lambda_.6} parent=5 // pred_fallthru
        _
      %p1490 = scmp.le.s32.totalorder 2, %s20
      // Predicated region
      $region57: #{_lambda_.6} parent=5 // pred_check
        %p1491 = pneg %p1490
      $region58: #{_lambda_.6} parent=5 // pred_check_branch
        %1493 = sbr.rel (%p1491) target = $region60
      $region59: #{_lambda_.6} parent=5 // pred_region
        %s1494 = ssub.s32 %s20, 2
        // Predicated region
        $region61: #{_lambda_.6} parent=59 // pred_check
          %p1495 = pneg %p143
        $region62: #{_lambda_.6} parent=59 // pred_check_branch
          %1497 = sbr.rel (%p1495) target = $region64
        $region63: #{_lambda_.6} parent=59 // pred_region
          %s1498 = sand.u32 %s128, 1
          %s1499 = scalar_lea.sflag [#allocation4], %s1498
          %s1500 = sand.u32 %s128, 1
          %s1501 = smul.addr %s1500, 128
          %s1502 = scalar_lea.vmem [#allocation10], %s1501
          %1503 = dma.done %s1499, 2048
        $region64: #{_lambda_.6} parent=59 // pred_fallthru
          _
      $region60: #{_lambda_.6} parent=5 // pred_fallthru
        _
    $region6: #{_lambda_.6} parent=1 // loop_footer
      %s24 = sadd.s32 1, %s20
    $region7: #{_lambda_.6} parent=1 // loop_footer_branch
      %19 = sbr.rel target = $region3
    $region8: #{_lambda_.6} parent=1 // loop_exit
      _
    %1504 = vsyncpa [#allocation3], 1
    %s1505 = scalar_lea.sflag [#allocation3], 1
    %1506 = vsyncpa %s1505, 1
    %1507 = vsyncpa [#allocation6], 1
    %1508 = vsyncpa [#allocation9], 1
    %s1509 = scalar_lea.sflag [#allocation9], 1
    %1510 = vsyncpa %s1509, 1
    %1511 = vsyncpa [#allocation4], 1
    %s1512 = scalar_lea.sflag [#allocation4], 1
    %1513 = vsyncpa %s1512, 1

// kernel: _lambda_.7
$region0: #{_lambda_.7}
  #allocation0 [shape = 'u32[]', space=smem, size = 0x4, offset = 0x4, fixed_abs, tag = 'smem constant byte address 0x4 - core index']
  #allocation1 [shape = 'u32[144,128]{1,0:T(1,128)}', space=vmem, size = 0x12000, scoped, tag = 'internal scratch']
  %s0 = inlined_call_operand.hbm [shape: bf16[512,72], index: 0, kind: input, shape index: {}]
  %s1 = inlined_call_operand.hbm [shape: bf16[72,128], index: 1, kind: input, shape index: {}]
  %s2 = inlined_call_operand.hbm [shape: f32[2,128], index: 2, kind: input, shape index: {}]
  %s3 = inlined_call_operand.hbm [shape: bf16[512,128], index: 3, kind: input, shape index: {}]
  %s4 = inlined_call_operand.hbm [shape: f32[512,128], index: 4, kind: output, shape index: {}]
  %s5 = sld [smem:[#allocation0]]
  $region65: #{_lambda_.7} parent=0
    _
  %s7 = ssub.s32 1, %s5
  %s8 = scalar_select 0, %s7, %s5
  $region1: #{_lambda_.7} parent=0
    #allocation2 [shape = 'u8[131072]{0}', space=vmem, size = 0x20000, scoped, tag = 'input window, operand 0']
    #allocation3 [shape = 's32[2]{0}', space=sflag, size = 0x8, scoped, tag = 'scoped memory for _lambda_.7']
    #allocation4 [shape = 's32[2]{0}', space=sflag, size = 0x8, scoped, tag = 'scoped memory for _lambda_.7']
    #allocation5 [shape = 'u8[18432]{0}', space=vmem, size = 0x4800, scoped, tag = 'input window, operand 1, single buffered']
    #allocation6 [shape = 's32[1]{0}', space=sflag, size = 0x4, scoped, tag = 'scoped memory for _lambda_.7']
    #allocation7 [shape = 'u8[1024]{0}', space=vmem, size = 0x400, scoped, tag = 'input window, operand 2, single buffered']
    #allocation8 [shape = 'u8[131072]{0}', space=vmem, size = 0x20000, scoped, tag = 'input window, operand 3']
    #allocation9 [shape = 's32[2]{0}', space=sflag, size = 0x8, scoped, tag = 'scoped memory for _lambda_.7']
    #allocation10 [shape = 'u8[262144]{0}', space=vmem, size = 0x40000, scoped, tag = 'output window, operand 0']
    %9 = vsyncpa [#allocation3], 0
    %s10 = scalar_lea.sflag [#allocation3], 1
    %11 = vsyncpa %s10, 0
    %12 = vsyncpa [#allocation6], 0
    %13 = vsyncpa [#allocation9], 0
    %s14 = scalar_lea.sflag [#allocation9], 1
    %15 = vsyncpa %s14, 0
    %16 = vsyncpa [#allocation4], 0
    %s17 = scalar_lea.sflag [#allocation4], 1
    %18 = vsyncpa %s17, 0
    loop: start=0, step=1, limit=4
    $region2: #{_lambda_.7} parent=1 // loop_pre_header
      _
    $region3: #{_lambda_.7} parent=1 // loop_header
      %s20 = sphi 0, %s24
      %p21 = scmp.ge.s32.totalorder %s20, 4
      %s30 = sphi 0, %s32
      %s33 = sphi 0, %s30
      %s34 = sphi 0, %s33
      %s50 = sphi 0, %s34
      %s54 = sphi 0, %s54
      %s56 = sphi 0, %s54
      %s57 = sphi 0, %s56
      %s71 = sphi 0, %s57
      %s75 = sphi 0, %s75
      %s77 = sphi 0, %s75
      %s78 = sphi 0, %s77
      %s92 = sphi 0, %s78
      %s98 = sphi 0, %s100
      %s101 = sphi 0, %s98
      %s102 = sphi 0, %s101
      %s118 = sphi 0, %s102
      %s124 = sphi 0, %s126
      %s127 = sphi 0, %s124
      %s128 = sphi 0, %s127
      %s144 = sphi 0, %s128
    $region4: #{_lambda_.7} parent=1 // loop_header_branch
      %23 = sbr.rel (%p21) target = $region8
    $region5: #{_lambda_.7} parent=1 // loop_body
      %s25 = ssub.s32 %s20, 1
      %s26 = ssub.s32 %s20, 2
      %s27 = sadd.s32 %s20, 1
      %s28 = ssub.s32 %s20, %s27
      %p29 = scmp.eq.s32.totalorder %s28, 0
      %s31 = sadd.s32 %s30, 1
      %s32 = scalar_select %p29, %s30, %s31
      %p35 = pneg %p29
      %p36 = scmp.eq.s32.totalorder %s20, 1
      %p37 = por %p35, %p36
      %p38 = scmp.ne.s32.totalorder %s30, %s33
      %p39 = scmp.eq.s32.totalorder %s20, 0
      %p40 = por %p38, %p39
      %p41 = scmp.ne.s32.totalorder %s30, %s33
      %p42 = scmp.eq.s32.totalorder %s25, 1
      %p43 = por %p41, %p42
      %p44 = scmp.ne.s32.totalorder %s33, %s34
      %p45 = scmp.eq.s32.totalorder %s25, 0
      %p46 = por %p44, %p45
      %p47 = scmp.ne.s32.totalorder %s33, %s34
      %p48 = scmp.eq.s32.totalorder %s26, 1
      %p49 = por %p47, %p48
      %p51 = scmp.ne.s32.totalorder %s34, %s50
      %p52 = scmp.eq.s32.totalorder %s26, 0
      %p53 = por %p51, %p52
      %s55 = sadd.s32 %s54, 1
      %p58 = scmp.eq.s32.totalorder %s20, 1
      %p59 = scmp.ne.s32.totalorder %s54, %s56
      %p60 = scmp.eq.s32.totalorder %s20, 0
      %p61 = por %p59, %p60
      %p62 = scmp.ne.s32.totalorder %s54, %s56
      %p63 = scmp.eq.s32.totalorder %s25, 1
      %p64 = por %p62, %p63
      %p65 = scmp.ne.s32.totalorder %s56, %s57
      %p66 = scmp.eq.s32.totalorder %s25, 0
      %p67 = por %p65, %p66
      %p68 = scmp.ne.s32.totalorder %s56, %s57
      %p69 = scmp.eq.s32.totalorder %s26, 1
      %p70 = por %p68, %p69
      %p72 = scmp.ne.s32.totalorder %s57, %s71
      %p73 = scmp.eq.s32.totalorder %s26, 0
      %p74 = por %p72, %p73
      %s76 = sadd.s32 %s75, 1
      %p79 = scmp.eq.s32.totalorder %s20, 1
      %p80 = scmp.ne.s32.totalorder %s75, %s77
      %p81 = scmp.eq.s32.totalorder %s20, 0
      %p82 = por %p80, %p81
      %p83 = scmp.ne.s32.totalorder %s75, %s77
      %p84 = scmp.eq.s32.totalorder %s25, 1
      %p85 = por %p83, %p84
      %p86 = scmp.ne.s32.totalorder %s77, %s78
      %p87 = scmp.eq.s32.totalorder %s25, 0
      %p88 = por %p86, %p87
      %p89 = scmp.ne.s32.totalorder %s77, %s78
      %p90 = scmp.eq.s32.totalorder %s26, 1
      %p91 = por %p89, %p90
      %p93 = scmp.ne.s32.totalorder %s78, %s92
      %p94 = scmp.eq.s32.totalorder %s26, 0
      %p95 = por %p93, %p94
      %s96 = ssub.s32 %s20, %s27
      %p97 = scmp.eq.s32.totalorder %s96, 0
      %s99 = sadd.s32 %s98, 1
      %s100 = scalar_select %p97, %s98, %s99
      %p103 = pneg %p97
      %p104 = scmp.eq.s32.totalorder %s20, 1
      %p105 = por %p103, %p104
      %p106 = scmp.ne.s32.totalorder %s98, %s101
      %p107 = scmp.eq.s32.totalorder %s20, 0
      %p108 = por %p106, %p107
      %p109 = scmp.ne.s32.totalorder %s98, %s101
      %p110 = scmp.eq.s32.totalorder %s25, 1
      %p111 = por %p109, %p110
      %p112 = scmp.ne.s32.totalorder %s101, %s102
      %p113 = scmp.eq.s32.totalorder %s25, 0
      %p114 = por %p112, %p113
      %p115 = scmp.ne.s32.totalorder %s101, %s102
      %p116 = scmp.eq.s32.totalorder %s26, 1
      %p117 = por %p115, %p116
      %p119 = scmp.ne.s32.totalorder %s102, %s118
      %p120 = scmp.eq.s32.totalorder %s26, 0
      %p121 = por %p119, %p120
      %s122 = ssub.s32 %s20, %s27
      %p123 = scmp.eq.s32.totalorder %s122, 0
      %s125 = sadd.s32 %s124, 1
      %s126 = scalar_select %p123, %s124, %s125
      %p129 = pneg %p123
      %p130 = scmp.eq.s32.totalorder %s20, 1
      %p131 = por %p129, %p130
      %p132 = scmp.ne.s32.totalorder %s124, %s127
      %p133 = scmp.eq.s32.totalorder %s20, 0
      %p134 = por %p132, %p133
      %p135 = scmp.ne.s32.totalorder %s124, %s127
      %p136 = scmp.eq.s32.totalorder %s25, 1
      %p137 = por %p135, %p136
      %p138 = scmp.ne.s32.totalorder %s127, %s128
      %p139 = scmp.eq.s32.totalorder %s25, 0
      %p140 = por %p138, %p139
      %p141 = scmp.ne.s32.totalorder %s127, %s128
      %p142 = scmp.eq.s32.totalorder %s26, 1
      %p143 = por %p141, %p142
      %p145 = scmp.ne.s32.totalorder %s128, %s144
      %p146 = scmp.eq.s32.totalorder %s26, 0
      %p147 = por %p145, %p146
      %p148 = scmp.le.s32.totalorder 1, %s20
      %p149 = scmp.lt.s32.totalorder %s20, 3
      %p150 = pnand %p148, %p149
      %p151 = pneg %p150
      // Predicated region
      $region9: #{_lambda_.7} parent=5 // pred_check
        _
      $region10: #{_lambda_.7} parent=5 // pred_check_branch
        %153 = sbr.rel (%p150) target = $region12
      $region11: #{_lambda_.7} parent=5 // pred_region
        %s154 = ssub.s32 %s20, 1
        // Predicated region
        $region13: #{_lambda_.7} parent=11 // pred_check
          %p155 = pneg %p67
        $region14: #{_lambda_.7} parent=11 // pred_check_branch
          %157 = sbr.rel (%p155) target = $region16
        $region15: #{_lambda_.7} parent=11 // pred_region
          %s159 = ssub.s32 576, 576
          %160 = vsyncadd [#allocation6], %s159
          %s161 = sshll.u32 [#allocation5], 4
          %s162 = int_to_ptr.vmem [resolvable:$true] %s161
          %167 = dma.hbm_to_vmem [thread:$0]  %s1, 576, %s162, [#allocation6], 64, 64, 4
        $region16: #{_lambda_.7} parent=11 // pred_fallthru
          _
        // Predicated region
        $region17: #{_lambda_.7} parent=11 // pred_check
          %p168 = pneg %p88
        $region18: #{_lambda_.7} parent=11 // pred_check_branch
          %170 = sbr.rel (%p168) target = $region20
        $region19: #{_lambda_.7} parent=11 // pred_region
          %s172 = ssub.s32 32, 32
          %173 = vsyncadd [#allocation6], %s172
          %s175 = sshll.u32 [#allocation7], 4
          %s176 = int_to_ptr.vmem [resolvable:$true] %s175
          %178 = dma.hbm_to_vmem [thread:$0]  %s2, 32, %s176, [#allocation6]
        $region20: #{_lambda_.7} parent=11 // pred_fallthru
          _
      $region12: #{_lambda_.7} parent=5 // pred_fallthru
        _
      %p179 = scmp.lt.s32.totalorder %s20, 2
      // Predicated region
      $region21: #{_lambda_.7} parent=5 // pred_check
        %p180 = pneg %p179
      $region22: #{_lambda_.7} parent=5 // pred_check_branch
        %182 = sbr.rel (%p180) target = $region24
      $region23: #{_lambda_.7} parent=5 // pred_region
        // Predicated region
        $region25: #{_lambda_.7} parent=23 // pred_check
          %p183 = pneg %p40
        $region26: #{_lambda_.7} parent=23 // pred_check_branch
          %185 = sbr.rel (%p183) target = $region28
        $region27: #{_lambda_.7} parent=23 // pred_region
          %s186 = sand.u32 %s30, 1
          %s187 = scalar_lea.sflag [#allocation3], %s186
          %s188 = sand.u32 %s30, 1
          %s189 = smul.addr %s188, 128
          %s190 = scalar_lea.vmem [#allocation2], %s189
          %s191 = smul.u32 32, %s20
          %s193 = ssub.s32 2048, 2048
          %194 = vsyncadd %s187, %s193
          %s195 = smul.addr %s191, 64
          %s196 = scalar_lea.hbm %s0, %s195
          %s197 = sshll.u32 %s190, 4
          %s198 = int_to_ptr.vmem [resolvable:$true] %s197
          %203 = dma.hbm_to_vmem [thread:$0]  %s196, 2048, %s198, %s187, 64, 64, 4
        $region28: #{_lambda_.7} parent=23 // pred_fallthru
          _
        // Predicated region
        $region29: #{_lambda_.7} parent=23 // pred_check
          %p204 = pneg %p108
        $region30: #{_lambda_.7} parent=23 // pred_check_branch
          %206 = sbr.rel (%p204) target = $region32
        $region31: #{_lambda_.7} parent=23 // pred_region
          %s207 = sand.u32 %s98, 1
          %s208 = scalar_lea.sflag [#allocation9], %s207
          %s209 = sand.u32 %s98, 1
          %s210 = smul.addr %s209, 128
          %s211 = scalar_lea.vmem [#allocation8], %s210
          %s212 = smul.u32 32, %s20
          %s214 = ssub.s32 2048, 2048
          %215 = vsyncadd %s208, %s214
          %s216 = smul.addr %s212, 64
          %s217 = scalar_lea.hbm %s3, %s216
          %s218 = sshll.u32 %s211, 4
          %s219 = int_to_ptr.vmem [resolvable:$true] %s218
          %224 = dma.hbm_to_vmem [thread:$0]  %s217, 2048, %s219, %s208, 64, 64, 4
        $region32: #{_lambda_.7} parent=23 // pred_fallthru
          _
      $region24: #{_lambda_.7} parent=5 // pred_fallthru
        _
      %p225 = scmp.le.s32.totalorder 1, %s20
      %p226 = scmp.lt.s32.totalorder %s20, 3
      %p227 = pnand %p225, %p226
      %p228 = pneg %p227
      // Predicated region
      $region33: #{_lambda_.7} parent=5 // pred_check
        _
      $region34: #{_lambda_.7} parent=5 // pred_check_branch
        %230 = sbr.rel (%p227) target = $region36
      $region35: #{_lambda_.7} parent=5 // pred_region
        %s231 = ssub.s32 %s20, 1
        %s232 = sand.u32 %s33, 1
        %s233 = scalar_lea.sflag [#allocation3], %s232
        %s234 = sand.u32 %s33, 1
        %s235 = smul.addr %s234, 128
        %s236 = scalar_lea.vmem [#allocation2], %s235
        // Predicated region
        $region37: #{_lambda_.7} parent=35 // pred_check
          %p237 = pneg %p46
        $region38: #{_lambda_.7} parent=35 // pred_check_branch
          %239 = sbr.rel (%p237) target = $region40
        $region39: #{_lambda_.7} parent=35 // pred_region
          %240 = dma.done %s233, 2048
        $region40: #{_lambda_.7} parent=35 // pred_fallthru
          _
        // Predicated region
        $region41: #{_lambda_.7} parent=35 // pred_check
          %p241 = pneg %p67
        $region42: #{_lambda_.7} parent=35 // pred_check_branch
          %243 = sbr.rel (%p241) target = $region44
        $region43: #{_lambda_.7} parent=35 // pred_region
          %244 = dma.done [#allocation6], 576
        $region44: #{_lambda_.7} parent=35 // pred_fallthru
          _
        // Predicated region
        $region45: #{_lambda_.7} parent=35 // pred_check
          %p245 = pneg %p88
        $region46: #{_lambda_.7} parent=35 // pred_check_branch
          %247 = sbr.rel (%p245) target = $region48
        $region47: #{_lambda_.7} parent=35 // pred_region
          %248 = dma.done [#allocation6], 32
        $region48: #{_lambda_.7} parent=35 // pred_fallthru
          _
        %s249 = sand.u32 %s101, 1
        %s250 = scalar_lea.sflag [#allocation9], %s249
        %s251 = sand.u32 %s101, 1
        %s252 = smul.addr %s251, 128
        %s253 = scalar_lea.vmem [#allocation8], %s252
        // Predicated region
        $region49: #{_lambda_.7} parent=35 // pred_check
          %p254 = pneg %p114
        $region50: #{_lambda_.7} parent=35 // pred_check_branch
          %256 = sbr.rel (%p254) target = $region52
        $region51: #{_lambda_.7} parent=35 // pred_region
          %257 = dma.done %s250, 2048
        $region52: #{_lambda_.7} parent=35 // pred_fallthru
          _
        %s258 = sand.u32 %s33, 1
        %s259 = scalar_lea.sflag [#allocation3], %s258
        %s260 = sand.u32 %s33, 1
        %s261 = smul.addr %s260, 128
        %s262 = scalar_lea.vmem [#allocation2], %s261
        %p263 = pneg %p46
        %p264 = pneg %p43
        %p265 = pneg %p67
        %p266 = pneg %p64
        %p267 = pneg %p88
        %p268 = pneg %p85
        %s269 = sand.u32 %s101, 1
        %s270 = scalar_lea.sflag [#allocation9], %s269
        %s271 = sand.u32 %s101, 1
        %s272 = smul.addr %s271, 128
        %s273 = scalar_lea.vmem [#allocation8], %s272
        %p274 = pneg %p114
        %p275 = pneg %p111
        %p276 = pneg %p140
        %p277 = pneg %p137
        %s278 = sand.u32 %s127, 1
        %s279 = scalar_lea.sflag [#allocation4], %s278
        %s280 = sand.u32 %s127, 1
        %s281 = smul.addr %s280, 256
        %s282 = scalar_lea.vmem [#allocation10], %s281
        %s283 = smul.u32 32, %s25
        %s284 = smul.u32 32, %s25
        %s285 = smul.u32 32, %s25
        %v287 = vld [vmem:[%s236] sm:$0xf]
        %v288 = vld [vmem:[%s236 + $0x4] sm:$0xf]
        %v289 = vld [vmem:[%s236 + $0x8] sm:$0xf]
        %v290 = vld [vmem:[%s236 + $0xc] sm:$0xf]
        %v291 = vld [vmem:[%s236 + $0x10] sm:$0xf]
        %v292 = vld [vmem:[%s236 + $0x14] sm:$0xf]
        %v293 = vld [vmem:[%s236 + $0x18] sm:$0xf]
        %v294 = vld [vmem:[%s236 + $0x1c] sm:$0xf]
        %v295 = vld [vmem:[%s236 + $0x20] sm:$0xf]
        %v296 = vld [vmem:[%s236 + $0x24] sm:$0xf]
        %v297 = vld [vmem:[%s236 + $0x28] sm:$0xf]
        %v298 = vld [vmem:[%s236 + $0x2c] sm:$0xf]
        %v299 = vld [vmem:[%s236 + $0x30] sm:$0xf]
        %v300 = vld [vmem:[%s236 + $0x34] sm:$0xf]
        %v301 = vld [vmem:[%s236 + $0x38] sm:$0xf]
        %v302 = vld [vmem:[%s236 + $0x3c] sm:$0xf]
        %v303 = vld [vmem:[%s236 + $0x40] sm:$0xf]
        %v304 = vld [vmem:[%s236 + $0x44] sm:$0xf]
        %v305 = vld [vmem:[%s236 + $0x48] sm:$0xf]
        %v306 = vld [vmem:[%s236 + $0x4c] sm:$0xf]
        %v307 = vld [vmem:[%s236 + $0x50] sm:$0xf]
        %v308 = vld [vmem:[%s236 + $0x54] sm:$0xf]
        %v309 = vld [vmem:[%s236 + $0x58] sm:$0xf]
        %v310 = vld [vmem:[%s236 + $0x5c] sm:$0xf]
        %v311 = vld [vmem:[%s236 + $0x60] sm:$0xf]
        %v312 = vld [vmem:[%s236 + $0x64] sm:$0xf]
        %v313 = vld [vmem:[%s236 + $0x68] sm:$0xf]
        %v314 = vld [vmem:[%s236 + $0x6c] sm:$0xf]
        %v315 = vld [vmem:[%s236 + $0x70] sm:$0xf]
        %v316 = vld [vmem:[%s236 + $0x74] sm:$0xf]
        %v317 = vld [vmem:[%s236 + $0x78] sm:$0xf]
        %v318 = vld [vmem:[%s236 + $0x7c] sm:$0xf]
        %v319 = vld [vmem:[#allocation5] sm:$0xf]
        %v320 = vld [vmem:[#allocation5 + $0x4] sm:$0xf]
        %v321 = vld [vmem:[#allocation5 + $0x8] sm:$0xf]
        %v322 = vld [vmem:[#allocation5 + $0xc] sm:$0xf]
        %v323 = vld [vmem:[#allocation5 + $0x10] sm:$0xf]
        %v324 = vld [vmem:[#allocation5 + $0x14] sm:$0xf]
        %v325 = vld [vmem:[#allocation5 + $0x18] sm:$0xf]
        %v326 = vld [vmem:[#allocation5 + $0x1c] sm:$0xf]
        %v327 = vld [vmem:[#allocation5 + $0x20] sm:$0xf]
        %v328 = vld [vmem:[#allocation7] sm:$0x1]
        %v329 = vlaneseq
        %v330 = vshrl.u32 %v329, 7
        %v331 = vsub.s32 0, %v330
        %v332 = vrot.slane %v328, %v331
        %v365 = vunpack.c.l.b16 %v287
        %v366 = vunpack.c.l.b16 %v288
        %v367 = vunpack.c.l.b16 %v289
        %v368 = vunpack.c.l.b16 %v290
        %v369 = vunpack.c.l.b16 %v291
        %v370 = vunpack.c.l.b16 %v292
        %v371 = vunpack.c.l.b16 %v293
        %v372 = vunpack.c.l.b16 %v294
        %v373 = vunpack.c.l.b16 %v295
        %v374 = vunpack.c.l.b16 %v296
        %v375 = vunpack.c.l.b16 %v297
        %v376 = vunpack.c.l.b16 %v298
        %v377 = vunpack.c.l.b16 %v299
        %v378 = vunpack.c.l.b16 %v300
        %v379 = vunpack.c.l.b16 %v301
        %v380 = vunpack.c.l.b16 %v302
        %v381 = vunpack.c.l.b16 %v303
        %v382 = vunpack.c.l.b16 %v304
        %v383 = vunpack.c.l.b16 %v305
        %v384 = vunpack.c.l.b16 %v306
        %v385 = vunpack.c.l.b16 %v307
        %v386 = vunpack.c.l.b16 %v308
        %v387 = vunpack.c.l.b16 %v309
        %v388 = vunpack.c.l.b16 %v310
        %v389 = vunpack.c.l.b16 %v311
        %v390 = vunpack.c.l.b16 %v312
        %v391 = vunpack.c.l.b16 %v313
        %v392 = vunpack.c.l.b16 %v314
        %v393 = vunpack.c.l.b16 %v315
        %v394 = vunpack.c.l.b16 %v316
        %v395 = vunpack.c.l.b16 %v317
        %v396 = vunpack.c.l.b16 %v318
        %v397 = vpack.c.b16 %v366, %v365
        %v398 = vpack.c.b16 %v368, %v367
        %v399 = vpack.c.b16 %v370, %v369
        %v400 = vpack.c.b16 %v372, %v371
        %v401 = vpack.c.b16 %v374, %v373
        %v402 = vpack.c.b16 %v376, %v375
        %v403 = vpack.c.b16 %v378, %v377
        %v404 = vpack.c.b16 %v380, %v379
        %v405 = vpack.c.b16 %v382, %v381
        %v406 = vpack.c.b16 %v384, %v383
        %v407 = vpack.c.b16 %v386, %v385
        %v408 = vpack.c.b16 %v388, %v387
        %v409 = vpack.c.b16 %v390, %v389
        %v410 = vpack.c.b16 %v392, %v391
        %v411 = vpack.c.b16 %v394, %v393
        %v412 = vpack.c.b16 %v396, %v395
        %v422 = vunpack.c.l.b16 %v319
        %v423 = vunpack.c.l.b16 %v320
        %v424 = vunpack.c.l.b16 %v321
        %v425 = vunpack.c.l.b16 %v322
        %v426 = vunpack.c.l.b16 %v323
        %v427 = vunpack.c.l.b16 %v324
        %v428 = vunpack.c.l.b16 %v325
        %v429 = vunpack.c.l.b16 %v326
        %v430 = vunpack.c.l.b16 %v327
        %v431 = vpack.c.b16 %v423, %v422
        %v432 = vpack.c.b16 %v425, %v424
        %v433 = vpack.c.b16 %v427, %v426
        %v434 = vpack.c.b16 %v429, %v428
        %v435 = vpack.c.b16 %v430, %v430
        %vm440 = vcmask 588800
        %v442 = vsel %vm440, %v397, 0
        %v445 = vsel %vm440, %v398, 0
        %v448 = vsel %vm440, %v399, 0
        %v451 = vsel %vm440, %v400, 0
        %v454 = vsel %vm440, %v401, 0
        %v457 = vsel %vm440, %v402, 0
        %v460 = vsel %vm440, %v403, 0
        %v463 = vsel %vm440, %v404, 0
        %v466 = vsel %vm440, %v405, 0
        %v469 = vsel %vm440, %v406, 0
        %v472 = vsel %vm440, %v407, 0
        %v475 = vsel %vm440, %v408, 0
        %v478 = vsel %vm440, %v409, 0
        %v481 = vsel %vm440, %v410, 0
        %v484 = vsel %vm440, %v411, 0
        %v487 = vsel %vm440, %v412, 0
        %vm489 = vcmask 1043456
        %v491 = vsel %vm489, %v435, 0
        %493 = vmatprep.subr.bf16.mxu0 0
        %494 = vmatpush1.bf16.msra.mxu0 %v431
        %495 = vmatprep.subr.bf16.mxu0 0
        %496 = vmatpush1.bf16.msra.mxu0 %v432
        %497 = vmatprep.subr.bf16.mxu0 0
        %498 = vmatpush1.bf16.msra.mxu0 %v433
        %499 = vmatprep.subr.bf16.mxu0 0
        %500 = vmatpush1.bf16.msra.mxu0 %v434
        %501 = vmatprep.subr.bf16.mxu0 0
        %502 = vmatpush1.bf16.msra.mxu0 %v491
        %503 = vmatprep.subr.bf16.mxu0 0
        %504 = vmatpush1.bf16.msra.mxu0 0
        %505 = vmatprep.subr.bf16.mxu0 0
        %506 = vmatpush1.bf16.msra.mxu0 0
        %507 = vmatprep.subr.bf16.mxu0 0
        %508 = vmatpush1.bf16.msra.mxu0 0
        %509 = vmatprep.subr.bf16.mxu0 0
        %510 = vmatpush1.bf16.msra.mxu0 0
        %511 = vmatprep.subr.bf16.mxu0 0
        %512 = vmatpush1.bf16.msra.mxu0 0
        %513 = vmatprep.subr.bf16.mxu0 0
        %514 = vmatpush1.bf16.msra.mxu0 0
        %515 = vmatprep.subr.bf16.mxu0 0
        %516 = vmatpush1.bf16.msra.mxu0 0
        %517 = vmatprep.subr.bf16.mxu0 0
        %518 = vmatpush1.bf16.msra.mxu0 0
        %519 = vmatprep.subr.bf16.mxu0 0
        %520 = vmatpush1.bf16.msra.mxu0 0
        %521 = vmatprep.subr.bf16.mxu0 0
        %522 = vmatpush1.bf16.msra.mxu0 0
        %523 = vmatprep.subr.bf16.mxu0 0
        %524 = vmatpush1.bf16.msra.mxu0 0
        %525 = vmatprep.mubr.bf16.mxu0 0
        %526 = vmatmul.mubr.bf16.gmra.mrb[0].mxu0 %v442
        %v527 = vpop.f32.mrb[0].mxu0
        %v528 = vadd.f32 %v332, %v527
        %v529 = vpop.f32.mrb[0].mxu0
        %v530 = vpop.f32.mrb[0].mxu0
        %v531 = vadd.f32 %v332, %v530
        %v532 = vpop.f32.mrb[0].mxu0
        %533 = vmatprep.mubr.bf16.mxu0 0
        %534 = vmatmul.mubr.bf16.gmra.mrb[0].mxu0 %v445
        %v535 = vpop.f32.mrb[0].mxu0
        %v536 = vadd.f32 %v332, %v535
        %v537 = vpop.f32.mrb[0].mxu0
        %v538 = vpop.f32.mrb[0].mxu0
        %v539 = vadd.f32 %v332, %v538
        %v540 = vpop.f32.mrb[0].mxu0
        %541 = vmatprep.mubr.bf16.mxu0 0
        %542 = vmatmul.mubr.bf16.gmra.mrb[0].mxu0 %v448
        %v543 = vpop.f32.mrb[0].mxu0
        %v544 = vadd.f32 %v332, %v543
        %v545 = vpop.f32.mrb[0].mxu0
        %v546 = vpop.f32.mrb[0].mxu0
        %v547 = vadd.f32 %v332, %v546
        %v548 = vpop.f32.mrb[0].mxu0
        %549 = vmatprep.mubr.bf16.mxu0 0
        %550 = vmatmul.mubr.bf16.gmra.mrb[0].mxu0 %v451
        %v551 = vpop.f32.mrb[0].mxu0
        %v552 = vadd.f32 %v332, %v551
        %v553 = vpop.f32.mrb[0].mxu0
        %v554 = vpop.f32.mrb[0].mxu0
        %v555 = vadd.f32 %v332, %v554
        %v556 = vpop.f32.mrb[0].mxu0
        %557 = vmatprep.mubr.bf16.mxu0 0
        %558 = vmatmul.mubr.bf16.gmra.mrb[0].mxu0 %v454
        %v559 = vpop.f32.mrb[0].mxu0
        %v560 = vadd.f32 %v332, %v559
        %v561 = vpop.f32.mrb[0].mxu0
        %v562 = vpop.f32.mrb[0].mxu0
        %v563 = vadd.f32 %v332, %v562
        %v564 = vpop.f32.mrb[0].mxu0
        %565 = vmatprep.mubr.bf16.mxu0 0
        %566 = vmatmul.mubr.bf16.gmra.mrb[0].mxu0 %v457
        %v567 = vpop.f32.mrb[0].mxu0
        %v568 = vadd.f32 %v332, %v567
        %v569 = vpop.f32.mrb[0].mxu0
        %v570 = vpop.f32.mrb[0].mxu0
        %v571 = vadd.f32 %v332, %v570
        %v572 = vpop.f32.mrb[0].mxu0
        %573 = vmatprep.mubr.bf16.mxu0 0
        %574 = vmatmul.mubr.bf16.gmra.mrb[0].mxu0 %v460
        %v575 = vpop.f32.mrb[0].mxu0
        %v576 = vadd.f32 %v332, %v575
        %v577 = vpop.f32.mrb[0].mxu0
        %v578 = vpop.f32.mrb[0].mxu0
        %v579 = vadd.f32 %v332, %v578
        %v580 = vpop.f32.mrb[0].mxu0
        %581 = vmatprep.mubr.bf16.mxu0 0
        %582 = vmatmul.mubr.bf16.gmra.mrb[0].mxu0 %v463
        %v583 = vpop.f32.mrb[0].mxu0
        %v584 = vadd.f32 %v332, %v583
        %v585 = vpop.f32.mrb[0].mxu0
        %v586 = vpop.f32.mrb[0].mxu0
        %v587 = vadd.f32 %v332, %v586
        %v588 = vpop.f32.mrb[0].mxu0
        %589 = vmatprep.mubr.bf16.mxu0 0
        %590 = vmatmul.mubr.bf16.gmra.mrb[0].mxu0 %v466
        %v591 = vpop.f32.mrb[0].mxu0
        %v592 = vadd.f32 %v332, %v591
        %v593 = vpop.f32.mrb[0].mxu0
        %v594 = vpop.f32.mrb[0].mxu0
        %v595 = vadd.f32 %v332, %v594
        %v596 = vpop.f32.mrb[0].mxu0
        %597 = vmatprep.mubr.bf16.mxu0 0
        %598 = vmatmul.mubr.bf16.gmra.mrb[0].mxu0 %v469
        %v599 = vpop.f32.mrb[0].mxu0
        %v600 = vadd.f32 %v332, %v599
        %v601 = vpop.f32.mrb[0].mxu0
        %v602 = vpop.f32.mrb[0].mxu0
        %v603 = vadd.f32 %v332, %v602
        %v604 = vpop.f32.mrb[0].mxu0
        %605 = vmatprep.mubr.bf16.mxu0 0
        %606 = vmatmul.mubr.bf16.gmra.mrb[0].mxu0 %v472
        %v607 = vpop.f32.mrb[0].mxu0
        %v608 = vadd.f32 %v332, %v607
        %v609 = vpop.f32.mrb[0].mxu0
        %v610 = vpop.f32.mrb[0].mxu0
        %v611 = vadd.f32 %v332, %v610
        %v612 = vpop.f32.mrb[0].mxu0
        %613 = vmatprep.mubr.bf16.mxu0 0
        %614 = vmatmul.mubr.bf16.gmra.mrb[0].mxu0 %v475
        %v615 = vpop.f32.mrb[0].mxu0
        %v616 = vadd.f32 %v332, %v615
        %v617 = vpop.f32.mrb[0].mxu0
        %v618 = vpop.f32.mrb[0].mxu0
        %v619 = vadd.f32 %v332, %v618
        %v620 = vpop.f32.mrb[0].mxu0
        %621 = vmatprep.mubr.bf16.mxu0 0
        %622 = vmatmul.mubr.bf16.gmra.mrb[0].mxu0 %v478
        %v623 = vpop.f32.mrb[0].mxu0
        %v624 = vadd.f32 %v332, %v623
        %v625 = vpop.f32.mrb[0].mxu0
        %v626 = vpop.f32.mrb[0].mxu0
        %v627 = vadd.f32 %v332, %v626
        %v628 = vpop.f32.mrb[0].mxu0
        %629 = vmatprep.mubr.bf16.mxu0 0
        %630 = vmatmul.mubr.bf16.gmra.mrb[0].mxu0 %v481
        %v631 = vpop.f32.mrb[0].mxu0
        %v632 = vadd.f32 %v332, %v631
        %v633 = vpop.f32.mrb[0].mxu0
        %v634 = vpop.f32.mrb[0].mxu0
        %v635 = vadd.f32 %v332, %v634
        %v636 = vpop.f32.mrb[0].mxu0
        %637 = vmatprep.mubr.bf16.mxu0 0
        %638 = vmatmul.mubr.bf16.gmra.mrb[0].mxu0 %v484
        %v639 = vpop.f32.mrb[0].mxu0
        %v640 = vadd.f32 %v332, %v639
        %v641 = vpop.f32.mrb[0].mxu0
        %v642 = vpop.f32.mrb[0].mxu0
        %v643 = vadd.f32 %v332, %v642
        %v644 = vpop.f32.mrb[0].mxu0
        %645 = vmatprep.mubr.bf16.mxu0 0
        %646 = vmatmul.mubr.bf16.gmra.mrb[0].mxu0 %v487
        %v647 = vpop.f32.mrb[0].mxu0
        %v648 = vadd.f32 %v332, %v647
        %v649 = vpop.f32.mrb[0].mxu0
        %v650 = vpop.f32.mrb[0].mxu0
        %v651 = vadd.f32 %v332, %v650
        %v652 = vpop.f32.mrb[0].mxu0
        %653 = vdwg.mxu0
        %vm654 = vcmp.ge.f32.partialorder %v528, 0.0
        %vm655 = vcmp.ge.f32.partialorder %v531, 0.0
        %vm656 = vcmp.ge.f32.partialorder %v536, 0.0
        %vm657 = vcmp.ge.f32.partialorder %v539, 0.0
        %vm658 = vcmp.ge.f32.partialorder %v544, 0.0
        %vm659 = vcmp.ge.f32.partialorder %v547, 0.0
        %vm660 = vcmp.ge.f32.partialorder %v552, 0.0
        %vm661 = vcmp.ge.f32.partialorder %v555, 0.0
        %vm662 = vcmp.ge.f32.partialorder %v560, 0.0
        %vm663 = vcmp.ge.f32.partialorder %v563, 0.0
        %vm664 = vcmp.ge.f32.partialorder %v568, 0.0
        %vm665 = vcmp.ge.f32.partialorder %v571, 0.0
        %vm666 = vcmp.ge.f32.partialorder %v576, 0.0
        %vm667 = vcmp.ge.f32.partialorder %v579, 0.0
        %vm668 = vcmp.ge.f32.partialorder %v584, 0.0
        %vm669 = vcmp.ge.f32.partialorder %v587, 0.0
        %vm670 = vcmp.ge.f32.partialorder %v592, 0.0
        %vm671 = vcmp.ge.f32.partialorder %v595, 0.0
        %vm672 = vcmp.ge.f32.partialorder %v600, 0.0
        %vm673 = vcmp.ge.f32.partialorder %v603, 0.0
        %vm674 = vcmp.ge.f32.partialorder %v608, 0.0
        %vm675 = vcmp.ge.f32.partialorder %v611, 0.0
        %vm676 = vcmp.ge.f32.partialorder %v616, 0.0
        %vm677 = vcmp.ge.f32.partialorder %v619, 0.0
        %vm678 = vcmp.ge.f32.partialorder %v624, 0.0
        %vm679 = vcmp.ge.f32.partialorder %v627, 0.0
        %vm680 = vcmp.ge.f32.partialorder %v632, 0.0
        %vm681 = vcmp.ge.f32.partialorder %v635, 0.0
        %vm682 = vcmp.ge.f32.partialorder %v640, 0.0
        %vm683 = vcmp.ge.f32.partialorder %v643, 0.0
        %vm684 = vcmp.ge.f32.partialorder %v648, 0.0
        %vm685 = vcmp.ge.f32.partialorder %v651, 0.0
        %v686 = vld [vmem:[#allocation7 + $0x1] sm:$0x1]
        %v687 = vlaneseq
        %v688 = vshrl.u32 %v687, 7
        %v689 = vsub.s32 0, %v688
        %v690 = vrot.slane %v686, %v689
        %v691 = vmul.f32 %v690, %v528
        %v692 = vmul.f32 %v690, %v531
        %v693 = vmul.f32 %v690, %v536
        %v694 = vmul.f32 %v690, %v539
        %v695 = vmul.f32 %v690, %v544
        %v696 = vmul.f32 %v690, %v547
        %v697 = vmul.f32 %v690, %v552
        %v698 = vmul.f32 %v690, %v555
        %v699 = vmul.f32 %v690, %v560
        %v700 = vmul.f32 %v690, %v563
        %v701 = vmul.f32 %v690, %v568
        %v702 = vmul.f32 %v690, %v571
        %v703 = vmul.f32 %v690, %v576
        %v704 = vmul.f32 %v690, %v579
        %v705 = vmul.f32 %v690, %v584
        %v706 = vmul.f32 %v690, %v587
        %v707 = vmul.f32 %v690, %v592
        %v708 = vmul.f32 %v690, %v595
        %v709 = vmul.f32 %v690, %v600
        %v710 = vmul.f32 %v690, %v603
        %v711 = vmul.f32 %v690, %v608
        %v712 = vmul.f32 %v690, %v611
        %v713 = vmul.f32 %v690, %v616
        %v714 = vmul.f32 %v690, %v619
        %v715 = vmul.f32 %v690, %v624
        %v716 = vmul.f32 %v690, %v627
        %v717 = vmul.f32 %v690, %v632
        %v718 = vmul.f32 %v690, %v635
        %v719 = vmul.f32 %v690, %v640
        %v720 = vmul.f32 %v690, %v643
        %v721 = vmul.f32 %v690, %v648
        %v722 = vmul.f32 %v690, %v651
        %v723 = vsel %vm654, %v528, %v691
        %v724 = vsel %vm655, %v531, %v692
        %v725 = vsel %vm656, %v536, %v693
        %v726 = vsel %vm657, %v539, %v694
        %v727 = vsel %vm658, %v544, %v695
        %v728 = vsel %vm659, %v547, %v696
        %v729 = vsel %vm660, %v552, %v697
        %v730 = vsel %vm661, %v555, %v698
        %v731 = vsel %vm662, %v560, %v699
        %v732 = vsel %vm663, %v563, %v700
        %v733 = vsel %vm664, %v568, %v701
        %v734 = vsel %vm665, %v571, %v702
        %v735 = vsel %vm666, %v576, %v703
        %v736 = vsel %vm667, %v579, %v704
        %v737 = vsel %vm668, %v584, %v705
        %v738 = vsel %vm669, %v587, %v706
        %v739 = vsel %vm670, %v592, %v707
        %v740 = vsel %vm671, %v595, %v708
        %v741 = vsel %vm672, %v600, %v709
        %v742 = vsel %vm673, %v603, %v710
        %v743 = vsel %vm674, %v608, %v711
        %v744 = vsel %vm675, %v611, %v712
        %v745 = vsel %vm676, %v616, %v713
        %v746 = vsel %vm677, %v619, %v714
        %v747 = vsel %vm678, %v624, %v715
        %v748 = vsel %vm679, %v627, %v716
        %v749 = vsel %vm680, %v632, %v717
        %v750 = vsel %vm681, %v635, %v718
        %v751 = vsel %vm682, %v640, %v719
        %v752 = vsel %vm683, %v643, %v720
        %v753 = vsel %vm684, %v648, %v721
        %v754 = vsel %vm685, %v651, %v722
        %v755 = vld [vmem:[%s253] sm:$0xf]
        %v756 = vld [vmem:[%s253 + $0x4] sm:$0xf]
        %v757 = vld [vmem:[%s253 + $0x8] sm:$0xf]
        %v758 = vld [vmem:[%s253 + $0xc] sm:$0xf]
        %v759 = vld [vmem:[%s253 + $0x10] sm:$0xf]
        %v760 = vld [vmem:[%s253 + $0x14] sm:$0xf]
        %v761 = vld [vmem:[%s253 + $0x18] sm:$0xf]
        %v762 = vld [vmem:[%s253 + $0x1c] sm:$0xf]
        %v763 = vld [vmem:[%s253 + $0x20] sm:$0xf]
        %v764 = vld [vmem:[%s253 + $0x24] sm:$0xf]
        %v765 = vld [vmem:[%s253 + $0x28] sm:$0xf]
        %v766 = vld [vmem:[%s253 + $0x2c] sm:$0xf]
        %v767 = vld [vmem:[%s253 + $0x30] sm:$0xf]
        %v768 = vld [vmem:[%s253 + $0x34] sm:$0xf]
        %v769 = vld [vmem:[%s253 + $0x38] sm:$0xf]
        %v770 = vld [vmem:[%s253 + $0x3c] sm:$0xf]
        %v771 = vld [vmem:[%s253 + $0x40] sm:$0xf]
        %v772 = vld [vmem:[%s253 + $0x44] sm:$0xf]
        %v773 = vld [vmem:[%s253 + $0x48] sm:$0xf]
        %v774 = vld [vmem:[%s253 + $0x4c] sm:$0xf]
        %v775 = vld [vmem:[%s253 + $0x50] sm:$0xf]
        %v776 = vld [vmem:[%s253 + $0x54] sm:$0xf]
        %v777 = vld [vmem:[%s253 + $0x58] sm:$0xf]
        %v778 = vld [vmem:[%s253 + $0x5c] sm:$0xf]
        %v779 = vld [vmem:[%s253 + $0x60] sm:$0xf]
        %v780 = vld [vmem:[%s253 + $0x64] sm:$0xf]
        %v781 = vld [vmem:[%s253 + $0x68] sm:$0xf]
        %v782 = vld [vmem:[%s253 + $0x6c] sm:$0xf]
        %v783 = vld [vmem:[%s253 + $0x70] sm:$0xf]
        %v784 = vld [vmem:[%s253 + $0x74] sm:$0xf]
        %v785 = vld [vmem:[%s253 + $0x78] sm:$0xf]
        %v786 = vld [vmem:[%s253 + $0x7c] sm:$0xf]
        %v787 = vunpack.c.l.bf16 %v755
        %v788 = vunpack.c.l.bf16 %v756
        %v789 = vunpack.c.l.bf16 %v757
        %v790 = vunpack.c.l.bf16 %v758
        %v791 = vunpack.c.l.bf16 %v759
        %v792 = vunpack.c.l.bf16 %v760
        %v793 = vunpack.c.l.bf16 %v761
        %v794 = vunpack.c.l.bf16 %v762
        %v795 = vunpack.c.l.bf16 %v763
        %v796 = vunpack.c.l.bf16 %v764
        %v797 = vunpack.c.l.bf16 %v765
        %v798 = vunpack.c.l.bf16 %v766
        %v799 = vunpack.c.l.bf16 %v767
        %v800 = vunpack.c.l.bf16 %v768
        %v801 = vunpack.c.l.bf16 %v769
        %v802 = vunpack.c.l.bf16 %v770
        %v803 = vunpack.c.l.bf16 %v771
        %v804 = vunpack.c.l.bf16 %v772
        %v805 = vunpack.c.l.bf16 %v773
        %v806 = vunpack.c.l.bf16 %v774
        %v807 = vunpack.c.l.bf16 %v775
        %v808 = vunpack.c.l.bf16 %v776
        %v809 = vunpack.c.l.bf16 %v777
        %v810 = vunpack.c.l.bf16 %v778
        %v811 = vunpack.c.l.bf16 %v779
        %v812 = vunpack.c.l.bf16 %v780
        %v813 = vunpack.c.l.bf16 %v781
        %v814 = vunpack.c.l.bf16 %v782
        %v815 = vunpack.c.l.bf16 %v783
        %v816 = vunpack.c.l.bf16 %v784
        %v817 = vunpack.c.l.bf16 %v785
        %v818 = vunpack.c.l.bf16 %v786
        %v819 = vadd.f32 %v723, %v787
        %v820 = vadd.f32 %v724, %v788
        %v821 = vadd.f32 %v725, %v789
        %v822 = vadd.f32 %v726, %v790
        %v823 = vadd.f32 %v727, %v791
        %v824 = vadd.f32 %v728, %v792
        %v825 = vadd.f32 %v729, %v793
        %v826 = vadd.f32 %v730, %v794
        %v827 = vadd.f32 %v731, %v795
        %v828 = vadd.f32 %v732, %v796
        %v829 = vadd.f32 %v733, %v797
        %v830 = vadd.f32 %v734, %v798
        %v831 = vadd.f32 %v735, %v799
        %v832 = vadd.f32 %v736, %v800
        %v833 = vadd.f32 %v737, %v801
        %v834 = vadd.f32 %v738, %v802
        %v835 = vadd.f32 %v739, %v803
        %v836 = vadd.f32 %v740, %v804
        %v837 = vadd.f32 %v741, %v805
        %v838 = vadd.f32 %v742, %v806
        %v839 = vadd.f32 %v743, %v807
        %v840 = vadd.f32 %v744, %v808
        %v841 = vadd.f32 %v745, %v809
        %v842 = vadd.f32 %v746, %v810
        %v843 = vadd.f32 %v747, %v811
        %v844 = vadd.f32 %v748, %v812
        %v845 = vadd.f32 %v749, %v813
        %v846 = vadd.f32 %v750, %v814
        %v847 = vadd.f32 %v751, %v815
        %v848 = vadd.f32 %v752, %v816
        %v849 = vadd.f32 %v753, %v817
        %v850 = vadd.f32 %v754, %v818
        %851 = vst [vmem:[%s282] sm:$0xff] %v819
        %852 = vst [vmem:[%s282 + $0x8] sm:$0xff] %v820
        %853 = vst [vmem:[%s282 + $0x10] sm:$0xff] %v821
        %854 = vst [vmem:[%s282 + $0x18] sm:$0xff] %v822
        %855 = vst [vmem:[%s282 + $0x20] sm:$0xff] %v823
        %856 = vst [vmem:[%s282 + $0x28] sm:$0xff] %v824
        %857 = vst [vmem:[%s282 + $0x30] sm:$0xff] %v825
        %858 = vst [vmem:[%s282 + $0x38] sm:$0xff] %v826
        %859 = vst [vmem:[%s282 + $0x40] sm:$0xff] %v827
        %860 = vst [vmem:[%s282 + $0x48] sm:$0xff] %v828
        %861 = vst [vmem:[%s282 + $0x50] sm:$0xff] %v829
        %862 = vst [vmem:[%s282 + $0x58] sm:$0xff] %v830
        %863 = vst [vmem:[%s282 + $0x60] sm:$0xff] %v831
        %864 = vst [vmem:[%s282 + $0x68] sm:$0xff] %v832
        %865 = vst [vmem:[%s282 + $0x70] sm:$0xff] %v833
        %866 = vst [vmem:[%s282 + $0x78] sm:$0xff] %v834
        %867 = vst [vmem:[%s282 + $0x80] sm:$0xff] %v835
        %868 = vst [vmem:[%s282 + $0x88] sm:$0xff] %v836
        %869 = vst [vmem:[%s282 + $0x90] sm:$0xff] %v837
        %870 = vst [vmem:[%s282 + $0x98] sm:$0xff] %v838
        %871 = vst [vmem:[%s282 + $0xa0] sm:$0xff] %v839
        %872 = vst [vmem:[%s282 + $0xa8] sm:$0xff] %v840
        %873 = vst [vmem:[%s282 + $0xb0] sm:$0xff] %v841
        %874 = vst [vmem:[%s282 + $0xb8] sm:$0xff] %v842
        %875 = vst [vmem:[%s282 + $0xc0] sm:$0xff] %v843
        %876 = vst [vmem:[%s282 + $0xc8] sm:$0xff] %v844
        %877 = vst [vmem:[%s282 + $0xd0] sm:$0xff] %v845
        %878 = vst [vmem:[%s282 + $0xd8] sm:$0xff] %v846
        %879 = vst [vmem:[%s282 + $0xe0] sm:$0xff] %v847
        %880 = vst [vmem:[%s282 + $0xe8] sm:$0xff] %v848
        %881 = vst [vmem:[%s282 + $0xf0] sm:$0xff] %v849
        %882 = vst [vmem:[%s282 + $0xf8] sm:$0xff] %v850
        %s883 = sand.u32 %s127, 1
        %s884 = scalar_lea.sflag [#allocation4], %s883
        %s885 = sand.u32 %s127, 1
        %s886 = smul.addr %s885, 256
        %s887 = scalar_lea.vmem [#allocation10], %s886
        // Predicated region
        $region53: #{_lambda_.7} parent=35 // pred_check
          %p888 = pneg %p137
        $region54: #{_lambda_.7} parent=35 // pred_check_branch
          %890 = sbr.rel (%p888) target = $region56
        $region55: #{_lambda_.7} parent=35 // pred_region
          %s891 = smul.u32 32, %s25
          %s893 = ssub.s32 4096, 4096
          %894 = vsyncadd %s884, %s893
          %s895 = smul.addr %s891, 128
          %s896 = scalar_lea.hbm %s4, %s895
          %s897 = sshll.u32 %s887, 4
          %s898 = int_to_ptr.vmem [resolvable:$true] %s897
          %903 = dma.vmem_to_hbm [thread:$0]  %s898, 4096, %s896, %s884, 128, 128, 8
        $region56: #{_lambda_.7} parent=35 // pred_fallthru
          _
      $region36: #{_lambda_.7} parent=5 // pred_fallthru
        _
      %p904 = scmp.le.s32.totalorder 2, %s20
      // Predicated region
      $region57: #{_lambda_.7} parent=5 // pred_check
        %p905 = pneg %p904
      $region58: #{_lambda_.7} parent=5 // pred_check_branch
        %907 = sbr.rel (%p905) target = $region60
      $region59: #{_lambda_.7} parent=5 // pred_region
        %s908 = ssub.s32 %s20, 2
        // Predicated region
        $region61: #{_lambda_.7} parent=59 // pred_check
          %p909 = pneg %p143
        $region62: #{_lambda_.7} parent=59 // pred_check_branch
          %911 = sbr.rel (%p909) target = $region64
        $region63: #{_lambda_.7} parent=59 // pred_region
          %s912 = sand.u32 %s128, 1
          %s913 = scalar_lea.sflag [#allocation4], %s912
          %s914 = sand.u32 %s128, 1
          %s915 = smul.addr %s914, 256
          %s916 = scalar_lea.vmem [#allocation10], %s915
          %917 = dma.done %s913, 4096
        $region64: #{_lambda_.7} parent=59 // pred_fallthru
          _
      $region60: #{_lambda_.7} parent=5 // pred_fallthru
        _
    $region6: #{_lambda_.7} parent=1 // loop_footer
      %s24 = sadd.s32 1, %s20
    $region7: #{_lambda_.7} parent=1 // loop_footer_branch
      %19 = sbr.rel target = $region3
    $region8: #{_lambda_.7} parent=1 // loop_exit
      _
    %918 = vsyncpa [#allocation3], 1
    %s919 = scalar_lea.sflag [#allocation3], 1
    %920 = vsyncpa %s919, 1
    %921 = vsyncpa [#allocation6], 1
    %922 = vsyncpa [#allocation9], 1
    %s923 = scalar_lea.sflag [#allocation9], 1
    %924 = vsyncpa %s923, 1
    %925 = vsyncpa [#allocation4], 1
    %s926 = scalar_lea.sflag [#allocation4], 1
    %927 = vsyncpa %s926, 1

</llo_original>
